<compile_context>
chip_gen: v7x
topology: tpu7x:2x2x1
jax: 0.10.0
libtpu: 0.0.40
codegen_flags: <defaults>
</compile_context>

<pallas_src>
import jax
import jax.numpy as jnp
from jax.experimental import pallas as pl
from jax.experimental.pallas import tpu as pltpu


def _make_fused_kernel(img_w, ksize_h, ksize_w, cout1, cout2_pad, n):
    def kernel(x_ref, w1_ref, b1_ref, w2_ref, b2_ref, o_ref):
        # x_ref : (Cin, n)              flattened HxW planes, n = H*W (lanes)
        # w1_ref: (KH*KW, Cout1, Cin)   per-tap conv1 weights, tap k = kh*KW + kw
        # b1_ref: (Cout1, 1)
        # w2_ref: (KH*KW, Cout2_pad, Cout1)
        # b2_ref: (Cout2_pad, 1)
        # o_ref : (Cout2_pad, n)        conv2 planes on the full HxW grid

        def shifted(a, s):
            # shifted(a, s)[:, p] == a[:, p + s] for p < n - s
            # (== jnp.roll(a, -s, axis=1); wrapped positions only ever land on
            #  spatially-invalid output locations, sliced off in the wrapper).
            if s == 0:
                return a
            return jnp.concatenate([a[:, s:], a[:, :s]], axis=1)

        x = x_ref[...]                                        # (Cin, n)

        # conv1 + bias + ReLU, accumulated in f32
        acc1 = jnp.zeros((cout1, n), jnp.float32)
        for ih in range(ksize_h):
            for iw in range(ksize_w):
                acc1 = acc1 + jnp.dot(
                    w1_ref[ih * ksize_w + iw],                # (Cout1, Cin)
                    shifted(x, ih * img_w + iw),              # (Cin, n)
                    preferred_element_type=jnp.float32)
        y1 = jnp.maximum(acc1 + b1_ref[...], 0.0)             # (Cout1, n), stays in VMEM

        # conv2 + bias + ReLU on the VMEM-resident intermediate
        acc2 = jnp.zeros((cout2_pad, n), jnp.float32)
        for ih in range(ksize_h):
            for iw in range(ksize_w):
                acc2 = acc2 + jnp.dot(
                    w2_ref[ih * ksize_w + iw],                # (Cout2_pad, Cout1)
                    shifted(y1, ih * img_w + iw),             # (Cout1, n)
                    preferred_element_type=jnp.float32)
        o_ref[...] = jnp.maximum(acc2 + b2_ref[...], 0.0)     # lane-dense store

    return kernel


@jax.jit
def model1_forward(x_nchw, params):
    """x_nchw: (N, 3, H, W) f32 in PyTorch NCHW layout. Returns (N, 5, H-4, W-4)."""
    w1, b1 = params["w1"], params["b1"]        # (4, 3, 3, 3), (4,)   torch OIHW
    w2, b2 = params["w2"], params["b2"]        # (5, 4, 3, 3), (5,)

    N, cin, H, W = x_nchw.shape
    cout1, _, KH, KW = w1.shape
    cout2 = w2.shape[0]
    n = H * W
    ho2, wo2 = H - 2 * (KH - 1), W - 2 * (KW - 1)

    # Pad conv2 output channels up to a sublane multiple (5 -> 8) so the kernel
    # writes one aligned slab; padded channels are zero and sliced off below.
    cout2_pad = 8 * pl.cdiv(cout2, 8)

    # (N, Cin, H*W): identical memory layout to NCHW, so this reshape is free.
    x_flat = x_nchw.reshape(N, cin, n)

    # Per-tap weight matrices, tap k = kh*KW + kw, each (Cout, Cin).
    w1_taps = jnp.transpose(w1, (2, 3, 0, 1)).reshape(KH * KW, cout1, cin)
    w2_taps = jnp.transpose(w2, (2, 3, 0, 1)).reshape(KH * KW, cout2, cout1)
    w2_taps = jnp.pad(w2_taps, ((0, 0), (0, cout2_pad - cout2), (0, 0)))
    b1_col = b1.reshape(cout1, 1)
    b2_col = jnp.pad(b2, (0, cout2_pad - cout2)).reshape(cout2_pad, 1)

    kernel = _make_fused_kernel(W, KH, KW, cout1, cout2_pad, n)

    out = pl.pallas_call(
        kernel,
        out_shape=jax.ShapeDtypeStruct((N, cout2_pad, n), jnp.float32),
        grid=(N,),
        in_specs=[
            pl.BlockSpec((None, cin, n), lambda b: (b, 0, 0)),
            pl.BlockSpec((KH * KW, cout1, cin), lambda b: (0, 0, 0)),
            pl.BlockSpec((cout1, 1), lambda b: (0, 0)),
            pl.BlockSpec((KH * KW, cout2_pad, cout1), lambda b: (0, 0, 0)),
            pl.BlockSpec((cout2_pad, 1), lambda b: (0, 0)),
        ],
        out_specs=pl.BlockSpec((None, cout2_pad, n), lambda b: (b, 0, 0)),
        compiler_params=pltpu.CompilerParams(
            dimension_semantics=("parallel",)),
    )(x_flat, w1_taps, b1_col, w2_taps, b2_col)

    # Valid region: the 5 real channels and the top-left (H-4)x(W-4) window.
    return out.reshape(N, cout2_pad, H, W)[:, :cout2, :ho2, :wo2]


def model1_reference(x_nchw, params):
    """Pure-JAX reference (lax conv), same semantics as the PyTorch module."""
    dn = ("NCHW", "OIHW", "NCHW")
    y = jax.lax.conv_general_dilated(x_nchw, params["w1"], (1, 1), "VALID",
                                     dimension_numbers=dn)
    y = jnp.maximum(y + params["b1"].reshape(1, -1, 1, 1), 0.0)
    y = jax.lax.conv_general_dilated(y, params["w2"], (1, 1), "VALID",
                                     dimension_numbers=dn)
    y = jnp.maximum(y + params["b2"].reshape(1, -1, 1, 1), 0.0)
    return y


def init_params(key):
    k1, k2, k3, k4 = jax.random.split(key, 4)
    # Deterministic synthetic weights in PyTorch layout:
    #   Conv2d(3, 4, 3) -> (4, 3, 3, 3); Conv2d(4, 5, 3) -> (5, 4, 3, 3).
    return {
        "w1": 0.1 * jax.random.normal(k1, (4, 3, 3, 3), jnp.float32),
        "b1": 0.1 * jax.random.normal(k2, (4,), jnp.float32),
        "w2": 0.1 * jax.random.normal(k3, (5, 4, 3, 3), jnp.float32),
        "b2": 0.1 * jax.random.normal(k4, (5,), jnp.float32),
    }


if __name__ == "__main__":
    key = jax.random.PRNGKey(0)
    kx, kp = jax.random.split(key)
    x = jax.random.normal(kx, (1, 3, 32, 32), jnp.float32)   # torch.randn(1, 3, 32, 32)
    params = init_params(kp)

    out = jax.block_until_ready(model1_forward(x, params))
    assert out.shape == (1, 5, 28, 28), out.shape
    assert bool(jnp.all(out >= 0.0))                         # ReLU sanity check

    ref = jax.block_until_ready(model1_reference(x, params))
    max_err = float(jnp.max(jnp.abs(out - ref)))
    # Loose tolerance only to absorb MXU/XLA default-precision differences;
    # any indexing/layout bug would produce O(1) errors.
    assert bool(jnp.allclose(out, ref, atol=5e-2, rtol=5e-2)), max_err

    print("KERNEL_OK")
</pallas_src>

<mosaic_0001>
module attributes {stable_mosaic.version = 11 : i64} {
  func.func @kernel(%arg0: i32, %arg1: memref<1x3x1024xf32, #tpu.memory_space<vmem>>, %arg2: memref<9x4x3xf32, #tpu.memory_space<vmem>>, %arg3: memref<4x1xf32, #tpu.memory_space<vmem>>, %arg4: memref<9x8x4xf32, #tpu.memory_space<vmem>>, %arg5: memref<8x1xf32, #tpu.memory_space<vmem>>, %arg6: memref<1x8x1024xf32, #tpu.memory_space<vmem>>) attributes {dimension_semantics = [#tpu.dimension_semantics<parallel>], iteration_bounds = array<i64: 1>, scalar_prefetch = 0 : i64, scratch_operands = 0 : i64, tpu.core_type = #tpu.core_type<tc>, window_params = [{transform_indices = @transform_0, window_bounds = array<i64: 1, 3, 1024>}, {pipeline_mode = #tpu.pipeline_mode<synchronous>, transform_indices = @transform_1, window_bounds = array<i64: 9, 4, 3>}, {pipeline_mode = #tpu.pipeline_mode<synchronous>, transform_indices = @transform_2, window_bounds = array<i64: 4, 1>}, {pipeline_mode = #tpu.pipeline_mode<synchronous>, transform_indices = @transform_3, window_bounds = array<i64: 9, 8, 4>}, {pipeline_mode = #tpu.pipeline_mode<synchronous>, transform_indices = @transform_4, window_bounds = array<i64: 8, 1>}, {transform_indices = @transform_5, window_bounds = array<i64: 1, 8, 1024>}]} {
    %c0 = arith.constant 0 : index
    %c0_0 = arith.constant 0 : index
    %c0_1 = arith.constant 0 : index
    %0 = vector.load %arg1[%c0, %c0_0, %c0_1] : memref<1x3x1024xf32, #tpu.memory_space<vmem>>, vector<1x3x1024xf32>
    %1 = vector.shape_cast %0 : vector<1x3x1024xf32> to vector<3x1024xf32>
    %cst = arith.constant 0.000000e+00 : f32
    %2 = vector.broadcast %cst : f32 to vector<4x1024xf32>
    %c0_2 = arith.constant 0 : index
    %c0_3 = arith.constant 0 : index
    %c0_4 = arith.constant 0 : index
    %3 = vector.load %arg2[%c0_2, %c0_3, %c0_4] : memref<9x4x3xf32, #tpu.memory_space<vmem>>, vector<1x4x3xf32>
    %4 = vector.shape_cast %3 : vector<1x4x3xf32> to vector<4x3xf32>
    %cst_5 = arith.constant dense<0.000000e+00> : vector<4x1024xf32>
    %5 = tpu.matmul %4, %1, %cst_5 {dimension_numbers = #tpu.dot_dimension_numbers<[1], [0], [0], [1], [0, 0, 1, 1], [], []>} : vector<4x3xf32>, vector<3x1024xf32>, vector<4x1024xf32> -> vector<4x1024xf32>
    %6 = arith.addf %2, %5 : vector<4x1024xf32>
    %c1 = arith.constant 1 : index
    %c0_6 = arith.constant 0 : index
    %c0_7 = arith.constant 0 : index
    %7 = vector.load %arg2[%c1, %c0_6, %c0_7] : memref<9x4x3xf32, #tpu.memory_space<vmem>>, vector<1x4x3xf32>
    %8 = vector.shape_cast %7 : vector<1x4x3xf32> to vector<4x3xf32>
    %9 = vector.extract_strided_slice %1 {offsets = [0, 1], sizes = [3, 1023], strides = [1, 1]} : vector<3x1024xf32> to vector<3x1023xf32>
    %10 = vector.extract_strided_slice %1 {offsets = [0, 0], sizes = [3, 1], strides = [1, 1]} : vector<3x1024xf32> to vector<3x1xf32>
    %11 = tpu.concatenate %9, %10 in 1 : vector<3x1023xf32>, vector<3x1xf32> -> vector<3x1024xf32>
    %cst_8 = arith.constant dense<0.000000e+00> : vector<4x1024xf32>
    %12 = tpu.matmul %8, %11, %cst_8 {dimension_numbers = #tpu.dot_dimension_numbers<[1], [0], [0], [1], [0, 0, 1, 1], [], []>} : vector<4x3xf32>, vector<3x1024xf32>, vector<4x1024xf32> -> vector<4x1024xf32>
    %13 = arith.addf %6, %12 : vector<4x1024xf32>
    %c2 = arith.constant 2 : index
    %c0_9 = arith.constant 0 : index
    %c0_10 = arith.constant 0 : index
    %14 = vector.load %arg2[%c2, %c0_9, %c0_10] : memref<9x4x3xf32, #tpu.memory_space<vmem>>, vector<1x4x3xf32>
    %15 = vector.shape_cast %14 : vector<1x4x3xf32> to vector<4x3xf32>
    %16 = vector.extract_strided_slice %1 {offsets = [0, 2], sizes = [3, 1022], strides = [1, 1]} : vector<3x1024xf32> to vector<3x1022xf32>
    %17 = vector.extract_strided_slice %1 {offsets = [0, 0], sizes = [3, 2], strides = [1, 1]} : vector<3x1024xf32> to vector<3x2xf32>
    %18 = tpu.concatenate %16, %17 in 1 : vector<3x1022xf32>, vector<3x2xf32> -> vector<3x1024xf32>
    %cst_11 = arith.constant dense<0.000000e+00> : vector<4x1024xf32>
    %19 = tpu.matmul %15, %18, %cst_11 {dimension_numbers = #tpu.dot_dimension_numbers<[1], [0], [0], [1], [0, 0, 1, 1], [], []>} : vector<4x3xf32>, vector<3x1024xf32>, vector<4x1024xf32> -> vector<4x1024xf32>
    %20 = arith.addf %13, %19 : vector<4x1024xf32>
    %c3 = arith.constant 3 : index
    %c0_12 = arith.constant 0 : index
    %c0_13 = arith.constant 0 : index
    %21 = vector.load %arg2[%c3, %c0_12, %c0_13] : memref<9x4x3xf32, #tpu.memory_space<vmem>>, vector<1x4x3xf32>
    %22 = vector.shape_cast %21 : vector<1x4x3xf32> to vector<4x3xf32>
    %23 = vector.extract_strided_slice %1 {offsets = [0, 32], sizes = [3, 992], strides = [1, 1]} : vector<3x1024xf32> to vector<3x992xf32>
    %24 = vector.extract_strided_slice %1 {offsets = [0, 0], sizes = [3, 32], strides = [1, 1]} : vector<3x1024xf32> to vector<3x32xf32>
    %25 = tpu.concatenate %23, %24 in 1 : vector<3x992xf32>, vector<3x32xf32> -> vector<3x1024xf32>
    %cst_14 = arith.constant dense<0.000000e+00> : vector<4x1024xf32>
    %26 = tpu.matmul %22, %25, %cst_14 {dimension_numbers = #tpu.dot_dimension_numbers<[1], [0], [0], [1], [0, 0, 1, 1], [], []>} : vector<4x3xf32>, vector<3x1024xf32>, vector<4x1024xf32> -> vector<4x1024xf32>
    %27 = arith.addf %20, %26 : vector<4x1024xf32>
    %c4 = arith.constant 4 : index
    %c0_15 = arith.constant 0 : index
    %c0_16 = arith.constant 0 : index
    %28 = vector.load %arg2[%c4, %c0_15, %c0_16] : memref<9x4x3xf32, #tpu.memory_space<vmem>>, vector<1x4x3xf32>
    %29 = vector.shape_cast %28 : vector<1x4x3xf32> to vector<4x3xf32>
    %30 = vector.extract_strided_slice %1 {offsets = [0, 33], sizes = [3, 991], strides = [1, 1]} : vector<3x1024xf32> to vector<3x991xf32>
    %31 = vector.extract_strided_slice %1 {offsets = [0, 0], sizes = [3, 33], strides = [1, 1]} : vector<3x1024xf32> to vector<3x33xf32>
    %32 = tpu.concatenate %30, %31 in 1 : vector<3x991xf32>, vector<3x33xf32> -> vector<3x1024xf32>
    %cst_17 = arith.constant dense<0.000000e+00> : vector<4x1024xf32>
    %33 = tpu.matmul %29, %32, %cst_17 {dimension_numbers = #tpu.dot_dimension_numbers<[1], [0], [0], [1], [0, 0, 1, 1], [], []>} : vector<4x3xf32>, vector<3x1024xf32>, vector<4x1024xf32> -> vector<4x1024xf32>
    %34 = arith.addf %27, %33 : vector<4x1024xf32>
    %c5 = arith.constant 5 : index
    %c0_18 = arith.constant 0 : index
    %c0_19 = arith.constant 0 : index
    %35 = vector.load %arg2[%c5, %c0_18, %c0_19] : memref<9x4x3xf32, #tpu.memory_space<vmem>>, vector<1x4x3xf32>
    %36 = vector.shape_cast %35 : vector<1x4x3xf32> to vector<4x3xf32>
    %37 = vector.extract_strided_slice %1 {offsets = [0, 34], sizes = [3, 990], strides = [1, 1]} : vector<3x1024xf32> to vector<3x990xf32>
    %38 = vector.extract_strided_slice %1 {offsets = [0, 0], sizes = [3, 34], strides = [1, 1]} : vector<3x1024xf32> to vector<3x34xf32>
    %39 = tpu.concatenate %37, %38 in 1 : vector<3x990xf32>, vector<3x34xf32> -> vector<3x1024xf32>
    %cst_20 = arith.constant dense<0.000000e+00> : vector<4x1024xf32>
    %40 = tpu.matmul %36, %39, %cst_20 {dimension_numbers = #tpu.dot_dimension_numbers<[1], [0], [0], [1], [0, 0, 1, 1], [], []>} : vector<4x3xf32>, vector<3x1024xf32>, vector<4x1024xf32> -> vector<4x1024xf32>
    %41 = arith.addf %34, %40 : vector<4x1024xf32>
    %c6 = arith.constant 6 : index
    %c0_21 = arith.constant 0 : index
    %c0_22 = arith.constant 0 : index
    %42 = vector.load %arg2[%c6, %c0_21, %c0_22] : memref<9x4x3xf32, #tpu.memory_space<vmem>>, vector<1x4x3xf32>
    %43 = vector.shape_cast %42 : vector<1x4x3xf32> to vector<4x3xf32>
    %44 = vector.extract_strided_slice %1 {offsets = [0, 64], sizes = [3, 960], strides = [1, 1]} : vector<3x1024xf32> to vector<3x960xf32>
    %45 = vector.extract_strided_slice %1 {offsets = [0, 0], sizes = [3, 64], strides = [1, 1]} : vector<3x1024xf32> to vector<3x64xf32>
    %46 = tpu.concatenate %44, %45 in 1 : vector<3x960xf32>, vector<3x64xf32> -> vector<3x1024xf32>
    %cst_23 = arith.constant dense<0.000000e+00> : vector<4x1024xf32>
    %47 = tpu.matmul %43, %46, %cst_23 {dimension_numbers = #tpu.dot_dimension_numbers<[1], [0], [0], [1], [0, 0, 1, 1], [], []>} : vector<4x3xf32>, vector<3x1024xf32>, vector<4x1024xf32> -> vector<4x1024xf32>
    %48 = arith.addf %41, %47 : vector<4x1024xf32>
    %c7 = arith.constant 7 : index
    %c0_24 = arith.constant 0 : index
    %c0_25 = arith.constant 0 : index
    %49 = vector.load %arg2[%c7, %c0_24, %c0_25] : memref<9x4x3xf32, #tpu.memory_space<vmem>>, vector<1x4x3xf32>
    %50 = vector.shape_cast %49 : vector<1x4x3xf32> to vector<4x3xf32>
    %51 = vector.extract_strided_slice %1 {offsets = [0, 65], sizes = [3, 959], strides = [1, 1]} : vector<3x1024xf32> to vector<3x959xf32>
    %52 = vector.extract_strided_slice %1 {offsets = [0, 0], sizes = [3, 65], strides = [1, 1]} : vector<3x1024xf32> to vector<3x65xf32>
    %53 = tpu.concatenate %51, %52 in 1 : vector<3x959xf32>, vector<3x65xf32> -> vector<3x1024xf32>
    %cst_26 = arith.constant dense<0.000000e+00> : vector<4x1024xf32>
    %54 = tpu.matmul %50, %53, %cst_26 {dimension_numbers = #tpu.dot_dimension_numbers<[1], [0], [0], [1], [0, 0, 1, 1], [], []>} : vector<4x3xf32>, vector<3x1024xf32>, vector<4x1024xf32> -> vector<4x1024xf32>
    %55 = arith.addf %48, %54 : vector<4x1024xf32>
    %c8 = arith.constant 8 : index
    %c0_27 = arith.constant 0 : index
    %c0_28 = arith.constant 0 : index
    %56 = vector.load %arg2[%c8, %c0_27, %c0_28] : memref<9x4x3xf32, #tpu.memory_space<vmem>>, vector<1x4x3xf32>
    %57 = vector.shape_cast %56 : vector<1x4x3xf32> to vector<4x3xf32>
    %58 = vector.extract_strided_slice %1 {offsets = [0, 66], sizes = [3, 958], strides = [1, 1]} : vector<3x1024xf32> to vector<3x958xf32>
    %59 = vector.extract_strided_slice %1 {offsets = [0, 0], sizes = [3, 66], strides = [1, 1]} : vector<3x1024xf32> to vector<3x66xf32>
    %60 = tpu.concatenate %58, %59 in 1 : vector<3x958xf32>, vector<3x66xf32> -> vector<3x1024xf32>
    %cst_29 = arith.constant dense<0.000000e+00> : vector<4x1024xf32>
    %61 = tpu.matmul %57, %60, %cst_29 {dimension_numbers = #tpu.dot_dimension_numbers<[1], [0], [0], [1], [0, 0, 1, 1], [], []>} : vector<4x3xf32>, vector<3x1024xf32>, vector<4x1024xf32> -> vector<4x1024xf32>
    %62 = arith.addf %55, %61 : vector<4x1024xf32>
    %c0_30 = arith.constant 0 : index
    %c0_31 = arith.constant 0 : index
    %63 = vector.load %arg3[%c0_30, %c0_31] : memref<4x1xf32, #tpu.memory_space<vmem>>, vector<4x1xf32>
    %64 = vector.broadcast %63 : vector<4x1xf32> to vector<4x1024xf32>
    %65 = arith.addf %62, %64 : vector<4x1024xf32>
    %cst_32 = arith.constant 0.000000e+00 : f32
    %66 = vector.broadcast %cst_32 : f32 to vector<4x1024xf32>
    %67 = arith.maximumf %65, %66 : vector<4x1024xf32>
    %cst_33 = arith.constant 0.000000e+00 : f32
    %68 = vector.broadcast %cst_33 : f32 to vector<8x1024xf32>
    %c0_34 = arith.constant 0 : index
    %c0_35 = arith.constant 0 : index
    %c0_36 = arith.constant 0 : index
    %69 = vector.load %arg4[%c0_34, %c0_35, %c0_36] : memref<9x8x4xf32, #tpu.memory_space<vmem>>, vector<1x8x4xf32>
    %70 = vector.shape_cast %69 : vector<1x8x4xf32> to vector<8x4xf32>
    %cst_37 = arith.constant dense<0.000000e+00> : vector<8x1024xf32>
    %71 = tpu.matmul %70, %67, %cst_37 {dimension_numbers = #tpu.dot_dimension_numbers<[1], [0], [0], [1], [0, 0, 1, 1], [], []>} : vector<8x4xf32>, vector<4x1024xf32>, vector<8x1024xf32> -> vector<8x1024xf32>
    %72 = arith.addf %68, %71 : vector<8x1024xf32>
    %c1_38 = arith.constant 1 : index
    %c0_39 = arith.constant 0 : index
    %c0_40 = arith.constant 0 : index
    %73 = vector.load %arg4[%c1_38, %c0_39, %c0_40] : memref<9x8x4xf32, #tpu.memory_space<vmem>>, vector<1x8x4xf32>
    %74 = vector.shape_cast %73 : vector<1x8x4xf32> to vector<8x4xf32>
    %75 = vector.extract_strided_slice %67 {offsets = [0, 1], sizes = [4, 1023], strides = [1, 1]} : vector<4x1024xf32> to vector<4x1023xf32>
    %76 = vector.extract_strided_slice %67 {offsets = [0, 0], sizes = [4, 1], strides = [1, 1]} : vector<4x1024xf32> to vector<4x1xf32>
    %77 = tpu.concatenate %75, %76 in 1 : vector<4x1023xf32>, vector<4x1xf32> -> vector<4x1024xf32>
    %cst_41 = arith.constant dense<0.000000e+00> : vector<8x1024xf32>
    %78 = tpu.matmul %74, %77, %cst_41 {dimension_numbers = #tpu.dot_dimension_numbers<[1], [0], [0], [1], [0, 0, 1, 1], [], []>} : vector<8x4xf32>, vector<4x1024xf32>, vector<8x1024xf32> -> vector<8x1024xf32>
    %79 = arith.addf %72, %78 : vector<8x1024xf32>
    %c2_42 = arith.constant 2 : index
    %c0_43 = arith.constant 0 : index
    %c0_44 = arith.constant 0 : index
    %80 = vector.load %arg4[%c2_42, %c0_43, %c0_44] : memref<9x8x4xf32, #tpu.memory_space<vmem>>, vector<1x8x4xf32>
    %81 = vector.shape_cast %80 : vector<1x8x4xf32> to vector<8x4xf32>
    %82 = vector.extract_strided_slice %67 {offsets = [0, 2], sizes = [4, 1022], strides = [1, 1]} : vector<4x1024xf32> to vector<4x1022xf32>
    %83 = vector.extract_strided_slice %67 {offsets = [0, 0], sizes = [4, 2], strides = [1, 1]} : vector<4x1024xf32> to vector<4x2xf32>
    %84 = tpu.concatenate %82, %83 in 1 : vector<4x1022xf32>, vector<4x2xf32> -> vector<4x1024xf32>
    %cst_45 = arith.constant dense<0.000000e+00> : vector<8x1024xf32>
    %85 = tpu.matmul %81, %84, %cst_45 {dimension_numbers = #tpu.dot_dimension_numbers<[1], [0], [0], [1], [0, 0, 1, 1], [], []>} : vector<8x4xf32>, vector<4x1024xf32>, vector<8x1024xf32> -> vector<8x1024xf32>
    %86 = arith.addf %79, %85 : vector<8x1024xf32>
    %c3_46 = arith.constant 3 : index
    %c0_47 = arith.constant 0 : index
    %c0_48 = arith.constant 0 : index
    %87 = vector.load %arg4[%c3_46, %c0_47, %c0_48] : memref<9x8x4xf32, #tpu.memory_space<vmem>>, vector<1x8x4xf32>
    %88 = vector.shape_cast %87 : vector<1x8x4xf32> to vector<8x4xf32>
    %89 = vector.extract_strided_slice %67 {offsets = [0, 32], sizes = [4, 992], strides = [1, 1]} : vector<4x1024xf32> to vector<4x992xf32>
    %90 = vector.extract_strided_slice %67 {offsets = [0, 0], sizes = [4, 32], strides = [1, 1]} : vector<4x1024xf32> to vector<4x32xf32>
    %91 = tpu.concatenate %89, %90 in 1 : vector<4x992xf32>, vector<4x32xf32> -> vector<4x1024xf32>
    %cst_49 = arith.constant dense<0.000000e+00> : vector<8x1024xf32>
    %92 = tpu.matmul %88, %91, %cst_49 {dimension_numbers = #tpu.dot_dimension_numbers<[1], [0], [0], [1], [0, 0, 1, 1], [], []>} : vector<8x4xf32>, vector<4x1024xf32>, vector<8x1024xf32> -> vector<8x1024xf32>
    %93 = arith.addf %86, %92 : vector<8x1024xf32>
    %c4_50 = arith.constant 4 : index
    %c0_51 = arith.constant 0 : index
    %c0_52 = arith.constant 0 : index
    %94 = vector.load %arg4[%c4_50, %c0_51, %c0_52] : memref<9x8x4xf32, #tpu.memory_space<vmem>>, vector<1x8x4xf32>
    %95 = vector.shape_cast %94 : vector<1x8x4xf32> to vector<8x4xf32>
    %96 = vector.extract_strided_slice %67 {offsets = [0, 33], sizes = [4, 991], strides = [1, 1]} : vector<4x1024xf32> to vector<4x991xf32>
    %97 = vector.extract_strided_slice %67 {offsets = [0, 0], sizes = [4, 33], strides = [1, 1]} : vector<4x1024xf32> to vector<4x33xf32>
    %98 = tpu.concatenate %96, %97 in 1 : vector<4x991xf32>, vector<4x33xf32> -> vector<4x1024xf32>
    %cst_53 = arith.constant dense<0.000000e+00> : vector<8x1024xf32>
    %99 = tpu.matmul %95, %98, %cst_53 {dimension_numbers = #tpu.dot_dimension_numbers<[1], [0], [0], [1], [0, 0, 1, 1], [], []>} : vector<8x4xf32>, vector<4x1024xf32>, vector<8x1024xf32> -> vector<8x1024xf32>
    %100 = arith.addf %93, %99 : vector<8x1024xf32>
    %c5_54 = arith.constant 5 : index
    %c0_55 = arith.constant 0 : index
    %c0_56 = arith.constant 0 : index
    %101 = vector.load %arg4[%c5_54, %c0_55, %c0_56] : memref<9x8x4xf32, #tpu.memory_space<vmem>>, vector<1x8x4xf32>
    %102 = vector.shape_cast %101 : vector<1x8x4xf32> to vector<8x4xf32>
    %103 = vector.extract_strided_slice %67 {offsets = [0, 34], sizes = [4, 990], strides = [1, 1]} : vector<4x1024xf32> to vector<4x990xf32>
    %104 = vector.extract_strided_slice %67 {offsets = [0, 0], sizes = [4, 34], strides = [1, 1]} : vector<4x1024xf32> to vector<4x34xf32>
    %105 = tpu.concatenate %103, %104 in 1 : vector<4x990xf32>, vector<4x34xf32> -> vector<4x1024xf32>
    %cst_57 = arith.constant dense<0.000000e+00> : vector<8x1024xf32>
    %106 = tpu.matmul %102, %105, %cst_57 {dimension_numbers = #tpu.dot_dimension_numbers<[1], [0], [0], [1], [0, 0, 1, 1], [], []>} : vector<8x4xf32>, vector<4x1024xf32>, vector<8x1024xf32> -> vector<8x1024xf32>
    %107 = arith.addf %100, %106 : vector<8x1024xf32>
    %c6_58 = arith.constant 6 : index
    %c0_59 = arith.constant 0 : index
    %c0_60 = arith.constant 0 : index
    %108 = vector.load %arg4[%c6_58, %c0_59, %c0_60] : memref<9x8x4xf32, #tpu.memory_space<vmem>>, vector<1x8x4xf32>
    %109 = vector.shape_cast %108 : vector<1x8x4xf32> to vector<8x4xf32>
    %110 = vector.extract_strided_slice %67 {offsets = [0, 64], sizes = [4, 960], strides = [1, 1]} : vector<4x1024xf32> to vector<4x960xf32>
    %111 = vector.extract_strided_slice %67 {offsets = [0, 0], sizes = [4, 64], strides = [1, 1]} : vector<4x1024xf32> to vector<4x64xf32>
    %112 = tpu.concatenate %110, %111 in 1 : vector<4x960xf32>, vector<4x64xf32> -> vector<4x1024xf32>
    %cst_61 = arith.constant dense<0.000000e+00> : vector<8x1024xf32>
    %113 = tpu.matmul %109, %112, %cst_61 {dimension_numbers = #tpu.dot_dimension_numbers<[1], [0], [0], [1], [0, 0, 1, 1], [], []>} : vector<8x4xf32>, vector<4x1024xf32>, vector<8x1024xf32> -> vector<8x1024xf32>
    %114 = arith.addf %107, %113 : vector<8x1024xf32>
    %c7_62 = arith.constant 7 : index
    %c0_63 = arith.constant 0 : index
    %c0_64 = arith.constant 0 : index
    %115 = vector.load %arg4[%c7_62, %c0_63, %c0_64] : memref<9x8x4xf32, #tpu.memory_space<vmem>>, vector<1x8x4xf32>
    %116 = vector.shape_cast %115 : vector<1x8x4xf32> to vector<8x4xf32>
    %117 = vector.extract_strided_slice %67 {offsets = [0, 65], sizes = [4, 959], strides = [1, 1]} : vector<4x1024xf32> to vector<4x959xf32>
    %118 = vector.extract_strided_slice %67 {offsets = [0, 0], sizes = [4, 65], strides = [1, 1]} : vector<4x1024xf32> to vector<4x65xf32>
    %119 = tpu.concatenate %117, %118 in 1 : vector<4x959xf32>, vector<4x65xf32> -> vector<4x1024xf32>
    %cst_65 = arith.constant dense<0.000000e+00> : vector<8x1024xf32>
    %120 = tpu.matmul %116, %119, %cst_65 {dimension_numbers = #tpu.dot_dimension_numbers<[1], [0], [0], [1], [0, 0, 1, 1], [], []>} : vector<8x4xf32>, vector<4x1024xf32>, vector<8x1024xf32> -> vector<8x1024xf32>
    %121 = arith.addf %114, %120 : vector<8x1024xf32>
    %c8_66 = arith.constant 8 : index
    %c0_67 = arith.constant 0 : index
    %c0_68 = arith.constant 0 : index
    %122 = vector.load %arg4[%c8_66, %c0_67, %c0_68] : memref<9x8x4xf32, #tpu.memory_space<vmem>>, vector<1x8x4xf32>
    %123 = vector.shape_cast %122 : vector<1x8x4xf32> to vector<8x4xf32>
    %124 = vector.extract_strided_slice %67 {offsets = [0, 66], sizes = [4, 958], strides = [1, 1]} : vector<4x1024xf32> to vector<4x958xf32>
    %125 = vector.extract_strided_slice %67 {offsets = [0, 0], sizes = [4, 66], strides = [1, 1]} : vector<4x1024xf32> to vector<4x66xf32>
    %126 = tpu.concatenate %124, %125 in 1 : vector<4x958xf32>, vector<4x66xf32> -> vector<4x1024xf32>
    %cst_69 = arith.constant dense<0.000000e+00> : vector<8x1024xf32>
    %127 = tpu.matmul %123, %126, %cst_69 {dimension_numbers = #tpu.dot_dimension_numbers<[1], [0], [0], [1], [0, 0, 1, 1], [], []>} : vector<8x4xf32>, vector<4x1024xf32>, vector<8x1024xf32> -> vector<8x1024xf32>
    %128 = arith.addf %121, %127 : vector<8x1024xf32>
    %c0_70 = arith.constant 0 : index
    %c0_71 = arith.constant 0 : index
    %129 = vector.load %arg5[%c0_70, %c0_71] : memref<8x1xf32, #tpu.memory_space<vmem>>, vector<8x1xf32>
    %130 = vector.broadcast %129 : vector<8x1xf32> to vector<8x1024xf32>
    %131 = arith.addf %128, %130 : vector<8x1024xf32>
    %cst_72 = arith.constant 0.000000e+00 : f32
    %132 = vector.broadcast %cst_72 : f32 to vector<8x1024xf32>
    %133 = arith.maximumf %131, %132 : vector<8x1024xf32>
    %c0_73 = arith.constant 0 : index
    %c0_74 = arith.constant 0 : index
    %c0_75 = arith.constant 0 : index
    %134 = vector.load %arg6[%c0_73, %c0_74, %c0_75] : memref<1x8x1024xf32, #tpu.memory_space<vmem>>, vector<1x8x1024xf32>
    %135 = vector.shape_cast %134 : vector<1x8x1024xf32> to vector<8x1024xf32>
    %136 = vector.shape_cast %133 : vector<8x1024xf32> to vector<1x8x1024xf32>
    tpu.vector_store %arg6[%c0_73, %c0_74, %c0_75], %136 {strides = array<i32>} : memref<1x8x1024xf32, #tpu.memory_space<vmem>>, vector<1x8x1024xf32>,
    return
  }
  func.func @transform_0(%arg0: i32) -> (i32, i32, i32) {
    %c0_i32 = arith.constant 0 : i32
    %c0_i32_0 = arith.constant 0 : i32
    %c0_i32_1 = arith.constant 0 : i32
    return %arg0, %c0_i32, %c0_i32_0 : i32, i32, i32
  }
  func.func @transform_1(%arg0: i32) -> (i32, i32, i32) {
    %c0_i32 = arith.constant 0 : i32
    %c0_i32_0 = arith.constant 0 : i32
    %c0_i32_1 = arith.constant 0 : i32
    %c0_i32_2 = arith.constant 0 : i32
    return %c0_i32, %c0_i32_0, %c0_i32_1 : i32, i32, i32
  }
  func.func @transform_2(%arg0: i32) -> (i32, i32) {
    %c0_i32 = arith.constant 0 : i32
    %c0_i32_0 = arith.constant 0 : i32
    %c0_i32_1 = arith.constant 0 : i32
    return %c0_i32, %c0_i32_0 : i32, i32
  }
  func.func @transform_3(%arg0: i32) -> (i32, i32, i32) {
    %c0_i32 = arith.constant 0 : i32
    %c0_i32_0 = arith.constant 0 : i32
    %c0_i32_1 = arith.constant 0 : i32
    %c0_i32_2 = arith.constant 0 : i32
    return %c0_i32, %c0_i32_0, %c0_i32_1 : i32, i32, i32
  }
  func.func @transform_4(%arg0: i32) -> (i32, i32) {
    %c0_i32 = arith.constant 0 : i32
    %c0_i32_0 = arith.constant 0 : i32
    %c0_i32_1 = arith.constant 0 : i32
    return %c0_i32, %c0_i32_0 : i32, i32
  }
  func.func @transform_5(%arg0: i32) -> (i32, i32, i32) {
    %c0_i32 = arith.constant 0 : i32
    %c0_i32_0 = arith.constant 0 : i32
    %c0_i32_1 = arith.constant 0 : i32
    return %arg0, %c0_i32, %c0_i32_0 : i32, i32, i32
  }
}

</mosaic_0001>

<llo_original>
// kernel: model1_forward.1
$region0: #{model1_forward.1}
  #allocation0 [shape = 'u32[]', space=smem, size = 0x4, offset = 0x4, fixed_abs, tag = 'smem constant byte address 0x4 - core index']
  #allocation1 [shape = 'u32[144,128]{1,0:T(1,128)}', space=vmem, size = 0x12000, scoped, tag = 'internal scratch']
  %s0 = inlined_call_operand.vmem [shape: f32[1,3,1024], index: 0, kind: input, shape index: {}]
  %s1 = inlined_call_operand.vmem [shape: f32[9,4,3], index: 1, kind: input, shape index: {}]
  %s2 = inlined_call_operand.vmem [shape: f32[4,1], index: 2, kind: input, shape index: {}]
  %s3 = inlined_call_operand.vmem [shape: f32[9,8,4], index: 3, kind: input, shape index: {}]
  %s4 = inlined_call_operand.vmem [shape: f32[8,1], index: 4, kind: input, shape index: {}]
  %s5 = inlined_call_operand.vmem [shape: f32[1,8,1024], index: 5, kind: output, shape index: {}]
  %s6 = sld [smem:[#allocation0]]
  $region30: #{model1_forward.1} parent=0
    _
  %s8 = ssub.s32 1, %s6
  %s9 = scalar_select 0, %s8, %s6
  // Predicated region
  $region2: #{model1_forward.1} parent=0 // pred_check
    _
  $region3: #{model1_forward.1} parent=0 // pred_check_branch
    %11 = sbr.rel (0) target = $region5
  $region4: #{model1_forward.1} parent=0 // pred_region
    _
  $region5: #{model1_forward.1} parent=0 // pred_fallthru
    _
  // Predicated region
  $region6: #{model1_forward.1} parent=0 // pred_check
    _
  $region7: #{model1_forward.1} parent=0 // pred_check_branch
    %13 = sbr.rel (0) target = $region9
  $region8: #{model1_forward.1} parent=0 // pred_region
    _
  $region9: #{model1_forward.1} parent=0 // pred_fallthru
    _
  // Predicated region
  $region10: #{model1_forward.1} parent=0 // pred_check
    _
  $region11: #{model1_forward.1} parent=0 // pred_check_branch
    %15 = sbr.rel (0) target = $region13
  $region12: #{model1_forward.1} parent=0 // pred_region
    _
  $region13: #{model1_forward.1} parent=0 // pred_fallthru
    _
  // Predicated region
  $region14: #{model1_forward.1} parent=0 // pred_check
    _
  $region15: #{model1_forward.1} parent=0 // pred_check_branch
    %17 = sbr.rel (0) target = $region17
  $region16: #{model1_forward.1} parent=0 // pred_region
    _
  $region17: #{model1_forward.1} parent=0 // pred_fallthru
    _
  // Predicated region
  $region18: #{model1_forward.1} parent=0 // pred_check
    _
  $region19: #{model1_forward.1} parent=0 // pred_check_branch
    %19 = sbr.rel (0) target = $region21
  $region20: #{model1_forward.1} parent=0 // pred_region
    _
  $region21: #{model1_forward.1} parent=0 // pred_fallthru
    _
  %v20 = vld [vmem:[%s0] sm:$0x77]
  %v21 = vld [vmem:[%s0 + $0x8] sm:$0x77]
  %v22 = vld [vmem:[%s0 + $0x10] sm:$0x77]
  %v23 = vld [vmem:[%s0 + $0x18] sm:$0x77]
  %v24 = vld [vmem:[%s1] sm:$0xf]
  %s25 = scalar_lea.vmem %s1, 4
  %v26 = vld [vmem:[%s25] sm:$0xf]
  %v31 = vcombine.high %v20, %v20
  %v32 = vcombine.high %v21, %v21
  %v33 = vcombine.high %v22, %v22
  %v34 = vcombine.high %v23, %v23
  %35 = vrot.lane.b32.xlu0 %v20, 127
  %v36 = vpop.permute.xlu0 %35
  %37 = vrot.lane.b32.xlu0 %v31, 127
  %v38 = vpop.permute.xlu0 %37
  %39 = vrot.lane.b32.xlu0 %v21, 127
  %v40 = vpop.permute.xlu0 %39
  %41 = vrot.lane.b32.xlu0 %v32, 127
  %v42 = vpop.permute.xlu0 %41
  %43 = vrot.lane.b32.xlu0 %v22, 127
  %v44 = vpop.permute.xlu0 %43
  %45 = vrot.lane.b32.xlu0 %v33, 127
  %v46 = vpop.permute.xlu0 %45
  %47 = vrot.lane.b32.xlu0 %v23, 127
  %v48 = vpop.permute.xlu0 %47
  %49 = vrot.lane.b32.xlu0 %v34, 127
  %v50 = vpop.permute.xlu0 %49
  %vm51 = vcmask 1039360
  %v52 = vsel %vm51, %v36, %v38
  %v53 = vsel %vm51, %v38, %v40
  %v54 = vsel %vm51, %v40, %v42
  %v55 = vsel %vm51, %v42, %v44
  %v56 = vsel %vm51, %v44, %v46
  %v57 = vsel %vm51, %v46, %v48
  %v58 = vsel %vm51, %v48, %v50
  %v61 = vsel %vm51, %v50, %v36
  %vm62 = vcmask 23552
  %v64 = vsel %vm62, %v26, 0
  %vm66 = vcmask 1042432
  %v67 = vsel %vm66, %v52, 0
  %v69 = vsel %vm66, %v53, 0
  %v71 = vsel %vm66, %v54, 0
  %v73 = vsel %vm66, %v55, 0
  %v75 = vsel %vm66, %v56, 0
  %v77 = vsel %vm66, %v57, 0
  %v79 = vsel %vm66, %v58, 0
  %v82 = vsel %vm66, %v61, 0
  %84 = vmatprep.subr.mxu0 %v69
  %85 = vmatpush1.msra.mxu0 %v67
  %86 = vmatprep.subr.mxu0 0.0
  %87 = vmatpush1.msra.mxu0 0.0
  %88 = vmatprep.subr.mxu0 0.0
  %89 = vmatpush1.msra.mxu0 0.0
  %90 = vmatprep.subr.mxu0 0.0
  %91 = vmatpush1.msra.mxu0 0.0
  %92 = vmatprep.subr.mxu0 0.0
  %93 = vmatpush1.msra.mxu0 0.0
  %94 = vmatprep.subr.mxu0 0.0
  %95 = vmatpush1.msra.mxu0 0.0
  %96 = vmatprep.subr.mxu0 0.0
  %97 = vmatpush1.msra.mxu0 0.0
  %98 = vmatprep.subr.mxu0 0.0
  %99 = vmatpush1.msra.mxu0 0.0
  %100 = vmatprep.subr.mxu0 0.0
  %101 = vmatpush1.msra.mxu0 0.0
  %102 = vmatprep.subr.mxu0 0.0
  %103 = vmatpush1.msra.mxu0 0.0
  %104 = vmatprep.subr.mxu0 0.0
  %105 = vmatpush1.msra.mxu0 0.0
  %106 = vmatprep.subr.mxu0 0.0
  %107 = vmatpush1.msra.mxu0 0.0
  %108 = vmatprep.subr.mxu0 0.0
  %109 = vmatpush1.msra.mxu0 0.0
  %110 = vmatprep.subr.mxu0 0.0
  %111 = vmatpush1.msra.mxu0 0.0
  %112 = vmatprep.subr.mxu0 0.0
  %113 = vmatpush1.msra.mxu0 0.0
  %114 = vmatprep.subr.mxu0 0.0
  %115 = vmatpush1.msra.mxu0 0.0
  %116 = vmatprep.subr.mxu0 0.0
  %117 = vmatpush1.msra.mxu0 0.0
  %118 = vmatprep.subr.mxu0 0.0
  %119 = vmatpush1.msra.mxu0 0.0
  %120 = vmatprep.subr.mxu0 0.0
  %121 = vmatpush1.msra.mxu0 0.0
  %122 = vmatprep.subr.mxu0 0.0
  %123 = vmatpush1.msra.mxu0 0.0
  %124 = vmatprep.subr.mxu0 0.0
  %125 = vmatpush1.msra.mxu0 0.0
  %126 = vmatprep.subr.mxu0 0.0
  %127 = vmatpush1.msra.mxu0 0.0
  %128 = vmatprep.subr.mxu0 0.0
  %129 = vmatpush1.msra.mxu0 0.0
  %130 = vmatprep.subr.mxu0 0.0
  %131 = vmatpush1.msra.mxu0 0.0
  %132 = vmatprep.subr.mxu0 0.0
  %133 = vmatpush1.msra.mxu0 0.0
  %134 = vmatprep.subr.mxu0 0.0
  %135 = vmatpush1.msra.mxu0 0.0
  %136 = vmatprep.subr.mxu0 0.0
  %137 = vmatpush1.msra.mxu0 0.0
  %138 = vmatprep.subr.mxu0 0.0
  %139 = vmatpush1.msra.mxu0 0.0
  %140 = vmatprep.subr.mxu0 0.0
  %141 = vmatpush1.msra.mxu0 0.0
  %142 = vmatprep.subr.mxu0 0.0
  %143 = vmatpush1.msra.mxu0 0.0
  %144 = vmatprep.subr.mxu0 0.0
  %145 = vmatpush1.msra.mxu0 0.0
  %146 = vmatprep.subr.mxu0 0.0
  %147 = vmatpush1.msra.mxu0 0.0
  %148 = vmatprep.mubr.f32.mxu0 0.0
  %149 = vmatmul.mubr.f32.gmra.mrb[0].mxu0 %v64
  %v150 = vpop.f32.mrb[0].mxu0
  %v151 = vadd.f32 0.0, %v150
  %v152 = vpop.f32.mrb[0].mxu0
  %v153 = vadd.f32 0.0, %v152
  %154 = vdwg.mxu0
  %155 = vmatprep.subr.mxu0 %v73
  %156 = vmatpush1.msra.mxu0 %v71
  %157 = vmatprep.subr.mxu0 0.0
  %158 = vmatpush1.msra.mxu0 0.0
  %159 = vmatprep.subr.mxu0 0.0
  %160 = vmatpush1.msra.mxu0 0.0
  %161 = vmatprep.subr.mxu0 0.0
  %162 = vmatpush1.msra.mxu0 0.0
  %163 = vmatprep.subr.mxu0 0.0
  %164 = vmatpush1.msra.mxu0 0.0
  %165 = vmatprep.subr.mxu0 0.0
  %166 = vmatpush1.msra.mxu0 0.0
  %167 = vmatprep.subr.mxu0 0.0
  %168 = vmatpush1.msra.mxu0 0.0
  %169 = vmatprep.subr.mxu0 0.0
  %170 = vmatpush1.msra.mxu0 0.0
  %171 = vmatprep.subr.mxu0 0.0
  %172 = vmatpush1.msra.mxu0 0.0
  %173 = vmatprep.subr.mxu0 0.0
  %174 = vmatpush1.msra.mxu0 0.0
  %175 = vmatprep.subr.mxu0 0.0
  %176 = vmatpush1.msra.mxu0 0.0
  %177 = vmatprep.subr.mxu0 0.0
  %178 = vmatpush1.msra.mxu0 0.0
  %179 = vmatprep.subr.mxu0 0.0
  %180 = vmatpush1.msra.mxu0 0.0
  %181 = vmatprep.subr.mxu0 0.0
  %182 = vmatpush1.msra.mxu0 0.0
  %183 = vmatprep.subr.mxu0 0.0
  %184 = vmatpush1.msra.mxu0 0.0
  %185 = vmatprep.subr.mxu0 0.0
  %186 = vmatpush1.msra.mxu0 0.0
  %187 = vmatprep.subr.mxu0 0.0
  %188 = vmatpush1.msra.mxu0 0.0
  %189 = vmatprep.subr.mxu0 0.0
  %190 = vmatpush1.msra.mxu0 0.0
  %191 = vmatprep.subr.mxu0 0.0
  %192 = vmatpush1.msra.mxu0 0.0
  %193 = vmatprep.subr.mxu0 0.0
  %194 = vmatpush1.msra.mxu0 0.0
  %195 = vmatprep.subr.mxu0 0.0
  %196 = vmatpush1.msra.mxu0 0.0
  %197 = vmatprep.subr.mxu0 0.0
  %198 = vmatpush1.msra.mxu0 0.0
  %199 = vmatprep.subr.mxu0 0.0
  %200 = vmatpush1.msra.mxu0 0.0
  %201 = vmatprep.subr.mxu0 0.0
  %202 = vmatpush1.msra.mxu0 0.0
  %203 = vmatprep.subr.mxu0 0.0
  %204 = vmatpush1.msra.mxu0 0.0
  %205 = vmatprep.subr.mxu0 0.0
  %206 = vmatpush1.msra.mxu0 0.0
  %207 = vmatprep.subr.mxu0 0.0
  %208 = vmatpush1.msra.mxu0 0.0
  %209 = vmatprep.subr.mxu0 0.0
  %210 = vmatpush1.msra.mxu0 0.0
  %211 = vmatprep.subr.mxu0 0.0
  %212 = vmatpush1.msra.mxu0 0.0
  %213 = vmatprep.subr.mxu0 0.0
  %214 = vmatpush1.msra.mxu0 0.0
  %215 = vmatprep.subr.mxu0 0.0
  %216 = vmatpush1.msra.mxu0 0.0
  %217 = vmatprep.subr.mxu0 0.0
  %218 = vmatpush1.msra.mxu0 0.0
  %219 = vmatprep.mubr.f32.mxu0 0.0
  %220 = vmatmul.mubr.f32.gmra.mrb[0].mxu0 %v64
  %v221 = vpop.f32.mrb[0].mxu0
  %v222 = vadd.f32 0.0, %v221
  %v223 = vpop.f32.mrb[0].mxu0
  %v224 = vadd.f32 0.0, %v223
  %225 = vdwg.mxu0
  %226 = vmatprep.subr.mxu0 %v77
  %227 = vmatpush1.msra.mxu0 %v75
  %228 = vmatprep.subr.mxu0 0.0
  %229 = vmatpush1.msra.mxu0 0.0
  %230 = vmatprep.subr.mxu0 0.0
  %231 = vmatpush1.msra.mxu0 0.0
  %232 = vmatprep.subr.mxu0 0.0
  %233 = vmatpush1.msra.mxu0 0.0
  %234 = vmatprep.subr.mxu0 0.0
  %235 = vmatpush1.msra.mxu0 0.0
  %236 = vmatprep.subr.mxu0 0.0
  %237 = vmatpush1.msra.mxu0 0.0
  %238 = vmatprep.subr.mxu0 0.0
  %239 = vmatpush1.msra.mxu0 0.0
  %240 = vmatprep.subr.mxu0 0.0
  %241 = vmatpush1.msra.mxu0 0.0
  %242 = vmatprep.subr.mxu0 0.0
  %243 = vmatpush1.msra.mxu0 0.0
  %244 = vmatprep.subr.mxu0 0.0
  %245 = vmatpush1.msra.mxu0 0.0
  %246 = vmatprep.subr.mxu0 0.0
  %247 = vmatpush1.msra.mxu0 0.0
  %248 = vmatprep.subr.mxu0 0.0
  %249 = vmatpush1.msra.mxu0 0.0
  %250 = vmatprep.subr.mxu0 0.0
  %251 = vmatpush1.msra.mxu0 0.0
  %252 = vmatprep.subr.mxu0 0.0
  %253 = vmatpush1.msra.mxu0 0.0
  %254 = vmatprep.subr.mxu0 0.0
  %255 = vmatpush1.msra.mxu0 0.0
  %256 = vmatprep.subr.mxu0 0.0
  %257 = vmatpush1.msra.mxu0 0.0
  %258 = vmatprep.subr.mxu0 0.0
  %259 = vmatpush1.msra.mxu0 0.0
  %260 = vmatprep.subr.mxu0 0.0
  %261 = vmatpush1.msra.mxu0 0.0
  %262 = vmatprep.subr.mxu0 0.0
  %263 = vmatpush1.msra.mxu0 0.0
  %264 = vmatprep.subr.mxu0 0.0
  %265 = vmatpush1.msra.mxu0 0.0
  %266 = vmatprep.subr.mxu0 0.0
  %267 = vmatpush1.msra.mxu0 0.0
  %268 = vmatprep.subr.mxu0 0.0
  %269 = vmatpush1.msra.mxu0 0.0
  %270 = vmatprep.subr.mxu0 0.0
  %271 = vmatpush1.msra.mxu0 0.0
  %272 = vmatprep.subr.mxu0 0.0
  %273 = vmatpush1.msra.mxu0 0.0
  %274 = vmatprep.subr.mxu0 0.0
  %275 = vmatpush1.msra.mxu0 0.0
  %276 = vmatprep.subr.mxu0 0.0
  %277 = vmatpush1.msra.mxu0 0.0
  %278 = vmatprep.subr.mxu0 0.0
  %279 = vmatpush1.msra.mxu0 0.0
  %280 = vmatprep.subr.mxu0 0.0
  %281 = vmatpush1.msra.mxu0 0.0
  %282 = vmatprep.subr.mxu0 0.0
  %283 = vmatpush1.msra.mxu0 0.0
  %284 = vmatprep.subr.mxu0 0.0
  %285 = vmatpush1.msra.mxu0 0.0
  %286 = vmatprep.subr.mxu0 0.0
  %287 = vmatpush1.msra.mxu0 0.0
  %288 = vmatprep.subr.mxu0 0.0
  %289 = vmatpush1.msra.mxu0 0.0
  %290 = vmatprep.mubr.f32.mxu0 0.0
  %291 = vmatmul.mubr.f32.gmra.mrb[0].mxu0 %v64
  %v292 = vpop.f32.mrb[0].mxu0
  %v293 = vadd.f32 0.0, %v292
  %v294 = vpop.f32.mrb[0].mxu0
  %v295 = vadd.f32 0.0, %v294
  %296 = vdwg.mxu0
  %297 = vmatprep.subr.mxu0 %v82
  %298 = vmatpush1.msra.mxu0 %v79
  %299 = vmatprep.subr.mxu0 0.0
  %300 = vmatpush1.msra.mxu0 0.0
  %301 = vmatprep.subr.mxu0 0.0
  %302 = vmatpush1.msra.mxu0 0.0
  %303 = vmatprep.subr.mxu0 0.0
  %304 = vmatpush1.msra.mxu0 0.0
  %305 = vmatprep.subr.mxu0 0.0
  %306 = vmatpush1.msra.mxu0 0.0
  %307 = vmatprep.subr.mxu0 0.0
  %308 = vmatpush1.msra.mxu0 0.0
  %309 = vmatprep.subr.mxu0 0.0
  %310 = vmatpush1.msra.mxu0 0.0
  %311 = vmatprep.subr.mxu0 0.0
  %312 = vmatpush1.msra.mxu0 0.0
  %313 = vmatprep.subr.mxu0 0.0
  %314 = vmatpush1.msra.mxu0 0.0
  %315 = vmatprep.subr.mxu0 0.0
  %316 = vmatpush1.msra.mxu0 0.0
  %317 = vmatprep.subr.mxu0 0.0
  %318 = vmatpush1.msra.mxu0 0.0
  %319 = vmatprep.subr.mxu0 0.0
  %320 = vmatpush1.msra.mxu0 0.0
  %321 = vmatprep.subr.mxu0 0.0
  %322 = vmatpush1.msra.mxu0 0.0
  %323 = vmatprep.subr.mxu0 0.0
  %324 = vmatpush1.msra.mxu0 0.0
  %325 = vmatprep.subr.mxu0 0.0
  %326 = vmatpush1.msra.mxu0 0.0
  %327 = vmatprep.subr.mxu0 0.0
  %328 = vmatpush1.msra.mxu0 0.0
  %329 = vmatprep.subr.mxu0 0.0
  %330 = vmatpush1.msra.mxu0 0.0
  %331 = vmatprep.subr.mxu0 0.0
  %332 = vmatpush1.msra.mxu0 0.0
  %333 = vmatprep.subr.mxu0 0.0
  %334 = vmatpush1.msra.mxu0 0.0
  %335 = vmatprep.subr.mxu0 0.0
  %336 = vmatpush1.msra.mxu0 0.0
  %337 = vmatprep.subr.mxu0 0.0
  %338 = vmatpush1.msra.mxu0 0.0
  %339 = vmatprep.subr.mxu0 0.0
  %340 = vmatpush1.msra.mxu0 0.0
  %341 = vmatprep.subr.mxu0 0.0
  %342 = vmatpush1.msra.mxu0 0.0
  %343 = vmatprep.subr.mxu0 0.0
  %344 = vmatpush1.msra.mxu0 0.0
  %345 = vmatprep.subr.mxu0 0.0
  %346 = vmatpush1.msra.mxu0 0.0
  %347 = vmatprep.subr.mxu0 0.0
  %348 = vmatpush1.msra.mxu0 0.0
  %349 = vmatprep.subr.mxu0 0.0
  %350 = vmatpush1.msra.mxu0 0.0
  %351 = vmatprep.subr.mxu0 0.0
  %352 = vmatpush1.msra.mxu0 0.0
  %353 = vmatprep.subr.mxu0 0.0
  %354 = vmatpush1.msra.mxu0 0.0
  %355 = vmatprep.subr.mxu0 0.0
  %356 = vmatpush1.msra.mxu0 0.0
  %357 = vmatprep.subr.mxu0 0.0
  %358 = vmatpush1.msra.mxu0 0.0
  %359 = vmatprep.subr.mxu0 0.0
  %360 = vmatpush1.msra.mxu0 0.0
  %361 = vmatprep.mubr.f32.mxu0 0.0
  %362 = vmatmul.mubr.f32.gmra.mrb[0].mxu0 %v64
  %v363 = vpop.f32.mrb[0].mxu0
  %v364 = vadd.f32 0.0, %v363
  %v365 = vpop.f32.mrb[0].mxu0
  %v366 = vadd.f32 0.0, %v365
  %367 = vdwg.mxu0
  %v369 = vsel %vm62, %v24, 0
  %v371 = vsel %vm66, %v20, 0
  %v373 = vsel %vm66, %v31, 0
  %v375 = vsel %vm66, %v21, 0
  %v377 = vsel %vm66, %v32, 0
  %v379 = vsel %vm66, %v22, 0
  %v381 = vsel %vm66, %v33, 0
  %v383 = vsel %vm66, %v23, 0
  %v385 = vsel %vm66, %v34, 0
  %387 = vmatprep.subr.mxu0 %v373
  %388 = vmatpush1.msra.mxu0 %v371
  %389 = vmatprep.subr.mxu0 0.0
  %390 = vmatpush1.msra.mxu0 0.0
  %391 = vmatprep.subr.mxu0 0.0
  %392 = vmatpush1.msra.mxu0 0.0
  %393 = vmatprep.subr.mxu0 0.0
  %394 = vmatpush1.msra.mxu0 0.0
  %395 = vmatprep.subr.mxu0 0.0
  %396 = vmatpush1.msra.mxu0 0.0
  %397 = vmatprep.subr.mxu0 0.0
  %398 = vmatpush1.msra.mxu0 0.0
  %399 = vmatprep.subr.mxu0 0.0
  %400 = vmatpush1.msra.mxu0 0.0
  %401 = vmatprep.subr.mxu0 0.0
  %402 = vmatpush1.msra.mxu0 0.0
  %403 = vmatprep.subr.mxu0 0.0
  %404 = vmatpush1.msra.mxu0 0.0
  %405 = vmatprep.subr.mxu0 0.0
  %406 = vmatpush1.msra.mxu0 0.0
  %407 = vmatprep.subr.mxu0 0.0
  %408 = vmatpush1.msra.mxu0 0.0
  %409 = vmatprep.subr.mxu0 0.0
  %410 = vmatpush1.msra.mxu0 0.0
  %411 = vmatprep.subr.mxu0 0.0
  %412 = vmatpush1.msra.mxu0 0.0
  %413 = vmatprep.subr.mxu0 0.0
  %414 = vmatpush1.msra.mxu0 0.0
  %415 = vmatprep.subr.mxu0 0.0
  %416 = vmatpush1.msra.mxu0 0.0
  %417 = vmatprep.subr.mxu0 0.0
  %418 = vmatpush1.msra.mxu0 0.0
  %419 = vmatprep.subr.mxu0 0.0
  %420 = vmatpush1.msra.mxu0 0.0
  %421 = vmatprep.subr.mxu0 0.0
  %422 = vmatpush1.msra.mxu0 0.0
  %423 = vmatprep.subr.mxu0 0.0
  %424 = vmatpush1.msra.mxu0 0.0
  %425 = vmatprep.subr.mxu0 0.0
  %426 = vmatpush1.msra.mxu0 0.0
  %427 = vmatprep.subr.mxu0 0.0
  %428 = vmatpush1.msra.mxu0 0.0
  %429 = vmatprep.subr.mxu0 0.0
  %430 = vmatpush1.msra.mxu0 0.0
  %431 = vmatprep.subr.mxu0 0.0
  %432 = vmatpush1.msra.mxu0 0.0
  %433 = vmatprep.subr.mxu0 0.0
  %434 = vmatpush1.msra.mxu0 0.0
  %435 = vmatprep.subr.mxu0 0.0
  %436 = vmatpush1.msra.mxu0 0.0
  %437 = vmatprep.subr.mxu0 0.0
  %438 = vmatpush1.msra.mxu0 0.0
  %439 = vmatprep.subr.mxu0 0.0
  %440 = vmatpush1.msra.mxu0 0.0
  %441 = vmatprep.subr.mxu0 0.0
  %442 = vmatpush1.msra.mxu0 0.0
  %443 = vmatprep.subr.mxu0 0.0
  %444 = vmatpush1.msra.mxu0 0.0
  %445 = vmatprep.subr.mxu0 0.0
  %446 = vmatpush1.msra.mxu0 0.0
  %447 = vmatprep.subr.mxu0 0.0
  %448 = vmatpush1.msra.mxu0 0.0
  %449 = vmatprep.subr.mxu0 0.0
  %450 = vmatpush1.msra.mxu0 0.0
  %451 = vmatprep.mubr.f32.mxu0 0.0
  %452 = vmatmul.mubr.f32.gmra.mrb[0].mxu0 %v369
  %v453 = vpop.f32.mrb[0].mxu0
  %v454 = vadd.f32 %v151, %v453
  %v455 = vpop.f32.mrb[0].mxu0
  %v456 = vadd.f32 %v153, %v455
  %457 = vdwg.mxu0
  %458 = vmatprep.subr.mxu0 %v377
  %459 = vmatpush1.msra.mxu0 %v375
  %460 = vmatprep.subr.mxu0 0.0
  %461 = vmatpush1.msra.mxu0 0.0
  %462 = vmatprep.subr.mxu0 0.0
  %463 = vmatpush1.msra.mxu0 0.0
  %464 = vmatprep.subr.mxu0 0.0
  %465 = vmatpush1.msra.mxu0 0.0
  %466 = vmatprep.subr.mxu0 0.0
  %467 = vmatpush1.msra.mxu0 0.0
  %468 = vmatprep.subr.mxu0 0.0
  %469 = vmatpush1.msra.mxu0 0.0
  %470 = vmatprep.subr.mxu0 0.0
  %471 = vmatpush1.msra.mxu0 0.0
  %472 = vmatprep.subr.mxu0 0.0
  %473 = vmatpush1.msra.mxu0 0.0
  %474 = vmatprep.subr.mxu0 0.0
  %475 = vmatpush1.msra.mxu0 0.0
  %476 = vmatprep.subr.mxu0 0.0
  %477 = vmatpush1.msra.mxu0 0.0
  %478 = vmatprep.subr.mxu0 0.0
  %479 = vmatpush1.msra.mxu0 0.0
  %480 = vmatprep.subr.mxu0 0.0
  %481 = vmatpush1.msra.mxu0 0.0
  %482 = vmatprep.subr.mxu0 0.0
  %483 = vmatpush1.msra.mxu0 0.0
  %484 = vmatprep.subr.mxu0 0.0
  %485 = vmatpush1.msra.mxu0 0.0
  %486 = vmatprep.subr.mxu0 0.0
  %487 = vmatpush1.msra.mxu0 0.0
  %488 = vmatprep.subr.mxu0 0.0
  %489 = vmatpush1.msra.mxu0 0.0
  %490 = vmatprep.subr.mxu0 0.0
  %491 = vmatpush1.msra.mxu0 0.0
  %492 = vmatprep.subr.mxu0 0.0
  %493 = vmatpush1.msra.mxu0 0.0
  %494 = vmatprep.subr.mxu0 0.0
  %495 = vmatpush1.msra.mxu0 0.0
  %496 = vmatprep.subr.mxu0 0.0
  %497 = vmatpush1.msra.mxu0 0.0
  %498 = vmatprep.subr.mxu0 0.0
  %499 = vmatpush1.msra.mxu0 0.0
  %500 = vmatprep.subr.mxu0 0.0
  %501 = vmatpush1.msra.mxu0 0.0
  %502 = vmatprep.subr.mxu0 0.0
  %503 = vmatpush1.msra.mxu0 0.0
  %504 = vmatprep.subr.mxu0 0.0
  %505 = vmatpush1.msra.mxu0 0.0
  %506 = vmatprep.subr.mxu0 0.0
  %507 = vmatpush1.msra.mxu0 0.0
  %508 = vmatprep.subr.mxu0 0.0
  %509 = vmatpush1.msra.mxu0 0.0
  %510 = vmatprep.subr.mxu0 0.0
  %511 = vmatpush1.msra.mxu0 0.0
  %512 = vmatprep.subr.mxu0 0.0
  %513 = vmatpush1.msra.mxu0 0.0
  %514 = vmatprep.subr.mxu0 0.0
  %515 = vmatpush1.msra.mxu0 0.0
  %516 = vmatprep.subr.mxu0 0.0
  %517 = vmatpush1.msra.mxu0 0.0
  %518 = vmatprep.subr.mxu0 0.0
  %519 = vmatpush1.msra.mxu0 0.0
  %520 = vmatprep.subr.mxu0 0.0
  %521 = vmatpush1.msra.mxu0 0.0
  %522 = vmatprep.mubr.f32.mxu0 0.0
  %523 = vmatmul.mubr.f32.gmra.mrb[0].mxu0 %v369
  %v524 = vpop.f32.mrb[0].mxu0
  %v525 = vadd.f32 %v222, %v524
  %v526 = vpop.f32.mrb[0].mxu0
  %v527 = vadd.f32 %v224, %v526
  %528 = vdwg.mxu0
  %529 = vmatprep.subr.mxu0 %v381
  %530 = vmatpush1.msra.mxu0 %v379
  %531 = vmatprep.subr.mxu0 0.0
  %532 = vmatpush1.msra.mxu0 0.0
  %533 = vmatprep.subr.mxu0 0.0
  %534 = vmatpush1.msra.mxu0 0.0
  %535 = vmatprep.subr.mxu0 0.0
  %536 = vmatpush1.msra.mxu0 0.0
  %537 = vmatprep.subr.mxu0 0.0
  %538 = vmatpush1.msra.mxu0 0.0
  %539 = vmatprep.subr.mxu0 0.0
  %540 = vmatpush1.msra.mxu0 0.0
  %541 = vmatprep.subr.mxu0 0.0
  %542 = vmatpush1.msra.mxu0 0.0
  %543 = vmatprep.subr.mxu0 0.0
  %544 = vmatpush1.msra.mxu0 0.0
  %545 = vmatprep.subr.mxu0 0.0
  %546 = vmatpush1.msra.mxu0 0.0
  %547 = vmatprep.subr.mxu0 0.0
  %548 = vmatpush1.msra.mxu0 0.0
  %549 = vmatprep.subr.mxu0 0.0
  %550 = vmatpush1.msra.mxu0 0.0
  %551 = vmatprep.subr.mxu0 0.0
  %552 = vmatpush1.msra.mxu0 0.0
  %553 = vmatprep.subr.mxu0 0.0
  %554 = vmatpush1.msra.mxu0 0.0
  %555 = vmatprep.subr.mxu0 0.0
  %556 = vmatpush1.msra.mxu0 0.0
  %557 = vmatprep.subr.mxu0 0.0
  %558 = vmatpush1.msra.mxu0 0.0
  %559 = vmatprep.subr.mxu0 0.0
  %560 = vmatpush1.msra.mxu0 0.0
  %561 = vmatprep.subr.mxu0 0.0
  %562 = vmatpush1.msra.mxu0 0.0
  %563 = vmatprep.subr.mxu0 0.0
  %564 = vmatpush1.msra.mxu0 0.0
  %565 = vmatprep.subr.mxu0 0.0
  %566 = vmatpush1.msra.mxu0 0.0
  %567 = vmatprep.subr.mxu0 0.0
  %568 = vmatpush1.msra.mxu0 0.0
  %569 = vmatprep.subr.mxu0 0.0
  %570 = vmatpush1.msra.mxu0 0.0
  %571 = vmatprep.subr.mxu0 0.0
  %572 = vmatpush1.msra.mxu0 0.0
  %573 = vmatprep.subr.mxu0 0.0
  %574 = vmatpush1.msra.mxu0 0.0
  %575 = vmatprep.subr.mxu0 0.0
  %576 = vmatpush1.msra.mxu0 0.0
  %577 = vmatprep.subr.mxu0 0.0
  %578 = vmatpush1.msra.mxu0 0.0
  %579 = vmatprep.subr.mxu0 0.0
  %580 = vmatpush1.msra.mxu0 0.0
  %581 = vmatprep.subr.mxu0 0.0
  %582 = vmatpush1.msra.mxu0 0.0
  %583 = vmatprep.subr.mxu0 0.0
  %584 = vmatpush1.msra.mxu0 0.0
  %585 = vmatprep.subr.mxu0 0.0
  %586 = vmatpush1.msra.mxu0 0.0
  %587 = vmatprep.subr.mxu0 0.0
  %588 = vmatpush1.msra.mxu0 0.0
  %589 = vmatprep.subr.mxu0 0.0
  %590 = vmatpush1.msra.mxu0 0.0
  %591 = vmatprep.subr.mxu0 0.0
  %592 = vmatpush1.msra.mxu0 0.0
  %593 = vmatprep.mubr.f32.mxu0 0.0
  %594 = vmatmul.mubr.f32.gmra.mrb[0].mxu0 %v369
  %v595 = vpop.f32.mrb[0].mxu0
  %v596 = vadd.f32 %v293, %v595
  %v597 = vpop.f32.mrb[0].mxu0
  %v598 = vadd.f32 %v295, %v597
  %599 = vdwg.mxu0
  %600 = vmatprep.subr.mxu0 %v385
  %601 = vmatpush1.msra.mxu0 %v383
  %602 = vmatprep.subr.mxu0 0.0
  %603 = vmatpush1.msra.mxu0 0.0
  %604 = vmatprep.subr.mxu0 0.0
  %605 = vmatpush1.msra.mxu0 0.0
  %606 = vmatprep.subr.mxu0 0.0
  %607 = vmatpush1.msra.mxu0 0.0
  %608 = vmatprep.subr.mxu0 0.0
  %609 = vmatpush1.msra.mxu0 0.0
  %610 = vmatprep.subr.mxu0 0.0
  %611 = vmatpush1.msra.mxu0 0.0
  %612 = vmatprep.subr.mxu0 0.0
  %613 = vmatpush1.msra.mxu0 0.0
  %614 = vmatprep.subr.mxu0 0.0
  %615 = vmatpush1.msra.mxu0 0.0
  %616 = vmatprep.subr.mxu0 0.0
  %617 = vmatpush1.msra.mxu0 0.0
  %618 = vmatprep.subr.mxu0 0.0
  %619 = vmatpush1.msra.mxu0 0.0
  %620 = vmatprep.subr.mxu0 0.0
  %621 = vmatpush1.msra.mxu0 0.0
  %622 = vmatprep.subr.mxu0 0.0
  %623 = vmatpush1.msra.mxu0 0.0
  %624 = vmatprep.subr.mxu0 0.0
  %625 = vmatpush1.msra.mxu0 0.0
  %626 = vmatprep.subr.mxu0 0.0
  %627 = vmatpush1.msra.mxu0 0.0
  %628 = vmatprep.subr.mxu0 0.0
  %629 = vmatpush1.msra.mxu0 0.0
  %630 = vmatprep.subr.mxu0 0.0
  %631 = vmatpush1.msra.mxu0 0.0
  %632 = vmatprep.subr.mxu0 0.0
  %633 = vmatpush1.msra.mxu0 0.0
  %634 = vmatprep.subr.mxu0 0.0
  %635 = vmatpush1.msra.mxu0 0.0
  %636 = vmatprep.subr.mxu0 0.0
  %637 = vmatpush1.msra.mxu0 0.0
  %638 = vmatprep.subr.mxu0 0.0
  %639 = vmatpush1.msra.mxu0 0.0
  %640 = vmatprep.subr.mxu0 0.0
  %641 = vmatpush1.msra.mxu0 0.0
  %642 = vmatprep.subr.mxu0 0.0
  %643 = vmatpush1.msra.mxu0 0.0
  %644 = vmatprep.subr.mxu0 0.0
  %645 = vmatpush1.msra.mxu0 0.0
  %646 = vmatprep.subr.mxu0 0.0
  %647 = vmatpush1.msra.mxu0 0.0
  %648 = vmatprep.subr.mxu0 0.0
  %649 = vmatpush1.msra.mxu0 0.0
  %650 = vmatprep.subr.mxu0 0.0
  %651 = vmatpush1.msra.mxu0 0.0
  %652 = vmatprep.subr.mxu0 0.0
  %653 = vmatpush1.msra.mxu0 0.0
  %654 = vmatprep.subr.mxu0 0.0
  %655 = vmatpush1.msra.mxu0 0.0
  %656 = vmatprep.subr.mxu0 0.0
  %657 = vmatpush1.msra.mxu0 0.0
  %658 = vmatprep.subr.mxu0 0.0
  %659 = vmatpush1.msra.mxu0 0.0
  %660 = vmatprep.subr.mxu0 0.0
  %661 = vmatpush1.msra.mxu0 0.0
  %662 = vmatprep.subr.mxu0 0.0
  %663 = vmatpush1.msra.mxu0 0.0
  %664 = vmatprep.mubr.f32.mxu0 0.0
  %665 = vmatmul.mubr.f32.gmra.mrb[0].mxu0 %v369
  %v666 = vpop.f32.mrb[0].mxu0
  %v667 = vadd.f32 %v364, %v666
  %v668 = vpop.f32.mrb[0].mxu0
  %v669 = vadd.f32 %v366, %v668
  %670 = vdwg.mxu0
  %s671 = scalar_lea.vmem %s1, 8
  %v672 = vld [vmem:[%s671] sm:$0xf]
  %673 = vrot.lane.b32.xlu0 %v20, 126
  %v674 = vpop.permute.xlu0 %673
  %675 = vrot.lane.b32.xlu0 %v31, 126
  %v676 = vpop.permute.xlu0 %675
  %677 = vrot.lane.b32.xlu0 %v21, 126
  %v678 = vpop.permute.xlu0 %677
  %679 = vrot.lane.b32.xlu0 %v32, 126
  %v680 = vpop.permute.xlu0 %679
  %681 = vrot.lane.b32.xlu0 %v22, 126
  %v682 = vpop.permute.xlu0 %681
  %683 = vrot.lane.b32.xlu0 %v33, 126
  %v684 = vpop.permute.xlu0 %683
  %685 = vrot.lane.b32.xlu0 %v23, 126
  %v686 = vpop.permute.xlu0 %685
  %687 = vrot.lane.b32.xlu0 %v34, 126
  %v688 = vpop.permute.xlu0 %687
  %vm689 = vcmask 1031168
  %v690 = vsel %vm689, %v674, %v676
  %v691 = vsel %vm689, %v676, %v678
  %v692 = vsel %vm689, %v678, %v680
  %v693 = vsel %vm689, %v680, %v682
  %v694 = vsel %vm689, %v682, %v684
  %v695 = vsel %vm689, %v684, %v686
  %v696 = vsel %vm689, %v686, %v688
  %v699 = vsel %vm689, %v688, %v674
  %v701 = vsel %vm62, %v672, 0
  %v703 = vsel %vm66, %v690, 0
  %v705 = vsel %vm66, %v691, 0
  %v707 = vsel %vm66, %v692, 0
  %v709 = vsel %vm66, %v693, 0
  %v711 = vsel %vm66, %v694, 0
  %v713 = vsel %vm66, %v695, 0
  %v715 = vsel %vm66, %v696, 0
  %v718 = vsel %vm66, %v699, 0
  %720 = vmatprep.subr.mxu0 %v705
  %721 = vmatpush1.msra.mxu0 %v703
  %722 = vmatprep.subr.mxu0 0.0
  %723 = vmatpush1.msra.mxu0 0.0
  %724 = vmatprep.subr.mxu0 0.0
  %725 = vmatpush1.msra.mxu0 0.0
  %726 = vmatprep.subr.mxu0 0.0
  %727 = vmatpush1.msra.mxu0 0.0
  %728 = vmatprep.subr.mxu0 0.0
  %729 = vmatpush1.msra.mxu0 0.0
  %730 = vmatprep.subr.mxu0 0.0
  %731 = vmatpush1.msra.mxu0 0.0
  %732 = vmatprep.subr.mxu0 0.0
  %733 = vmatpush1.msra.mxu0 0.0
  %734 = vmatprep.subr.mxu0 0.0
  %735 = vmatpush1.msra.mxu0 0.0
  %736 = vmatprep.subr.mxu0 0.0
  %737 = vmatpush1.msra.mxu0 0.0
  %738 = vmatprep.subr.mxu0 0.0
  %739 = vmatpush1.msra.mxu0 0.0
  %740 = vmatprep.subr.mxu0 0.0
  %741 = vmatpush1.msra.mxu0 0.0
  %742 = vmatprep.subr.mxu0 0.0
  %743 = vmatpush1.msra.mxu0 0.0
  %744 = vmatprep.subr.mxu0 0.0
  %745 = vmatpush1.msra.mxu0 0.0
  %746 = vmatprep.subr.mxu0 0.0
  %747 = vmatpush1.msra.mxu0 0.0
  %748 = vmatprep.subr.mxu0 0.0
  %749 = vmatpush1.msra.mxu0 0.0
  %750 = vmatprep.subr.mxu0 0.0
  %751 = vmatpush1.msra.mxu0 0.0
  %752 = vmatprep.subr.mxu0 0.0
  %753 = vmatpush1.msra.mxu0 0.0
  %754 = vmatprep.subr.mxu0 0.0
  %755 = vmatpush1.msra.mxu0 0.0
  %756 = vmatprep.subr.mxu0 0.0
  %757 = vmatpush1.msra.mxu0 0.0
  %758 = vmatprep.subr.mxu0 0.0
  %759 = vmatpush1.msra.mxu0 0.0
  %760 = vmatprep.subr.mxu0 0.0
  %761 = vmatpush1.msra.mxu0 0.0
  %762 = vmatprep.subr.mxu0 0.0
  %763 = vmatpush1.msra.mxu0 0.0
  %764 = vmatprep.subr.mxu0 0.0
  %765 = vmatpush1.msra.mxu0 0.0
  %766 = vmatprep.subr.mxu0 0.0
  %767 = vmatpush1.msra.mxu0 0.0
  %768 = vmatprep.subr.mxu0 0.0
  %769 = vmatpush1.msra.mxu0 0.0
  %770 = vmatprep.subr.mxu0 0.0
  %771 = vmatpush1.msra.mxu0 0.0
  %772 = vmatprep.subr.mxu0 0.0
  %773 = vmatpush1.msra.mxu0 0.0
  %774 = vmatprep.subr.mxu0 0.0
  %775 = vmatpush1.msra.mxu0 0.0
  %776 = vmatprep.subr.mxu0 0.0
  %777 = vmatpush1.msra.mxu0 0.0
  %778 = vmatprep.subr.mxu0 0.0
  %779 = vmatpush1.msra.mxu0 0.0
  %780 = vmatprep.subr.mxu0 0.0
  %781 = vmatpush1.msra.mxu0 0.0
  %782 = vmatprep.subr.mxu0 0.0
  %783 = vmatpush1.msra.mxu0 0.0
  %784 = vmatprep.mubr.f32.mxu0 0.0
  %785 = vmatmul.mubr.f32.gmra.mrb[0].mxu0 %v701
  %v786 = vpop.f32.mrb[0].mxu0
  %v787 = vadd.f32 0.0, %v786
  %v788 = vpop.f32.mrb[0].mxu0
  %v789 = vadd.f32 0.0, %v788
  %790 = vdwg.mxu0
  %791 = vmatprep.subr.mxu0 %v709
  %792 = vmatpush1.msra.mxu0 %v707
  %793 = vmatprep.subr.mxu0 0.0
  %794 = vmatpush1.msra.mxu0 0.0
  %795 = vmatprep.subr.mxu0 0.0
  %796 = vmatpush1.msra.mxu0 0.0
  %797 = vmatprep.subr.mxu0 0.0
  %798 = vmatpush1.msra.mxu0 0.0
  %799 = vmatprep.subr.mxu0 0.0
  %800 = vmatpush1.msra.mxu0 0.0
  %801 = vmatprep.subr.mxu0 0.0
  %802 = vmatpush1.msra.mxu0 0.0
  %803 = vmatprep.subr.mxu0 0.0
  %804 = vmatpush1.msra.mxu0 0.0
  %805 = vmatprep.subr.mxu0 0.0
  %806 = vmatpush1.msra.mxu0 0.0
  %807 = vmatprep.subr.mxu0 0.0
  %808 = vmatpush1.msra.mxu0 0.0
  %809 = vmatprep.subr.mxu0 0.0
  %810 = vmatpush1.msra.mxu0 0.0
  %811 = vmatprep.subr.mxu0 0.0
  %812 = vmatpush1.msra.mxu0 0.0
  %813 = vmatprep.subr.mxu0 0.0
  %814 = vmatpush1.msra.mxu0 0.0
  %815 = vmatprep.subr.mxu0 0.0
  %816 = vmatpush1.msra.mxu0 0.0
  %817 = vmatprep.subr.mxu0 0.0
  %818 = vmatpush1.msra.mxu0 0.0
  %819 = vmatprep.subr.mxu0 0.0
  %820 = vmatpush1.msra.mxu0 0.0
  %821 = vmatprep.subr.mxu0 0.0
  %822 = vmatpush1.msra.mxu0 0.0
  %823 = vmatprep.subr.mxu0 0.0
  %824 = vmatpush1.msra.mxu0 0.0
  %825 = vmatprep.subr.mxu0 0.0
  %826 = vmatpush1.msra.mxu0 0.0
  %827 = vmatprep.subr.mxu0 0.0
  %828 = vmatpush1.msra.mxu0 0.0
  %829 = vmatprep.subr.mxu0 0.0
  %830 = vmatpush1.msra.mxu0 0.0
  %831 = vmatprep.subr.mxu0 0.0
  %832 = vmatpush1.msra.mxu0 0.0
  %833 = vmatprep.subr.mxu0 0.0
  %834 = vmatpush1.msra.mxu0 0.0
  %835 = vmatprep.subr.mxu0 0.0
  %836 = vmatpush1.msra.mxu0 0.0
  %837 = vmatprep.subr.mxu0 0.0
  %838 = vmatpush1.msra.mxu0 0.0
  %839 = vmatprep.subr.mxu0 0.0
  %840 = vmatpush1.msra.mxu0 0.0
  %841 = vmatprep.subr.mxu0 0.0
  %842 = vmatpush1.msra.mxu0 0.0
  %843 = vmatprep.subr.mxu0 0.0
  %844 = vmatpush1.msra.mxu0 0.0
  %845 = vmatprep.subr.mxu0 0.0
  %846 = vmatpush1.msra.mxu0 0.0
  %847 = vmatprep.subr.mxu0 0.0
  %848 = vmatpush1.msra.mxu0 0.0
  %849 = vmatprep.subr.mxu0 0.0
  %850 = vmatpush1.msra.mxu0 0.0
  %851 = vmatprep.subr.mxu0 0.0
  %852 = vmatpush1.msra.mxu0 0.0
  %853 = vmatprep.subr.mxu0 0.0
  %854 = vmatpush1.msra.mxu0 0.0
  %855 = vmatprep.mubr.f32.mxu0 0.0
  %856 = vmatmul.mubr.f32.gmra.mrb[0].mxu0 %v701
  %v857 = vpop.f32.mrb[0].mxu0
  %v858 = vadd.f32 0.0, %v857
  %v859 = vpop.f32.mrb[0].mxu0
  %v860 = vadd.f32 0.0, %v859
  %861 = vdwg.mxu0
  %862 = vmatprep.subr.mxu0 %v713
  %863 = vmatpush1.msra.mxu0 %v711
  %864 = vmatprep.subr.mxu0 0.0
  %865 = vmatpush1.msra.mxu0 0.0
  %866 = vmatprep.subr.mxu0 0.0
  %867 = vmatpush1.msra.mxu0 0.0
  %868 = vmatprep.subr.mxu0 0.0
  %869 = vmatpush1.msra.mxu0 0.0
  %870 = vmatprep.subr.mxu0 0.0
  %871 = vmatpush1.msra.mxu0 0.0
  %872 = vmatprep.subr.mxu0 0.0
  %873 = vmatpush1.msra.mxu0 0.0
  %874 = vmatprep.subr.mxu0 0.0
  %875 = vmatpush1.msra.mxu0 0.0
  %876 = vmatprep.subr.mxu0 0.0
  %877 = vmatpush1.msra.mxu0 0.0
  %878 = vmatprep.subr.mxu0 0.0
  %879 = vmatpush1.msra.mxu0 0.0
  %880 = vmatprep.subr.mxu0 0.0
  %881 = vmatpush1.msra.mxu0 0.0
  %882 = vmatprep.subr.mxu0 0.0
  %883 = vmatpush1.msra.mxu0 0.0
  %884 = vmatprep.subr.mxu0 0.0
  %885 = vmatpush1.msra.mxu0 0.0
  %886 = vmatprep.subr.mxu0 0.0
  %887 = vmatpush1.msra.mxu0 0.0
  %888 = vmatprep.subr.mxu0 0.0
  %889 = vmatpush1.msra.mxu0 0.0
  %890 = vmatprep.subr.mxu0 0.0
  %891 = vmatpush1.msra.mxu0 0.0
  %892 = vmatprep.subr.mxu0 0.0
  %893 = vmatpush1.msra.mxu0 0.0
  %894 = vmatprep.subr.mxu0 0.0
  %895 = vmatpush1.msra.mxu0 0.0
  %896 = vmatprep.subr.mxu0 0.0
  %897 = vmatpush1.msra.mxu0 0.0
  %898 = vmatprep.subr.mxu0 0.0
  %899 = vmatpush1.msra.mxu0 0.0
  %900 = vmatprep.subr.mxu0 0.0
  %901 = vmatpush1.msra.mxu0 0.0
  %902 = vmatprep.subr.mxu0 0.0
  %903 = vmatpush1.msra.mxu0 0.0
  %904 = vmatprep.subr.mxu0 0.0
  %905 = vmatpush1.msra.mxu0 0.0
  %906 = vmatprep.subr.mxu0 0.0
  %907 = vmatpush1.msra.mxu0 0.0
  %908 = vmatprep.subr.mxu0 0.0
  %909 = vmatpush1.msra.mxu0 0.0
  %910 = vmatprep.subr.mxu0 0.0
  %911 = vmatpush1.msra.mxu0 0.0
  %912 = vmatprep.subr.mxu0 0.0
  %913 = vmatpush1.msra.mxu0 0.0
  %914 = vmatprep.subr.mxu0 0.0
  %915 = vmatpush1.msra.mxu0 0.0
  %916 = vmatprep.subr.mxu0 0.0
  %917 = vmatpush1.msra.mxu0 0.0
  %918 = vmatprep.subr.mxu0 0.0
  %919 = vmatpush1.msra.mxu0 0.0
  %920 = vmatprep.subr.mxu0 0.0
  %921 = vmatpush1.msra.mxu0 0.0
  %922 = vmatprep.subr.mxu0 0.0
  %923 = vmatpush1.msra.mxu0 0.0
  %924 = vmatprep.subr.mxu0 0.0
  %925 = vmatpush1.msra.mxu0 0.0
  %926 = vmatprep.mubr.f32.mxu0 0.0
  %927 = vmatmul.mubr.f32.gmra.mrb[0].mxu0 %v701
  %v928 = vpop.f32.mrb[0].mxu0
  %v929 = vadd.f32 0.0, %v928
  %v930 = vpop.f32.mrb[0].mxu0
  %v931 = vadd.f32 0.0, %v930
  %932 = vdwg.mxu0
  %933 = vmatprep.subr.mxu0 %v718
  %934 = vmatpush1.msra.mxu0 %v715
  %935 = vmatprep.subr.mxu0 0.0
  %936 = vmatpush1.msra.mxu0 0.0
  %937 = vmatprep.subr.mxu0 0.0
  %938 = vmatpush1.msra.mxu0 0.0
  %939 = vmatprep.subr.mxu0 0.0
  %940 = vmatpush1.msra.mxu0 0.0
  %941 = vmatprep.subr.mxu0 0.0
  %942 = vmatpush1.msra.mxu0 0.0
  %943 = vmatprep.subr.mxu0 0.0
  %944 = vmatpush1.msra.mxu0 0.0
  %945 = vmatprep.subr.mxu0 0.0
  %946 = vmatpush1.msra.mxu0 0.0
  %947 = vmatprep.subr.mxu0 0.0
  %948 = vmatpush1.msra.mxu0 0.0
  %949 = vmatprep.subr.mxu0 0.0
  %950 = vmatpush1.msra.mxu0 0.0
  %951 = vmatprep.subr.mxu0 0.0
  %952 = vmatpush1.msra.mxu0 0.0
  %953 = vmatprep.subr.mxu0 0.0
  %954 = vmatpush1.msra.mxu0 0.0
  %955 = vmatprep.subr.mxu0 0.0
  %956 = vmatpush1.msra.mxu0 0.0
  %957 = vmatprep.subr.mxu0 0.0
  %958 = vmatpush1.msra.mxu0 0.0
  %959 = vmatprep.subr.mxu0 0.0
  %960 = vmatpush1.msra.mxu0 0.0
  %961 = vmatprep.subr.mxu0 0.0
  %962 = vmatpush1.msra.mxu0 0.0
  %963 = vmatprep.subr.mxu0 0.0
  %964 = vmatpush1.msra.mxu0 0.0
  %965 = vmatprep.subr.mxu0 0.0
  %966 = vmatpush1.msra.mxu0 0.0
  %967 = vmatprep.subr.mxu0 0.0
  %968 = vmatpush1.msra.mxu0 0.0
  %969 = vmatprep.subr.mxu0 0.0
  %970 = vmatpush1.msra.mxu0 0.0
  %971 = vmatprep.subr.mxu0 0.0
  %972 = vmatpush1.msra.mxu0 0.0
  %973 = vmatprep.subr.mxu0 0.0
  %974 = vmatpush1.msra.mxu0 0.0
  %975 = vmatprep.subr.mxu0 0.0
  %976 = vmatpush1.msra.mxu0 0.0
  %977 = vmatprep.subr.mxu0 0.0
  %978 = vmatpush1.msra.mxu0 0.0
  %979 = vmatprep.subr.mxu0 0.0
  %980 = vmatpush1.msra.mxu0 0.0
  %981 = vmatprep.subr.mxu0 0.0
  %982 = vmatpush1.msra.mxu0 0.0
  %983 = vmatprep.subr.mxu0 0.0
  %984 = vmatpush1.msra.mxu0 0.0
  %985 = vmatprep.subr.mxu0 0.0
  %986 = vmatpush1.msra.mxu0 0.0
  %987 = vmatprep.subr.mxu0 0.0
  %988 = vmatpush1.msra.mxu0 0.0
  %989 = vmatprep.subr.mxu0 0.0
  %990 = vmatpush1.msra.mxu0 0.0
  %991 = vmatprep.subr.mxu0 0.0
  %992 = vmatpush1.msra.mxu0 0.0
  %993 = vmatprep.subr.mxu0 0.0
  %994 = vmatpush1.msra.mxu0 0.0
  %995 = vmatprep.subr.mxu0 0.0
  %996 = vmatpush1.msra.mxu0 0.0
  %997 = vmatprep.mubr.f32.mxu0 0.0
  %998 = vmatmul.mubr.f32.gmra.mrb[0].mxu0 %v701
  %v999 = vpop.f32.mrb[0].mxu0
  %v1000 = vadd.f32 0.0, %v999
  %v1001 = vpop.f32.mrb[0].mxu0
  %v1002 = vadd.f32 0.0, %v1001
  %1003 = vdwg.mxu0
  %v1004 = vadd.f32 %v454, %v787
  %v1005 = vadd.f32 %v456, %v789
  %v1006 = vadd.f32 %v525, %v858
  %v1007 = vadd.f32 %v527, %v860
  %v1008 = vadd.f32 %v596, %v929
  %v1009 = vadd.f32 %v598, %v931
  %v1010 = vadd.f32 %v667, %v1000
  %v1011 = vadd.f32 %v669, %v1002
  %s1012 = scalar_lea.vmem %s1, 12
  %v1013 = vld [vmem:[%s1012] sm:$0xf]
  %1014 = vrot.lane.b32.xlu0 %v20, 96
  %v1015 = vpop.permute.xlu0 %1014
  %1016 = vrot.lane.b32.xlu0 %v31, 96
  %v1017 = vpop.permute.xlu0 %1016
  %1018 = vrot.lane.b32.xlu0 %v21, 96
  %v1019 = vpop.permute.xlu0 %1018
  %1020 = vrot.lane.b32.xlu0 %v32, 96
  %v1021 = vpop.permute.xlu0 %1020
  %1022 = vrot.lane.b32.xlu0 %v22, 96
  %v1023 = vpop.permute.xlu0 %1022
  %1024 = vrot.lane.b32.xlu0 %v33, 96
  %v1025 = vpop.permute.xlu0 %1024
  %1026 = vrot.lane.b32.xlu0 %v23, 96
  %v1027 = vpop.permute.xlu0 %1026
  %1028 = vrot.lane.b32.xlu0 %v34, 96
  %v1029 = vpop.permute.xlu0 %1028
  %vm1030 = vcmask 785408
  %v1031 = vsel %vm1030, %v1015, %v1017
  %v1032 = vsel %vm1030, %v1017, %v1019
  %v1033 = vsel %vm1030, %v1019, %v1021
  %v1034 = vsel %vm1030, %v1021, %v1023
  %v1035 = vsel %vm1030, %v1023, %v1025
  %v1036 = vsel %vm1030, %v1025, %v1027
  %v1037 = vsel %vm1030, %v1027, %v1029
  %v1040 = vsel %vm1030, %v1029, %v1015
  %v1042 = vsel %vm62, %v1013, 0
  %v1044 = vsel %vm66, %v1031, 0
  %v1046 = vsel %vm66, %v1032, 0
  %v1048 = vsel %vm66, %v1033, 0
  %v1050 = vsel %vm66, %v1034, 0
  %v1052 = vsel %vm66, %v1035, 0
  %v1054 = vsel %vm66, %v1036, 0
  %v1056 = vsel %vm66, %v1037, 0
  %v1059 = vsel %vm66, %v1040, 0
  %1061 = vmatprep.subr.mxu0 %v1046
  %1062 = vmatpush1.msra.mxu0 %v1044
  %1063 = vmatprep.subr.mxu0 0.0
  %1064 = vmatpush1.msra.mxu0 0.0
  %1065 = vmatprep.subr.mxu0 0.0
  %1066 = vmatpush1.msra.mxu0 0.0
  %1067 = vmatprep.subr.mxu0 0.0
  %1068 = vmatpush1.msra.mxu0 0.0
  %1069 = vmatprep.subr.mxu0 0.0
  %1070 = vmatpush1.msra.mxu0 0.0
  %1071 = vmatprep.subr.mxu0 0.0
  %1072 = vmatpush1.msra.mxu0 0.0
  %1073 = vmatprep.subr.mxu0 0.0
  %1074 = vmatpush1.msra.mxu0 0.0
  %1075 = vmatprep.subr.mxu0 0.0
  %1076 = vmatpush1.msra.mxu0 0.0
  %1077 = vmatprep.subr.mxu0 0.0
  %1078 = vmatpush1.msra.mxu0 0.0
  %1079 = vmatprep.subr.mxu0 0.0
  %1080 = vmatpush1.msra.mxu0 0.0
  %1081 = vmatprep.subr.mxu0 0.0
  %1082 = vmatpush1.msra.mxu0 0.0
  %1083 = vmatprep.subr.mxu0 0.0
  %1084 = vmatpush1.msra.mxu0 0.0
  %1085 = vmatprep.subr.mxu0 0.0
  %1086 = vmatpush1.msra.mxu0 0.0
  %1087 = vmatprep.subr.mxu0 0.0
  %1088 = vmatpush1.msra.mxu0 0.0
  %1089 = vmatprep.subr.mxu0 0.0
  %1090 = vmatpush1.msra.mxu0 0.0
  %1091 = vmatprep.subr.mxu0 0.0
  %1092 = vmatpush1.msra.mxu0 0.0
  %1093 = vmatprep.subr.mxu0 0.0
  %1094 = vmatpush1.msra.mxu0 0.0
  %1095 = vmatprep.subr.mxu0 0.0
  %1096 = vmatpush1.msra.mxu0 0.0
  %1097 = vmatprep.subr.mxu0 0.0
  %1098 = vmatpush1.msra.mxu0 0.0
  %1099 = vmatprep.subr.mxu0 0.0
  %1100 = vmatpush1.msra.mxu0 0.0
  %1101 = vmatprep.subr.mxu0 0.0
  %1102 = vmatpush1.msra.mxu0 0.0
  %1103 = vmatprep.subr.mxu0 0.0
  %1104 = vmatpush1.msra.mxu0 0.0
  %1105 = vmatprep.subr.mxu0 0.0
  %1106 = vmatpush1.msra.mxu0 0.0
  %1107 = vmatprep.subr.mxu0 0.0
  %1108 = vmatpush1.msra.mxu0 0.0
  %1109 = vmatprep.subr.mxu0 0.0
  %1110 = vmatpush1.msra.mxu0 0.0
  %1111 = vmatprep.subr.mxu0 0.0
  %1112 = vmatpush1.msra.mxu0 0.0
  %1113 = vmatprep.subr.mxu0 0.0
  %1114 = vmatpush1.msra.mxu0 0.0
  %1115 = vmatprep.subr.mxu0 0.0
  %1116 = vmatpush1.msra.mxu0 0.0
  %1117 = vmatprep.subr.mxu0 0.0
  %1118 = vmatpush1.msra.mxu0 0.0
  %1119 = vmatprep.subr.mxu0 0.0
  %1120 = vmatpush1.msra.mxu0 0.0
  %1121 = vmatprep.subr.mxu0 0.0
  %1122 = vmatpush1.msra.mxu0 0.0
  %1123 = vmatprep.subr.mxu0 0.0
  %1124 = vmatpush1.msra.mxu0 0.0
  %1125 = vmatprep.mubr.f32.mxu0 0.0
  %1126 = vmatmul.mubr.f32.gmra.mrb[0].mxu0 %v1042
  %v1127 = vpop.f32.mrb[0].mxu0
  %v1128 = vadd.f32 0.0, %v1127
  %v1129 = vpop.f32.mrb[0].mxu0
  %v1130 = vadd.f32 0.0, %v1129
  %1131 = vdwg.mxu0
  %1132 = vmatprep.subr.mxu0 %v1050
  %1133 = vmatpush1.msra.mxu0 %v1048
  %1134 = vmatprep.subr.mxu0 0.0
  %1135 = vmatpush1.msra.mxu0 0.0
  %1136 = vmatprep.subr.mxu0 0.0
  %1137 = vmatpush1.msra.mxu0 0.0
  %1138 = vmatprep.subr.mxu0 0.0
  %1139 = vmatpush1.msra.mxu0 0.0
  %1140 = vmatprep.subr.mxu0 0.0
  %1141 = vmatpush1.msra.mxu0 0.0
  %1142 = vmatprep.subr.mxu0 0.0
  %1143 = vmatpush1.msra.mxu0 0.0
  %1144 = vmatprep.subr.mxu0 0.0
  %1145 = vmatpush1.msra.mxu0 0.0
  %1146 = vmatprep.subr.mxu0 0.0
  %1147 = vmatpush1.msra.mxu0 0.0
  %1148 = vmatprep.subr.mxu0 0.0
  %1149 = vmatpush1.msra.mxu0 0.0
  %1150 = vmatprep.subr.mxu0 0.0
  %1151 = vmatpush1.msra.mxu0 0.0
  %1152 = vmatprep.subr.mxu0 0.0
  %1153 = vmatpush1.msra.mxu0 0.0
  %1154 = vmatprep.subr.mxu0 0.0
  %1155 = vmatpush1.msra.mxu0 0.0
  %1156 = vmatprep.subr.mxu0 0.0
  %1157 = vmatpush1.msra.mxu0 0.0
  %1158 = vmatprep.subr.mxu0 0.0
  %1159 = vmatpush1.msra.mxu0 0.0
  %1160 = vmatprep.subr.mxu0 0.0
  %1161 = vmatpush1.msra.mxu0 0.0
  %1162 = vmatprep.subr.mxu0 0.0
  %1163 = vmatpush1.msra.mxu0 0.0
  %1164 = vmatprep.subr.mxu0 0.0
  %1165 = vmatpush1.msra.mxu0 0.0
  %1166 = vmatprep.subr.mxu0 0.0
  %1167 = vmatpush1.msra.mxu0 0.0
  %1168 = vmatprep.subr.mxu0 0.0
  %1169 = vmatpush1.msra.mxu0 0.0
  %1170 = vmatprep.subr.mxu0 0.0
  %1171 = vmatpush1.msra.mxu0 0.0
  %1172 = vmatprep.subr.mxu0 0.0
  %1173 = vmatpush1.msra.mxu0 0.0
  %1174 = vmatprep.subr.mxu0 0.0
  %1175 = vmatpush1.msra.mxu0 0.0
  %1176 = vmatprep.subr.mxu0 0.0
  %1177 = vmatpush1.msra.mxu0 0.0
  %1178 = vmatprep.subr.mxu0 0.0
  %1179 = vmatpush1.msra.mxu0 0.0
  %1180 = vmatprep.subr.mxu0 0.0
  %1181 = vmatpush1.msra.mxu0 0.0
  %1182 = vmatprep.subr.mxu0 0.0
  %1183 = vmatpush1.msra.mxu0 0.0
  %1184 = vmatprep.subr.mxu0 0.0
  %1185 = vmatpush1.msra.mxu0 0.0
  %1186 = vmatprep.subr.mxu0 0.0
  %1187 = vmatpush1.msra.mxu0 0.0
  %1188 = vmatprep.subr.mxu0 0.0
  %1189 = vmatpush1.msra.mxu0 0.0
  %1190 = vmatprep.subr.mxu0 0.0
  %1191 = vmatpush1.msra.mxu0 0.0
  %1192 = vmatprep.subr.mxu0 0.0
  %1193 = vmatpush1.msra.mxu0 0.0
  %1194 = vmatprep.subr.mxu0 0.0
  %1195 = vmatpush1.msra.mxu0 0.0
  %1196 = vmatprep.mubr.f32.mxu0 0.0
  %1197 = vmatmul.mubr.f32.gmra.mrb[0].mxu0 %v1042
  %v1198 = vpop.f32.mrb[0].mxu0
  %v1199 = vadd.f32 0.0, %v1198
  %v1200 = vpop.f32.mrb[0].mxu0
  %v1201 = vadd.f32 0.0, %v1200
  %1202 = vdwg.mxu0
  %1203 = vmatprep.subr.mxu0 %v1054
  %1204 = vmatpush1.msra.mxu0 %v1052
  %1205 = vmatprep.subr.mxu0 0.0
  %1206 = vmatpush1.msra.mxu0 0.0
  %1207 = vmatprep.subr.mxu0 0.0
  %1208 = vmatpush1.msra.mxu0 0.0
  %1209 = vmatprep.subr.mxu0 0.0
  %1210 = vmatpush1.msra.mxu0 0.0
  %1211 = vmatprep.subr.mxu0 0.0
  %1212 = vmatpush1.msra.mxu0 0.0
  %1213 = vmatprep.subr.mxu0 0.0
  %1214 = vmatpush1.msra.mxu0 0.0
  %1215 = vmatprep.subr.mxu0 0.0
  %1216 = vmatpush1.msra.mxu0 0.0
  %1217 = vmatprep.subr.mxu0 0.0
  %1218 = vmatpush1.msra.mxu0 0.0
  %1219 = vmatprep.subr.mxu0 0.0
  %1220 = vmatpush1.msra.mxu0 0.0
  %1221 = vmatprep.subr.mxu0 0.0
  %1222 = vmatpush1.msra.mxu0 0.0
  %1223 = vmatprep.subr.mxu0 0.0
  %1224 = vmatpush1.msra.mxu0 0.0
  %1225 = vmatprep.subr.mxu0 0.0
  %1226 = vmatpush1.msra.mxu0 0.0
  %1227 = vmatprep.subr.mxu0 0.0
  %1228 = vmatpush1.msra.mxu0 0.0
  %1229 = vmatprep.subr.mxu0 0.0
  %1230 = vmatpush1.msra.mxu0 0.0
  %1231 = vmatprep.subr.mxu0 0.0
  %1232 = vmatpush1.msra.mxu0 0.0
  %1233 = vmatprep.subr.mxu0 0.0
  %1234 = vmatpush1.msra.mxu0 0.0
  %1235 = vmatprep.subr.mxu0 0.0
  %1236 = vmatpush1.msra.mxu0 0.0
  %1237 = vmatprep.subr.mxu0 0.0
  %1238 = vmatpush1.msra.mxu0 0.0
  %1239 = vmatprep.subr.mxu0 0.0
  %1240 = vmatpush1.msra.mxu0 0.0
  %1241 = vmatprep.subr.mxu0 0.0
  %1242 = vmatpush1.msra.mxu0 0.0
  %1243 = vmatprep.subr.mxu0 0.0
  %1244 = vmatpush1.msra.mxu0 0.0
  %1245 = vmatprep.subr.mxu0 0.0
  %1246 = vmatpush1.msra.mxu0 0.0
  %1247 = vmatprep.subr.mxu0 0.0
  %1248 = vmatpush1.msra.mxu0 0.0
  %1249 = vmatprep.subr.mxu0 0.0
  %1250 = vmatpush1.msra.mxu0 0.0
  %1251 = vmatprep.subr.mxu0 0.0
  %1252 = vmatpush1.msra.mxu0 0.0
  %1253 = vmatprep.subr.mxu0 0.0
  %1254 = vmatpush1.msra.mxu0 0.0
  %1255 = vmatprep.subr.mxu0 0.0
  %1256 = vmatpush1.msra.mxu0 0.0
  %1257 = vmatprep.subr.mxu0 0.0
  %1258 = vmatpush1.msra.mxu0 0.0
  %1259 = vmatprep.subr.mxu0 0.0
  %1260 = vmatpush1.msra.mxu0 0.0
  %1261 = vmatprep.subr.mxu0 0.0
  %1262 = vmatpush1.msra.mxu0 0.0
  %1263 = vmatprep.subr.mxu0 0.0
  %1264 = vmatpush1.msra.mxu0 0.0
  %1265 = vmatprep.subr.mxu0 0.0
  %1266 = vmatpush1.msra.mxu0 0.0
  %1267 = vmatprep.mubr.f32.mxu0 0.0
  %1268 = vmatmul.mubr.f32.gmra.mrb[0].mxu0 %v1042
  %v1269 = vpop.f32.mrb[0].mxu0
  %v1270 = vadd.f32 0.0, %v1269
  %v1271 = vpop.f32.mrb[0].mxu0
  %v1272 = vadd.f32 0.0, %v1271
  %1273 = vdwg.mxu0
  %1274 = vmatprep.subr.mxu0 %v1059
  %1275 = vmatpush1.msra.mxu0 %v1056
  %1276 = vmatprep.subr.mxu0 0.0
  %1277 = vmatpush1.msra.mxu0 0.0
  %1278 = vmatprep.subr.mxu0 0.0
  %1279 = vmatpush1.msra.mxu0 0.0
  %1280 = vmatprep.subr.mxu0 0.0
  %1281 = vmatpush1.msra.mxu0 0.0
  %1282 = vmatprep.subr.mxu0 0.0
  %1283 = vmatpush1.msra.mxu0 0.0
  %1284 = vmatprep.subr.mxu0 0.0
  %1285 = vmatpush1.msra.mxu0 0.0
  %1286 = vmatprep.subr.mxu0 0.0
  %1287 = vmatpush1.msra.mxu0 0.0
  %1288 = vmatprep.subr.mxu0 0.0
  %1289 = vmatpush1.msra.mxu0 0.0
  %1290 = vmatprep.subr.mxu0 0.0
  %1291 = vmatpush1.msra.mxu0 0.0
  %1292 = vmatprep.subr.mxu0 0.0
  %1293 = vmatpush1.msra.mxu0 0.0
  %1294 = vmatprep.subr.mxu0 0.0
  %1295 = vmatpush1.msra.mxu0 0.0
  %1296 = vmatprep.subr.mxu0 0.0
  %1297 = vmatpush1.msra.mxu0 0.0
  %1298 = vmatprep.subr.mxu0 0.0
  %1299 = vmatpush1.msra.mxu0 0.0
  %1300 = vmatprep.subr.mxu0 0.0
  %1301 = vmatpush1.msra.mxu0 0.0
  %1302 = vmatprep.subr.mxu0 0.0
  %1303 = vmatpush1.msra.mxu0 0.0
  %1304 = vmatprep.subr.mxu0 0.0
  %1305 = vmatpush1.msra.mxu0 0.0
  %1306 = vmatprep.subr.mxu0 0.0
  %1307 = vmatpush1.msra.mxu0 0.0
  %1308 = vmatprep.subr.mxu0 0.0
  %1309 = vmatpush1.msra.mxu0 0.0
  %1310 = vmatprep.subr.mxu0 0.0
  %1311 = vmatpush1.msra.mxu0 0.0
  %1312 = vmatprep.subr.mxu0 0.0
  %1313 = vmatpush1.msra.mxu0 0.0
  %1314 = vmatprep.subr.mxu0 0.0
  %1315 = vmatpush1.msra.mxu0 0.0
  %1316 = vmatprep.subr.mxu0 0.0
  %1317 = vmatpush1.msra.mxu0 0.0
  %1318 = vmatprep.subr.mxu0 0.0
  %1319 = vmatpush1.msra.mxu0 0.0
  %1320 = vmatprep.subr.mxu0 0.0
  %1321 = vmatpush1.msra.mxu0 0.0
  %1322 = vmatprep.subr.mxu0 0.0
  %1323 = vmatpush1.msra.mxu0 0.0
  %1324 = vmatprep.subr.mxu0 0.0
  %1325 = vmatpush1.msra.mxu0 0.0
  %1326 = vmatprep.subr.mxu0 0.0
  %1327 = vmatpush1.msra.mxu0 0.0
  %1328 = vmatprep.subr.mxu0 0.0
  %1329 = vmatpush1.msra.mxu0 0.0
  %1330 = vmatprep.subr.mxu0 0.0
  %1331 = vmatpush1.msra.mxu0 0.0
  %1332 = vmatprep.subr.mxu0 0.0
  %1333 = vmatpush1.msra.mxu0 0.0
  %1334 = vmatprep.subr.mxu0 0.0
  %1335 = vmatpush1.msra.mxu0 0.0
  %1336 = vmatprep.subr.mxu0 0.0
  %1337 = vmatpush1.msra.mxu0 0.0
  %1338 = vmatprep.mubr.f32.mxu0 0.0
  %1339 = vmatmul.mubr.f32.gmra.mrb[0].mxu0 %v1042
  %v1340 = vpop.f32.mrb[0].mxu0
  %v1341 = vadd.f32 0.0, %v1340
  %v1342 = vpop.f32.mrb[0].mxu0
  %v1343 = vadd.f32 0.0, %v1342
  %1344 = vdwg.mxu0
  %v1345 = vadd.f32 %v1004, %v1128
  %v1346 = vadd.f32 %v1005, %v1130
  %v1347 = vadd.f32 %v1006, %v1199
  %v1348 = vadd.f32 %v1007, %v1201
  %v1349 = vadd.f32 %v1008, %v1270
  %v1350 = vadd.f32 %v1009, %v1272
  %v1351 = vadd.f32 %v1010, %v1341
  %v1352 = vadd.f32 %v1011, %v1343
  %s1353 = scalar_lea.vmem %s1, 16
  %v1354 = vld [vmem:[%s1353] sm:$0xf]
  %1355 = vrot.lane.b32.xlu0 %v20, 95
  %v1356 = vpop.permute.xlu0 %1355
  %1357 = vrot.lane.b32.xlu0 %v31, 95
  %v1358 = vpop.permute.xlu0 %1357
  %1359 = vrot.lane.b32.xlu0 %v21, 95
  %v1360 = vpop.permute.xlu0 %1359
  %1361 = vrot.lane.b32.xlu0 %v32, 95
  %v1362 = vpop.permute.xlu0 %1361
  %1363 = vrot.lane.b32.xlu0 %v22, 95
  %v1364 = vpop.permute.xlu0 %1363
  %1365 = vrot.lane.b32.xlu0 %v33, 95
  %v1366 = vpop.permute.xlu0 %1365
  %1367 = vrot.lane.b32.xlu0 %v23, 95
  %v1368 = vpop.permute.xlu0 %1367
  %1369 = vrot.lane.b32.xlu0 %v34, 95
  %v1370 = vpop.permute.xlu0 %1369
  %vm1371 = vcmask 777216
  %v1372 = vsel %vm1371, %v1356, %v1358
  %v1373 = vsel %vm1371, %v1358, %v1360
  %v1374 = vsel %vm1371, %v1360, %v1362
  %v1375 = vsel %vm1371, %v1362, %v1364
  %v1376 = vsel %vm1371, %v1364, %v1366
  %v1377 = vsel %vm1371, %v1366, %v1368
  %v1378 = vsel %vm1371, %v1368, %v1370
  %v1381 = vsel %vm1371, %v1370, %v1356
  %v1383 = vsel %vm62, %v1354, 0
  %v1385 = vsel %vm66, %v1372, 0
  %v1387 = vsel %vm66, %v1373, 0
  %v1389 = vsel %vm66, %v1374, 0
  %v1391 = vsel %vm66, %v1375, 0
  %v1393 = vsel %vm66, %v1376, 0
  %v1395 = vsel %vm66, %v1377, 0
  %v1397 = vsel %vm66, %v1378, 0
  %v1400 = vsel %vm66, %v1381, 0
  %1402 = vmatprep.subr.mxu0 %v1387
  %1403 = vmatpush1.msra.mxu0 %v1385
  %1404 = vmatprep.subr.mxu0 0.0
  %1405 = vmatpush1.msra.mxu0 0.0
  %1406 = vmatprep.subr.mxu0 0.0
  %1407 = vmatpush1.msra.mxu0 0.0
  %1408 = vmatprep.subr.mxu0 0.0
  %1409 = vmatpush1.msra.mxu0 0.0
  %1410 = vmatprep.subr.mxu0 0.0
  %1411 = vmatpush1.msra.mxu0 0.0
  %1412 = vmatprep.subr.mxu0 0.0
  %1413 = vmatpush1.msra.mxu0 0.0
  %1414 = vmatprep.subr.mxu0 0.0
  %1415 = vmatpush1.msra.mxu0 0.0
  %1416 = vmatprep.subr.mxu0 0.0
  %1417 = vmatpush1.msra.mxu0 0.0
  %1418 = vmatprep.subr.mxu0 0.0
  %1419 = vmatpush1.msra.mxu0 0.0
  %1420 = vmatprep.subr.mxu0 0.0
  %1421 = vmatpush1.msra.mxu0 0.0
  %1422 = vmatprep.subr.mxu0 0.0
  %1423 = vmatpush1.msra.mxu0 0.0
  %1424 = vmatprep.subr.mxu0 0.0
  %1425 = vmatpush1.msra.mxu0 0.0
  %1426 = vmatprep.subr.mxu0 0.0
  %1427 = vmatpush1.msra.mxu0 0.0
  %1428 = vmatprep.subr.mxu0 0.0
  %1429 = vmatpush1.msra.mxu0 0.0
  %1430 = vmatprep.subr.mxu0 0.0
  %1431 = vmatpush1.msra.mxu0 0.0
  %1432 = vmatprep.subr.mxu0 0.0
  %1433 = vmatpush1.msra.mxu0 0.0
  %1434 = vmatprep.subr.mxu0 0.0
  %1435 = vmatpush1.msra.mxu0 0.0
  %1436 = vmatprep.subr.mxu0 0.0
  %1437 = vmatpush1.msra.mxu0 0.0
  %1438 = vmatprep.subr.mxu0 0.0
  %1439 = vmatpush1.msra.mxu0 0.0
  %1440 = vmatprep.subr.mxu0 0.0
  %1441 = vmatpush1.msra.mxu0 0.0
  %1442 = vmatprep.subr.mxu0 0.0
  %1443 = vmatpush1.msra.mxu0 0.0
  %1444 = vmatprep.subr.mxu0 0.0
  %1445 = vmatpush1.msra.mxu0 0.0
  %1446 = vmatprep.subr.mxu0 0.0
  %1447 = vmatpush1.msra.mxu0 0.0
  %1448 = vmatprep.subr.mxu0 0.0
  %1449 = vmatpush1.msra.mxu0 0.0
  %1450 = vmatprep.subr.mxu0 0.0
  %1451 = vmatpush1.msra.mxu0 0.0
  %1452 = vmatprep.subr.mxu0 0.0
  %1453 = vmatpush1.msra.mxu0 0.0
  %1454 = vmatprep.subr.mxu0 0.0
  %1455 = vmatpush1.msra.mxu0 0.0
  %1456 = vmatprep.subr.mxu0 0.0
  %1457 = vmatpush1.msra.mxu0 0.0
  %1458 = vmatprep.subr.mxu0 0.0
  %1459 = vmatpush1.msra.mxu0 0.0
  %1460 = vmatprep.subr.mxu0 0.0
  %1461 = vmatpush1.msra.mxu0 0.0
  %1462 = vmatprep.subr.mxu0 0.0
  %1463 = vmatpush1.msra.mxu0 0.0
  %1464 = vmatprep.subr.mxu0 0.0
  %1465 = vmatpush1.msra.mxu0 0.0
  %1466 = vmatprep.mubr.f32.mxu0 0.0
  %1467 = vmatmul.mubr.f32.gmra.mrb[0].mxu0 %v1383
  %v1468 = vpop.f32.mrb[0].mxu0
  %v1469 = vadd.f32 0.0, %v1468
  %v1470 = vpop.f32.mrb[0].mxu0
  %v1471 = vadd.f32 0.0, %v1470
  %1472 = vdwg.mxu0
  %1473 = vmatprep.subr.mxu0 %v1391
  %1474 = vmatpush1.msra.mxu0 %v1389
  %1475 = vmatprep.subr.mxu0 0.0
  %1476 = vmatpush1.msra.mxu0 0.0
  %1477 = vmatprep.subr.mxu0 0.0
  %1478 = vmatpush1.msra.mxu0 0.0
  %1479 = vmatprep.subr.mxu0 0.0
  %1480 = vmatpush1.msra.mxu0 0.0
  %1481 = vmatprep.subr.mxu0 0.0
  %1482 = vmatpush1.msra.mxu0 0.0
  %1483 = vmatprep.subr.mxu0 0.0
  %1484 = vmatpush1.msra.mxu0 0.0
  %1485 = vmatprep.subr.mxu0 0.0
  %1486 = vmatpush1.msra.mxu0 0.0
  %1487 = vmatprep.subr.mxu0 0.0
  %1488 = vmatpush1.msra.mxu0 0.0
  %1489 = vmatprep.subr.mxu0 0.0
  %1490 = vmatpush1.msra.mxu0 0.0
  %1491 = vmatprep.subr.mxu0 0.0
  %1492 = vmatpush1.msra.mxu0 0.0
  %1493 = vmatprep.subr.mxu0 0.0
  %1494 = vmatpush1.msra.mxu0 0.0
  %1495 = vmatprep.subr.mxu0 0.0
  %1496 = vmatpush1.msra.mxu0 0.0
  %1497 = vmatprep.subr.mxu0 0.0
  %1498 = vmatpush1.msra.mxu0 0.0
  %1499 = vmatprep.subr.mxu0 0.0
  %1500 = vmatpush1.msra.mxu0 0.0
  %1501 = vmatprep.subr.mxu0 0.0
  %1502 = vmatpush1.msra.mxu0 0.0
  %1503 = vmatprep.subr.mxu0 0.0
  %1504 = vmatpush1.msra.mxu0 0.0
  %1505 = vmatprep.subr.mxu0 0.0
  %1506 = vmatpush1.msra.mxu0 0.0
  %1507 = vmatprep.subr.mxu0 0.0
  %1508 = vmatpush1.msra.mxu0 0.0
  %1509 = vmatprep.subr.mxu0 0.0
  %1510 = vmatpush1.msra.mxu0 0.0
  %1511 = vmatprep.subr.mxu0 0.0
  %1512 = vmatpush1.msra.mxu0 0.0
  %1513 = vmatprep.subr.mxu0 0.0
  %1514 = vmatpush1.msra.mxu0 0.0
  %1515 = vmatprep.subr.mxu0 0.0
  %1516 = vmatpush1.msra.mxu0 0.0
  %1517 = vmatprep.subr.mxu0 0.0
  %1518 = vmatpush1.msra.mxu0 0.0
  %1519 = vmatprep.subr.mxu0 0.0
  %1520 = vmatpush1.msra.mxu0 0.0
  %1521 = vmatprep.subr.mxu0 0.0
  %1522 = vmatpush1.msra.mxu0 0.0
  %1523 = vmatprep.subr.mxu0 0.0
  %1524 = vmatpush1.msra.mxu0 0.0
  %1525 = vmatprep.subr.mxu0 0.0
  %1526 = vmatpush1.msra.mxu0 0.0
  %1527 = vmatprep.subr.mxu0 0.0
  %1528 = vmatpush1.msra.mxu0 0.0
  %1529 = vmatprep.subr.mxu0 0.0
  %1530 = vmatpush1.msra.mxu0 0.0
  %1531 = vmatprep.subr.mxu0 0.0
  %1532 = vmatpush1.msra.mxu0 0.0
  %1533 = vmatprep.subr.mxu0 0.0
  %1534 = vmatpush1.msra.mxu0 0.0
  %1535 = vmatprep.subr.mxu0 0.0
  %1536 = vmatpush1.msra.mxu0 0.0
  %1537 = vmatprep.mubr.f32.mxu0 0.0
  %1538 = vmatmul.mubr.f32.gmra.mrb[0].mxu0 %v1383
  %v1539 = vpop.f32.mrb[0].mxu0
  %v1540 = vadd.f32 0.0, %v1539
  %v1541 = vpop.f32.mrb[0].mxu0
  %v1542 = vadd.f32 0.0, %v1541
  %1543 = vdwg.mxu0
  %1544 = vmatprep.subr.mxu0 %v1395
  %1545 = vmatpush1.msra.mxu0 %v1393
  %1546 = vmatprep.subr.mxu0 0.0
  %1547 = vmatpush1.msra.mxu0 0.0
  %1548 = vmatprep.subr.mxu0 0.0
  %1549 = vmatpush1.msra.mxu0 0.0
  %1550 = vmatprep.subr.mxu0 0.0
  %1551 = vmatpush1.msra.mxu0 0.0
  %1552 = vmatprep.subr.mxu0 0.0
  %1553 = vmatpush1.msra.mxu0 0.0
  %1554 = vmatprep.subr.mxu0 0.0
  %1555 = vmatpush1.msra.mxu0 0.0
  %1556 = vmatprep.subr.mxu0 0.0
  %1557 = vmatpush1.msra.mxu0 0.0
  %1558 = vmatprep.subr.mxu0 0.0
  %1559 = vmatpush1.msra.mxu0 0.0
  %1560 = vmatprep.subr.mxu0 0.0
  %1561 = vmatpush1.msra.mxu0 0.0
  %1562 = vmatprep.subr.mxu0 0.0
  %1563 = vmatpush1.msra.mxu0 0.0
  %1564 = vmatprep.subr.mxu0 0.0
  %1565 = vmatpush1.msra.mxu0 0.0
  %1566 = vmatprep.subr.mxu0 0.0
  %1567 = vmatpush1.msra.mxu0 0.0
  %1568 = vmatprep.subr.mxu0 0.0
  %1569 = vmatpush1.msra.mxu0 0.0
  %1570 = vmatprep.subr.mxu0 0.0
  %1571 = vmatpush1.msra.mxu0 0.0
  %1572 = vmatprep.subr.mxu0 0.0
  %1573 = vmatpush1.msra.mxu0 0.0
  %1574 = vmatprep.subr.mxu0 0.0
  %1575 = vmatpush1.msra.mxu0 0.0
  %1576 = vmatprep.subr.mxu0 0.0
  %1577 = vmatpush1.msra.mxu0 0.0
  %1578 = vmatprep.subr.mxu0 0.0
  %1579 = vmatpush1.msra.mxu0 0.0
  %1580 = vmatprep.subr.mxu0 0.0
  %1581 = vmatpush1.msra.mxu0 0.0
  %1582 = vmatprep.subr.mxu0 0.0
  %1583 = vmatpush1.msra.mxu0 0.0
  %1584 = vmatprep.subr.mxu0 0.0
  %1585 = vmatpush1.msra.mxu0 0.0
  %1586 = vmatprep.subr.mxu0 0.0
  %1587 = vmatpush1.msra.mxu0 0.0
  %1588 = vmatprep.subr.mxu0 0.0
  %1589 = vmatpush1.msra.mxu0 0.0
  %1590 = vmatprep.subr.mxu0 0.0
  %1591 = vmatpush1.msra.mxu0 0.0
  %1592 = vmatprep.subr.mxu0 0.0
  %1593 = vmatpush1.msra.mxu0 0.0
  %1594 = vmatprep.subr.mxu0 0.0
  %1595 = vmatpush1.msra.mxu0 0.0
  %1596 = vmatprep.subr.mxu0 0.0
  %1597 = vmatpush1.msra.mxu0 0.0
  %1598 = vmatprep.subr.mxu0 0.0
  %1599 = vmatpush1.msra.mxu0 0.0
  %1600 = vmatprep.subr.mxu0 0.0
  %1601 = vmatpush1.msra.mxu0 0.0
  %1602 = vmatprep.subr.mxu0 0.0
  %1603 = vmatpush1.msra.mxu0 0.0
  %1604 = vmatprep.subr.mxu0 0.0
  %1605 = vmatpush1.msra.mxu0 0.0
  %1606 = vmatprep.subr.mxu0 0.0
  %1607 = vmatpush1.msra.mxu0 0.0
  %1608 = vmatprep.mubr.f32.mxu0 0.0
  %1609 = vmatmul.mubr.f32.gmra.mrb[0].mxu0 %v1383
  %v1610 = vpop.f32.mrb[0].mxu0
  %v1611 = vadd.f32 0.0, %v1610
  %v1612 = vpop.f32.mrb[0].mxu0
  %v1613 = vadd.f32 0.0, %v1612
  %1614 = vdwg.mxu0
  %1615 = vmatprep.subr.mxu0 %v1400
  %1616 = vmatpush1.msra.mxu0 %v1397
  %1617 = vmatprep.subr.mxu0 0.0
  %1618 = vmatpush1.msra.mxu0 0.0
  %1619 = vmatprep.subr.mxu0 0.0
  %1620 = vmatpush1.msra.mxu0 0.0
  %1621 = vmatprep.subr.mxu0 0.0
  %1622 = vmatpush1.msra.mxu0 0.0
  %1623 = vmatprep.subr.mxu0 0.0
  %1624 = vmatpush1.msra.mxu0 0.0
  %1625 = vmatprep.subr.mxu0 0.0
  %1626 = vmatpush1.msra.mxu0 0.0
  %1627 = vmatprep.subr.mxu0 0.0
  %1628 = vmatpush1.msra.mxu0 0.0
  %1629 = vmatprep.subr.mxu0 0.0
  %1630 = vmatpush1.msra.mxu0 0.0
  %1631 = vmatprep.subr.mxu0 0.0
  %1632 = vmatpush1.msra.mxu0 0.0
  %1633 = vmatprep.subr.mxu0 0.0
  %1634 = vmatpush1.msra.mxu0 0.0
  %1635 = vmatprep.subr.mxu0 0.0
  %1636 = vmatpush1.msra.mxu0 0.0
  %1637 = vmatprep.subr.mxu0 0.0
  %1638 = vmatpush1.msra.mxu0 0.0
  %1639 = vmatprep.subr.mxu0 0.0
  %1640 = vmatpush1.msra.mxu0 0.0
  %1641 = vmatprep.subr.mxu0 0.0
  %1642 = vmatpush1.msra.mxu0 0.0
  %1643 = vmatprep.subr.mxu0 0.0
  %1644 = vmatpush1.msra.mxu0 0.0
  %1645 = vmatprep.subr.mxu0 0.0
  %1646 = vmatpush1.msra.mxu0 0.0
  %1647 = vmatprep.subr.mxu0 0.0
  %1648 = vmatpush1.msra.mxu0 0.0
  %1649 = vmatprep.subr.mxu0 0.0
  %1650 = vmatpush1.msra.mxu0 0.0
  %1651 = vmatprep.subr.mxu0 0.0
  %1652 = vmatpush1.msra.mxu0 0.0
  %1653 = vmatprep.subr.mxu0 0.0
  %1654 = vmatpush1.msra.mxu0 0.0
  %1655 = vmatprep.subr.mxu0 0.0
  %1656 = vmatpush1.msra.mxu0 0.0
  %1657 = vmatprep.subr.mxu0 0.0
  %1658 = vmatpush1.msra.mxu0 0.0
  %1659 = vmatprep.subr.mxu0 0.0
  %1660 = vmatpush1.msra.mxu0 0.0
  %1661 = vmatprep.subr.mxu0 0.0
  %1662 = vmatpush1.msra.mxu0 0.0
  %1663 = vmatprep.subr.mxu0 0.0
  %1664 = vmatpush1.msra.mxu0 0.0
  %1665 = vmatprep.subr.mxu0 0.0
  %1666 = vmatpush1.msra.mxu0 0.0
  %1667 = vmatprep.subr.mxu0 0.0
  %1668 = vmatpush1.msra.mxu0 0.0
  %1669 = vmatprep.subr.mxu0 0.0
  %1670 = vmatpush1.msra.mxu0 0.0
  %1671 = vmatprep.subr.mxu0 0.0
  %1672 = vmatpush1.msra.mxu0 0.0
  %1673 = vmatprep.subr.mxu0 0.0
  %1674 = vmatpush1.msra.mxu0 0.0
  %1675 = vmatprep.subr.mxu0 0.0
  %1676 = vmatpush1.msra.mxu0 0.0
  %1677 = vmatprep.subr.mxu0 0.0
  %1678 = vmatpush1.msra.mxu0 0.0
  %1679 = vmatprep.mubr.f32.mxu0 0.0
  %1680 = vmatmul.mubr.f32.gmra.mrb[0].mxu0 %v1383
  %v1681 = vpop.f32.mrb[0].mxu0
  %v1682 = vadd.f32 0.0, %v1681
  %v1683 = vpop.f32.mrb[0].mxu0
  %v1684 = vadd.f32 0.0, %v1683
  %1685 = vdwg.mxu0
  %v1686 = vadd.f32 %v1345, %v1469
  %v1687 = vadd.f32 %v1346, %v1471
  %v1688 = vadd.f32 %v1347, %v1540
  %v1689 = vadd.f32 %v1348, %v1542
  %v1690 = vadd.f32 %v1349, %v1611
  %v1691 = vadd.f32 %v1350, %v1613
  %v1692 = vadd.f32 %v1351, %v1682
  %v1693 = vadd.f32 %v1352, %v1684
  %s1694 = scalar_lea.vmem %s1, 20
  %v1695 = vld [vmem:[%s1694] sm:$0xf]
  %1696 = vrot.lane.b32.xlu0 %v20, 94
  %v1697 = vpop.permute.xlu0 %1696
  %1698 = vrot.lane.b32.xlu0 %v31, 94
  %v1699 = vpop.permute.xlu0 %1698
  %1700 = vrot.lane.b32.xlu0 %v21, 94
  %v1701 = vpop.permute.xlu0 %1700
  %1702 = vrot.lane.b32.xlu0 %v32, 94
  %v1703 = vpop.permute.xlu0 %1702
  %1704 = vrot.lane.b32.xlu0 %v22, 94
  %v1705 = vpop.permute.xlu0 %1704
  %1706 = vrot.lane.b32.xlu0 %v33, 94
  %v1707 = vpop.permute.xlu0 %1706
  %1708 = vrot.lane.b32.xlu0 %v23, 94
  %v1709 = vpop.permute.xlu0 %1708
  %1710 = vrot.lane.b32.xlu0 %v34, 94
  %v1711 = vpop.permute.xlu0 %1710
  %vm1712 = vcmask 769024
  %v1713 = vsel %vm1712, %v1697, %v1699
  %v1714 = vsel %vm1712, %v1699, %v1701
  %v1715 = vsel %vm1712, %v1701, %v1703
  %v1716 = vsel %vm1712, %v1703, %v1705
  %v1717 = vsel %vm1712, %v1705, %v1707
  %v1718 = vsel %vm1712, %v1707, %v1709
  %v1719 = vsel %vm1712, %v1709, %v1711
  %v1722 = vsel %vm1712, %v1711, %v1697
  %v1724 = vsel %vm62, %v1695, 0
  %v1726 = vsel %vm66, %v1713, 0
  %v1728 = vsel %vm66, %v1714, 0
  %v1730 = vsel %vm66, %v1715, 0
  %v1732 = vsel %vm66, %v1716, 0
  %v1734 = vsel %vm66, %v1717, 0
  %v1736 = vsel %vm66, %v1718, 0
  %v1738 = vsel %vm66, %v1719, 0
  %v1741 = vsel %vm66, %v1722, 0
  %1743 = vmatprep.subr.mxu0 %v1728
  %1744 = vmatpush1.msra.mxu0 %v1726
  %1745 = vmatprep.subr.mxu0 0.0
  %1746 = vmatpush1.msra.mxu0 0.0
  %1747 = vmatprep.subr.mxu0 0.0
  %1748 = vmatpush1.msra.mxu0 0.0
  %1749 = vmatprep.subr.mxu0 0.0
  %1750 = vmatpush1.msra.mxu0 0.0
  %1751 = vmatprep.subr.mxu0 0.0
  %1752 = vmatpush1.msra.mxu0 0.0
  %1753 = vmatprep.subr.mxu0 0.0
  %1754 = vmatpush1.msra.mxu0 0.0
  %1755 = vmatprep.subr.mxu0 0.0
  %1756 = vmatpush1.msra.mxu0 0.0
  %1757 = vmatprep.subr.mxu0 0.0
  %1758 = vmatpush1.msra.mxu0 0.0
  %1759 = vmatprep.subr.mxu0 0.0
  %1760 = vmatpush1.msra.mxu0 0.0
  %1761 = vmatprep.subr.mxu0 0.0
  %1762 = vmatpush1.msra.mxu0 0.0
  %1763 = vmatprep.subr.mxu0 0.0
  %1764 = vmatpush1.msra.mxu0 0.0
  %1765 = vmatprep.subr.mxu0 0.0
  %1766 = vmatpush1.msra.mxu0 0.0
  %1767 = vmatprep.subr.mxu0 0.0
  %1768 = vmatpush1.msra.mxu0 0.0
  %1769 = vmatprep.subr.mxu0 0.0
  %1770 = vmatpush1.msra.mxu0 0.0
  %1771 = vmatprep.subr.mxu0 0.0
  %1772 = vmatpush1.msra.mxu0 0.0
  %1773 = vmatprep.subr.mxu0 0.0
  %1774 = vmatpush1.msra.mxu0 0.0
  %1775 = vmatprep.subr.mxu0 0.0
  %1776 = vmatpush1.msra.mxu0 0.0
  %1777 = vmatprep.subr.mxu0 0.0
  %1778 = vmatpush1.msra.mxu0 0.0
  %1779 = vmatprep.subr.mxu0 0.0
  %1780 = vmatpush1.msra.mxu0 0.0
  %1781 = vmatprep.subr.mxu0 0.0
  %1782 = vmatpush1.msra.mxu0 0.0
  %1783 = vmatprep.subr.mxu0 0.0
  %1784 = vmatpush1.msra.mxu0 0.0
  %1785 = vmatprep.subr.mxu0 0.0
  %1786 = vmatpush1.msra.mxu0 0.0
  %1787 = vmatprep.subr.mxu0 0.0
  %1788 = vmatpush1.msra.mxu0 0.0
  %1789 = vmatprep.subr.mxu0 0.0
  %1790 = vmatpush1.msra.mxu0 0.0
  %1791 = vmatprep.subr.mxu0 0.0
  %1792 = vmatpush1.msra.mxu0 0.0
  %1793 = vmatprep.subr.mxu0 0.0
  %1794 = vmatpush1.msra.mxu0 0.0
  %1795 = vmatprep.subr.mxu0 0.0
  %1796 = vmatpush1.msra.mxu0 0.0
  %1797 = vmatprep.subr.mxu0 0.0
  %1798 = vmatpush1.msra.mxu0 0.0
  %1799 = vmatprep.subr.mxu0 0.0
  %1800 = vmatpush1.msra.mxu0 0.0
  %1801 = vmatprep.subr.mxu0 0.0
  %1802 = vmatpush1.msra.mxu0 0.0
  %1803 = vmatprep.subr.mxu0 0.0
  %1804 = vmatpush1.msra.mxu0 0.0
  %1805 = vmatprep.subr.mxu0 0.0
  %1806 = vmatpush1.msra.mxu0 0.0
  %1807 = vmatprep.mubr.f32.mxu0 0.0
  %1808 = vmatmul.mubr.f32.gmra.mrb[0].mxu0 %v1724
  %v1809 = vpop.f32.mrb[0].mxu0
  %v1810 = vadd.f32 0.0, %v1809
  %v1811 = vpop.f32.mrb[0].mxu0
  %v1812 = vadd.f32 0.0, %v1811
  %1813 = vdwg.mxu0
  %1814 = vmatprep.subr.mxu0 %v1732
  %1815 = vmatpush1.msra.mxu0 %v1730
  %1816 = vmatprep.subr.mxu0 0.0
  %1817 = vmatpush1.msra.mxu0 0.0
  %1818 = vmatprep.subr.mxu0 0.0
  %1819 = vmatpush1.msra.mxu0 0.0
  %1820 = vmatprep.subr.mxu0 0.0
  %1821 = vmatpush1.msra.mxu0 0.0
  %1822 = vmatprep.subr.mxu0 0.0
  %1823 = vmatpush1.msra.mxu0 0.0
  %1824 = vmatprep.subr.mxu0 0.0
  %1825 = vmatpush1.msra.mxu0 0.0
  %1826 = vmatprep.subr.mxu0 0.0
  %1827 = vmatpush1.msra.mxu0 0.0
  %1828 = vmatprep.subr.mxu0 0.0
  %1829 = vmatpush1.msra.mxu0 0.0
  %1830 = vmatprep.subr.mxu0 0.0
  %1831 = vmatpush1.msra.mxu0 0.0
  %1832 = vmatprep.subr.mxu0 0.0
  %1833 = vmatpush1.msra.mxu0 0.0
  %1834 = vmatprep.subr.mxu0 0.0
  %1835 = vmatpush1.msra.mxu0 0.0
  %1836 = vmatprep.subr.mxu0 0.0
  %1837 = vmatpush1.msra.mxu0 0.0
  %1838 = vmatprep.subr.mxu0 0.0
  %1839 = vmatpush1.msra.mxu0 0.0
  %1840 = vmatprep.subr.mxu0 0.0
  %1841 = vmatpush1.msra.mxu0 0.0
  %1842 = vmatprep.subr.mxu0 0.0
  %1843 = vmatpush1.msra.mxu0 0.0
  %1844 = vmatprep.subr.mxu0 0.0
  %1845 = vmatpush1.msra.mxu0 0.0
  %1846 = vmatprep.subr.mxu0 0.0
  %1847 = vmatpush1.msra.mxu0 0.0
  %1848 = vmatprep.subr.mxu0 0.0
  %1849 = vmatpush1.msra.mxu0 0.0
  %1850 = vmatprep.subr.mxu0 0.0
  %1851 = vmatpush1.msra.mxu0 0.0
  %1852 = vmatprep.subr.mxu0 0.0
  %1853 = vmatpush1.msra.mxu0 0.0
  %1854 = vmatprep.subr.mxu0 0.0
  %1855 = vmatpush1.msra.mxu0 0.0
  %1856 = vmatprep.subr.mxu0 0.0
  %1857 = vmatpush1.msra.mxu0 0.0
  %1858 = vmatprep.subr.mxu0 0.0
  %1859 = vmatpush1.msra.mxu0 0.0
  %1860 = vmatprep.subr.mxu0 0.0
  %1861 = vmatpush1.msra.mxu0 0.0
  %1862 = vmatprep.subr.mxu0 0.0
  %1863 = vmatpush1.msra.mxu0 0.0
  %1864 = vmatprep.subr.mxu0 0.0
  %1865 = vmatpush1.msra.mxu0 0.0
  %1866 = vmatprep.subr.mxu0 0.0
  %1867 = vmatpush1.msra.mxu0 0.0
  %1868 = vmatprep.subr.mxu0 0.0
  %1869 = vmatpush1.msra.mxu0 0.0
  %1870 = vmatprep.subr.mxu0 0.0
  %1871 = vmatpush1.msra.mxu0 0.0
  %1872 = vmatprep.subr.mxu0 0.0
  %1873 = vmatpush1.msra.mxu0 0.0
  %1874 = vmatprep.subr.mxu0 0.0
  %1875 = vmatpush1.msra.mxu0 0.0
  %1876 = vmatprep.subr.mxu0 0.0
  %1877 = vmatpush1.msra.mxu0 0.0
  %1878 = vmatprep.mubr.f32.mxu0 0.0
  %1879 = vmatmul.mubr.f32.gmra.mrb[0].mxu0 %v1724
  %v1880 = vpop.f32.mrb[0].mxu0
  %v1881 = vadd.f32 0.0, %v1880
  %v1882 = vpop.f32.mrb[0].mxu0
  %v1883 = vadd.f32 0.0, %v1882
  %1884 = vdwg.mxu0
  %1885 = vmatprep.subr.mxu0 %v1736
  %1886 = vmatpush1.msra.mxu0 %v1734
  %1887 = vmatprep.subr.mxu0 0.0
  %1888 = vmatpush1.msra.mxu0 0.0
  %1889 = vmatprep.subr.mxu0 0.0
  %1890 = vmatpush1.msra.mxu0 0.0
  %1891 = vmatprep.subr.mxu0 0.0
  %1892 = vmatpush1.msra.mxu0 0.0
  %1893 = vmatprep.subr.mxu0 0.0
  %1894 = vmatpush1.msra.mxu0 0.0
  %1895 = vmatprep.subr.mxu0 0.0
  %1896 = vmatpush1.msra.mxu0 0.0
  %1897 = vmatprep.subr.mxu0 0.0
  %1898 = vmatpush1.msra.mxu0 0.0
  %1899 = vmatprep.subr.mxu0 0.0
  %1900 = vmatpush1.msra.mxu0 0.0
  %1901 = vmatprep.subr.mxu0 0.0
  %1902 = vmatpush1.msra.mxu0 0.0
  %1903 = vmatprep.subr.mxu0 0.0
  %1904 = vmatpush1.msra.mxu0 0.0
  %1905 = vmatprep.subr.mxu0 0.0
  %1906 = vmatpush1.msra.mxu0 0.0
  %1907 = vmatprep.subr.mxu0 0.0
  %1908 = vmatpush1.msra.mxu0 0.0
  %1909 = vmatprep.subr.mxu0 0.0
  %1910 = vmatpush1.msra.mxu0 0.0
  %1911 = vmatprep.subr.mxu0 0.0
  %1912 = vmatpush1.msra.mxu0 0.0
  %1913 = vmatprep.subr.mxu0 0.0
  %1914 = vmatpush1.msra.mxu0 0.0
  %1915 = vmatprep.subr.mxu0 0.0
  %1916 = vmatpush1.msra.mxu0 0.0
  %1917 = vmatprep.subr.mxu0 0.0
  %1918 = vmatpush1.msra.mxu0 0.0
  %1919 = vmatprep.subr.mxu0 0.0
  %1920 = vmatpush1.msra.mxu0 0.0
  %1921 = vmatprep.subr.mxu0 0.0
  %1922 = vmatpush1.msra.mxu0 0.0
  %1923 = vmatprep.subr.mxu0 0.0
  %1924 = vmatpush1.msra.mxu0 0.0
  %1925 = vmatprep.subr.mxu0 0.0
  %1926 = vmatpush1.msra.mxu0 0.0
  %1927 = vmatprep.subr.mxu0 0.0
  %1928 = vmatpush1.msra.mxu0 0.0
  %1929 = vmatprep.subr.mxu0 0.0
  %1930 = vmatpush1.msra.mxu0 0.0
  %1931 = vmatprep.subr.mxu0 0.0
  %1932 = vmatpush1.msra.mxu0 0.0
  %1933 = vmatprep.subr.mxu0 0.0
  %1934 = vmatpush1.msra.mxu0 0.0
  %1935 = vmatprep.subr.mxu0 0.0
  %1936 = vmatpush1.msra.mxu0 0.0
  %1937 = vmatprep.subr.mxu0 0.0
  %1938 = vmatpush1.msra.mxu0 0.0
  %1939 = vmatprep.subr.mxu0 0.0
  %1940 = vmatpush1.msra.mxu0 0.0
  %1941 = vmatprep.subr.mxu0 0.0
  %1942 = vmatpush1.msra.mxu0 0.0
  %1943 = vmatprep.subr.mxu0 0.0
  %1944 = vmatpush1.msra.mxu0 0.0
  %1945 = vmatprep.subr.mxu0 0.0
  %1946 = vmatpush1.msra.mxu0 0.0
  %1947 = vmatprep.subr.mxu0 0.0
  %1948 = vmatpush1.msra.mxu0 0.0
  %1949 = vmatprep.mubr.f32.mxu0 0.0
  %1950 = vmatmul.mubr.f32.gmra.mrb[0].mxu0 %v1724
  %v1951 = vpop.f32.mrb[0].mxu0
  %v1952 = vadd.f32 0.0, %v1951
  %v1953 = vpop.f32.mrb[0].mxu0
  %v1954 = vadd.f32 0.0, %v1953
  %1955 = vdwg.mxu0
  %1956 = vmatprep.subr.mxu0 %v1741
  %1957 = vmatpush1.msra.mxu0 %v1738
  %1958 = vmatprep.subr.mxu0 0.0
  %1959 = vmatpush1.msra.mxu0 0.0
  %1960 = vmatprep.subr.mxu0 0.0
  %1961 = vmatpush1.msra.mxu0 0.0
  %1962 = vmatprep.subr.mxu0 0.0
  %1963 = vmatpush1.msra.mxu0 0.0
  %1964 = vmatprep.subr.mxu0 0.0
  %1965 = vmatpush1.msra.mxu0 0.0
  %1966 = vmatprep.subr.mxu0 0.0
  %1967 = vmatpush1.msra.mxu0 0.0
  %1968 = vmatprep.subr.mxu0 0.0
  %1969 = vmatpush1.msra.mxu0 0.0
  %1970 = vmatprep.subr.mxu0 0.0
  %1971 = vmatpush1.msra.mxu0 0.0
  %1972 = vmatprep.subr.mxu0 0.0
  %1973 = vmatpush1.msra.mxu0 0.0
  %1974 = vmatprep.subr.mxu0 0.0
  %1975 = vmatpush1.msra.mxu0 0.0
  %1976 = vmatprep.subr.mxu0 0.0
  %1977 = vmatpush1.msra.mxu0 0.0
  %1978 = vmatprep.subr.mxu0 0.0
  %1979 = vmatpush1.msra.mxu0 0.0
  %1980 = vmatprep.subr.mxu0 0.0
  %1981 = vmatpush1.msra.mxu0 0.0
  %1982 = vmatprep.subr.mxu0 0.0
  %1983 = vmatpush1.msra.mxu0 0.0
  %1984 = vmatprep.subr.mxu0 0.0
  %1985 = vmatpush1.msra.mxu0 0.0
  %1986 = vmatprep.subr.mxu0 0.0
  %1987 = vmatpush1.msra.mxu0 0.0
  %1988 = vmatprep.subr.mxu0 0.0
  %1989 = vmatpush1.msra.mxu0 0.0
  %1990 = vmatprep.subr.mxu0 0.0
  %1991 = vmatpush1.msra.mxu0 0.0
  %1992 = vmatprep.subr.mxu0 0.0
  %1993 = vmatpush1.msra.mxu0 0.0
  %1994 = vmatprep.subr.mxu0 0.0
  %1995 = vmatpush1.msra.mxu0 0.0
  %1996 = vmatprep.subr.mxu0 0.0
  %1997 = vmatpush1.msra.mxu0 0.0
  %1998 = vmatprep.subr.mxu0 0.0
  %1999 = vmatpush1.msra.mxu0 0.0
  %2000 = vmatprep.subr.mxu0 0.0
  %2001 = vmatpush1.msra.mxu0 0.0
  %2002 = vmatprep.subr.mxu0 0.0
  %2003 = vmatpush1.msra.mxu0 0.0
  %2004 = vmatprep.subr.mxu0 0.0
  %2005 = vmatpush1.msra.mxu0 0.0
  %2006 = vmatprep.subr.mxu0 0.0
  %2007 = vmatpush1.msra.mxu0 0.0
  %2008 = vmatprep.subr.mxu0 0.0
  %2009 = vmatpush1.msra.mxu0 0.0
  %2010 = vmatprep.subr.mxu0 0.0
  %2011 = vmatpush1.msra.mxu0 0.0
  %2012 = vmatprep.subr.mxu0 0.0
  %2013 = vmatpush1.msra.mxu0 0.0
  %2014 = vmatprep.subr.mxu0 0.0
  %2015 = vmatpush1.msra.mxu0 0.0
  %2016 = vmatprep.subr.mxu0 0.0
  %2017 = vmatpush1.msra.mxu0 0.0
  %2018 = vmatprep.subr.mxu0 0.0
  %2019 = vmatpush1.msra.mxu0 0.0
  %2020 = vmatprep.mubr.f32.mxu0 0.0
  %2021 = vmatmul.mubr.f32.gmra.mrb[0].mxu0 %v1724
  %v2022 = vpop.f32.mrb[0].mxu0
  %v2023 = vadd.f32 0.0, %v2022
  %v2024 = vpop.f32.mrb[0].mxu0
  %v2025 = vadd.f32 0.0, %v2024
  %2026 = vdwg.mxu0
  %v2027 = vadd.f32 %v1686, %v1810
  %v2028 = vadd.f32 %v1687, %v1812
  %v2029 = vadd.f32 %v1688, %v1881
  %v2030 = vadd.f32 %v1689, %v1883
  %v2031 = vadd.f32 %v1690, %v1952
  %v2032 = vadd.f32 %v1691, %v1954
  %v2033 = vadd.f32 %v1692, %v2023
  %v2034 = vadd.f32 %v1693, %v2025
  %s2035 = scalar_lea.vmem %s1, 24
  %v2036 = vld [vmem:[%s2035] sm:$0xf]
  %2037 = vrot.lane.b32.xlu0 %v20, 64
  %v2038 = vpop.permute.xlu0 %2037
  %2039 = vrot.lane.b32.xlu0 %v31, 64
  %v2040 = vpop.permute.xlu0 %2039
  %2041 = vrot.lane.b32.xlu0 %v21, 64
  %v2042 = vpop.permute.xlu0 %2041
  %2043 = vrot.lane.b32.xlu0 %v32, 64
  %v2044 = vpop.permute.xlu0 %2043
  %2045 = vrot.lane.b32.xlu0 %v22, 64
  %v2046 = vpop.permute.xlu0 %2045
  %2047 = vrot.lane.b32.xlu0 %v33, 64
  %v2048 = vpop.permute.xlu0 %2047
  %2049 = vrot.lane.b32.xlu0 %v23, 64
  %v2050 = vpop.permute.xlu0 %2049
  %2051 = vrot.lane.b32.xlu0 %v34, 64
  %v2052 = vpop.permute.xlu0 %2051
  %vm2053 = vcmask 523264
  %v2054 = vsel %vm2053, %v2038, %v2040
  %v2055 = vsel %vm2053, %v2040, %v2042
  %v2056 = vsel %vm2053, %v2042, %v2044
  %v2057 = vsel %vm2053, %v2044, %v2046
  %v2058 = vsel %vm2053, %v2046, %v2048
  %v2059 = vsel %vm2053, %v2048, %v2050
  %v2060 = vsel %vm2053, %v2050, %v2052
  %v2063 = vsel %vm2053, %v2052, %v2038
  %v2065 = vsel %vm62, %v2036, 0
  %v2067 = vsel %vm66, %v2054, 0
  %v2069 = vsel %vm66, %v2055, 0
  %v2071 = vsel %vm66, %v2056, 0
  %v2073 = vsel %vm66, %v2057, 0
  %v2075 = vsel %vm66, %v2058, 0
  %v2077 = vsel %vm66, %v2059, 0
  %v2079 = vsel %vm66, %v2060, 0
  %v2082 = vsel %vm66, %v2063, 0
  %2084 = vmatprep.subr.mxu0 %v2069
  %2085 = vmatpush1.msra.mxu0 %v2067
  %2086 = vmatprep.subr.mxu0 0.0
  %2087 = vmatpush1.msra.mxu0 0.0
  %2088 = vmatprep.subr.mxu0 0.0
  %2089 = vmatpush1.msra.mxu0 0.0
  %2090 = vmatprep.subr.mxu0 0.0
  %2091 = vmatpush1.msra.mxu0 0.0
  %2092 = vmatprep.subr.mxu0 0.0
  %2093 = vmatpush1.msra.mxu0 0.0
  %2094 = vmatprep.subr.mxu0 0.0
  %2095 = vmatpush1.msra.mxu0 0.0
  %2096 = vmatprep.subr.mxu0 0.0
  %2097 = vmatpush1.msra.mxu0 0.0
  %2098 = vmatprep.subr.mxu0 0.0
  %2099 = vmatpush1.msra.mxu0 0.0
  %2100 = vmatprep.subr.mxu0 0.0
  %2101 = vmatpush1.msra.mxu0 0.0
  %2102 = vmatprep.subr.mxu0 0.0
  %2103 = vmatpush1.msra.mxu0 0.0
  %2104 = vmatprep.subr.mxu0 0.0
  %2105 = vmatpush1.msra.mxu0 0.0
  %2106 = vmatprep.subr.mxu0 0.0
  %2107 = vmatpush1.msra.mxu0 0.0
  %2108 = vmatprep.subr.mxu0 0.0
  %2109 = vmatpush1.msra.mxu0 0.0
  %2110 = vmatprep.subr.mxu0 0.0
  %2111 = vmatpush1.msra.mxu0 0.0
  %2112 = vmatprep.subr.mxu0 0.0
  %2113 = vmatpush1.msra.mxu0 0.0
  %2114 = vmatprep.subr.mxu0 0.0
  %2115 = vmatpush1.msra.mxu0 0.0
  %2116 = vmatprep.subr.mxu0 0.0
  %2117 = vmatpush1.msra.mxu0 0.0
  %2118 = vmatprep.subr.mxu0 0.0
  %2119 = vmatpush1.msra.mxu0 0.0
  %2120 = vmatprep.subr.mxu0 0.0
  %2121 = vmatpush1.msra.mxu0 0.0
  %2122 = vmatprep.subr.mxu0 0.0
  %2123 = vmatpush1.msra.mxu0 0.0
  %2124 = vmatprep.subr.mxu0 0.0
  %2125 = vmatpush1.msra.mxu0 0.0
  %2126 = vmatprep.subr.mxu0 0.0
  %2127 = vmatpush1.msra.mxu0 0.0
  %2128 = vmatprep.subr.mxu0 0.0
  %2129 = vmatpush1.msra.mxu0 0.0
  %2130 = vmatprep.subr.mxu0 0.0
  %2131 = vmatpush1.msra.mxu0 0.0
  %2132 = vmatprep.subr.mxu0 0.0
  %2133 = vmatpush1.msra.mxu0 0.0
  %2134 = vmatprep.subr.mxu0 0.0
  %2135 = vmatpush1.msra.mxu0 0.0
  %2136 = vmatprep.subr.mxu0 0.0
  %2137 = vmatpush1.msra.mxu0 0.0
  %2138 = vmatprep.subr.mxu0 0.0
  %2139 = vmatpush1.msra.mxu0 0.0
  %2140 = vmatprep.subr.mxu0 0.0
  %2141 = vmatpush1.msra.mxu0 0.0
  %2142 = vmatprep.subr.mxu0 0.0
  %2143 = vmatpush1.msra.mxu0 0.0
  %2144 = vmatprep.subr.mxu0 0.0
  %2145 = vmatpush1.msra.mxu0 0.0
  %2146 = vmatprep.subr.mxu0 0.0
  %2147 = vmatpush1.msra.mxu0 0.0
  %2148 = vmatprep.mubr.f32.mxu0 0.0
  %2149 = vmatmul.mubr.f32.gmra.mrb[0].mxu0 %v2065
  %v2150 = vpop.f32.mrb[0].mxu0
  %v2151 = vadd.f32 0.0, %v2150
  %v2152 = vpop.f32.mrb[0].mxu0
  %v2153 = vadd.f32 0.0, %v2152
  %2154 = vdwg.mxu0
  %2155 = vmatprep.subr.mxu0 %v2073
  %2156 = vmatpush1.msra.mxu0 %v2071
  %2157 = vmatprep.subr.mxu0 0.0
  %2158 = vmatpush1.msra.mxu0 0.0
  %2159 = vmatprep.subr.mxu0 0.0
  %2160 = vmatpush1.msra.mxu0 0.0
  %2161 = vmatprep.subr.mxu0 0.0
  %2162 = vmatpush1.msra.mxu0 0.0
  %2163 = vmatprep.subr.mxu0 0.0
  %2164 = vmatpush1.msra.mxu0 0.0
  %2165 = vmatprep.subr.mxu0 0.0
  %2166 = vmatpush1.msra.mxu0 0.0
  %2167 = vmatprep.subr.mxu0 0.0
  %2168 = vmatpush1.msra.mxu0 0.0
  %2169 = vmatprep.subr.mxu0 0.0
  %2170 = vmatpush1.msra.mxu0 0.0
  %2171 = vmatprep.subr.mxu0 0.0
  %2172 = vmatpush1.msra.mxu0 0.0
  %2173 = vmatprep.subr.mxu0 0.0
  %2174 = vmatpush1.msra.mxu0 0.0
  %2175 = vmatprep.subr.mxu0 0.0
  %2176 = vmatpush1.msra.mxu0 0.0
  %2177 = vmatprep.subr.mxu0 0.0
  %2178 = vmatpush1.msra.mxu0 0.0
  %2179 = vmatprep.subr.mxu0 0.0
  %2180 = vmatpush1.msra.mxu0 0.0
  %2181 = vmatprep.subr.mxu0 0.0
  %2182 = vmatpush1.msra.mxu0 0.0
  %2183 = vmatprep.subr.mxu0 0.0
  %2184 = vmatpush1.msra.mxu0 0.0
  %2185 = vmatprep.subr.mxu0 0.0
  %2186 = vmatpush1.msra.mxu0 0.0
  %2187 = vmatprep.subr.mxu0 0.0
  %2188 = vmatpush1.msra.mxu0 0.0
  %2189 = vmatprep.subr.mxu0 0.0
  %2190 = vmatpush1.msra.mxu0 0.0
  %2191 = vmatprep.subr.mxu0 0.0
  %2192 = vmatpush1.msra.mxu0 0.0
  %2193 = vmatprep.subr.mxu0 0.0
  %2194 = vmatpush1.msra.mxu0 0.0
  %2195 = vmatprep.subr.mxu0 0.0
  %2196 = vmatpush1.msra.mxu0 0.0
  %2197 = vmatprep.subr.mxu0 0.0
  %2198 = vmatpush1.msra.mxu0 0.0
  %2199 = vmatprep.subr.mxu0 0.0
  %2200 = vmatpush1.msra.mxu0 0.0
  %2201 = vmatprep.subr.mxu0 0.0
  %2202 = vmatpush1.msra.mxu0 0.0
  %2203 = vmatprep.subr.mxu0 0.0
  %2204 = vmatpush1.msra.mxu0 0.0
  %2205 = vmatprep.subr.mxu0 0.0
  %2206 = vmatpush1.msra.mxu0 0.0
  %2207 = vmatprep.subr.mxu0 0.0
  %2208 = vmatpush1.msra.mxu0 0.0
  %2209 = vmatprep.subr.mxu0 0.0
  %2210 = vmatpush1.msra.mxu0 0.0
  %2211 = vmatprep.subr.mxu0 0.0
  %2212 = vmatpush1.msra.mxu0 0.0
  %2213 = vmatprep.subr.mxu0 0.0
  %2214 = vmatpush1.msra.mxu0 0.0
  %2215 = vmatprep.subr.mxu0 0.0
  %2216 = vmatpush1.msra.mxu0 0.0
  %2217 = vmatprep.subr.mxu0 0.0
  %2218 = vmatpush1.msra.mxu0 0.0
  %2219 = vmatprep.mubr.f32.mxu0 0.0
  %2220 = vmatmul.mubr.f32.gmra.mrb[0].mxu0 %v2065
  %v2221 = vpop.f32.mrb[0].mxu0
  %v2222 = vadd.f32 0.0, %v2221
  %v2223 = vpop.f32.mrb[0].mxu0
  %v2224 = vadd.f32 0.0, %v2223
  %2225 = vdwg.mxu0
  %2226 = vmatprep.subr.mxu0 %v2077
  %2227 = vmatpush1.msra.mxu0 %v2075
  %2228 = vmatprep.subr.mxu0 0.0
  %2229 = vmatpush1.msra.mxu0 0.0
  %2230 = vmatprep.subr.mxu0 0.0
  %2231 = vmatpush1.msra.mxu0 0.0
  %2232 = vmatprep.subr.mxu0 0.0
  %2233 = vmatpush1.msra.mxu0 0.0
  %2234 = vmatprep.subr.mxu0 0.0
  %2235 = vmatpush1.msra.mxu0 0.0
  %2236 = vmatprep.subr.mxu0 0.0
  %2237 = vmatpush1.msra.mxu0 0.0
  %2238 = vmatprep.subr.mxu0 0.0
  %2239 = vmatpush1.msra.mxu0 0.0
  %2240 = vmatprep.subr.mxu0 0.0
  %2241 = vmatpush1.msra.mxu0 0.0
  %2242 = vmatprep.subr.mxu0 0.0
  %2243 = vmatpush1.msra.mxu0 0.0
  %2244 = vmatprep.subr.mxu0 0.0
  %2245 = vmatpush1.msra.mxu0 0.0
  %2246 = vmatprep.subr.mxu0 0.0
  %2247 = vmatpush1.msra.mxu0 0.0
  %2248 = vmatprep.subr.mxu0 0.0
  %2249 = vmatpush1.msra.mxu0 0.0
  %2250 = vmatprep.subr.mxu0 0.0
  %2251 = vmatpush1.msra.mxu0 0.0
  %2252 = vmatprep.subr.mxu0 0.0
  %2253 = vmatpush1.msra.mxu0 0.0
  %2254 = vmatprep.subr.mxu0 0.0
  %2255 = vmatpush1.msra.mxu0 0.0
  %2256 = vmatprep.subr.mxu0 0.0
  %2257 = vmatpush1.msra.mxu0 0.0
  %2258 = vmatprep.subr.mxu0 0.0
  %2259 = vmatpush1.msra.mxu0 0.0
  %2260 = vmatprep.subr.mxu0 0.0
  %2261 = vmatpush1.msra.mxu0 0.0
  %2262 = vmatprep.subr.mxu0 0.0
  %2263 = vmatpush1.msra.mxu0 0.0
  %2264 = vmatprep.subr.mxu0 0.0
  %2265 = vmatpush1.msra.mxu0 0.0
  %2266 = vmatprep.subr.mxu0 0.0
  %2267 = vmatpush1.msra.mxu0 0.0
  %2268 = vmatprep.subr.mxu0 0.0
  %2269 = vmatpush1.msra.mxu0 0.0
  %2270 = vmatprep.subr.mxu0 0.0
  %2271 = vmatpush1.msra.mxu0 0.0
  %2272 = vmatprep.subr.mxu0 0.0
  %2273 = vmatpush1.msra.mxu0 0.0
  %2274 = vmatprep.subr.mxu0 0.0
  %2275 = vmatpush1.msra.mxu0 0.0
  %2276 = vmatprep.subr.mxu0 0.0
  %2277 = vmatpush1.msra.mxu0 0.0
  %2278 = vmatprep.subr.mxu0 0.0
  %2279 = vmatpush1.msra.mxu0 0.0
  %2280 = vmatprep.subr.mxu0 0.0
  %2281 = vmatpush1.msra.mxu0 0.0
  %2282 = vmatprep.subr.mxu0 0.0
  %2283 = vmatpush1.msra.mxu0 0.0
  %2284 = vmatprep.subr.mxu0 0.0
  %2285 = vmatpush1.msra.mxu0 0.0
  %2286 = vmatprep.subr.mxu0 0.0
  %2287 = vmatpush1.msra.mxu0 0.0
  %2288 = vmatprep.subr.mxu0 0.0
  %2289 = vmatpush1.msra.mxu0 0.0
  %2290 = vmatprep.mubr.f32.mxu0 0.0
  %2291 = vmatmul.mubr.f32.gmra.mrb[0].mxu0 %v2065
  %v2292 = vpop.f32.mrb[0].mxu0
  %v2293 = vadd.f32 0.0, %v2292
  %v2294 = vpop.f32.mrb[0].mxu0
  %v2295 = vadd.f32 0.0, %v2294
  %2296 = vdwg.mxu0
  %2297 = vmatprep.subr.mxu0 %v2082
  %2298 = vmatpush1.msra.mxu0 %v2079
  %2299 = vmatprep.subr.mxu0 0.0
  %2300 = vmatpush1.msra.mxu0 0.0
  %2301 = vmatprep.subr.mxu0 0.0
  %2302 = vmatpush1.msra.mxu0 0.0
  %2303 = vmatprep.subr.mxu0 0.0
  %2304 = vmatpush1.msra.mxu0 0.0
  %2305 = vmatprep.subr.mxu0 0.0
  %2306 = vmatpush1.msra.mxu0 0.0
  %2307 = vmatprep.subr.mxu0 0.0
  %2308 = vmatpush1.msra.mxu0 0.0
  %2309 = vmatprep.subr.mxu0 0.0
  %2310 = vmatpush1.msra.mxu0 0.0
  %2311 = vmatprep.subr.mxu0 0.0
  %2312 = vmatpush1.msra.mxu0 0.0
  %2313 = vmatprep.subr.mxu0 0.0
  %2314 = vmatpush1.msra.mxu0 0.0
  %2315 = vmatprep.subr.mxu0 0.0
  %2316 = vmatpush1.msra.mxu0 0.0
  %2317 = vmatprep.subr.mxu0 0.0
  %2318 = vmatpush1.msra.mxu0 0.0
  %2319 = vmatprep.subr.mxu0 0.0
  %2320 = vmatpush1.msra.mxu0 0.0
  %2321 = vmatprep.subr.mxu0 0.0
  %2322 = vmatpush1.msra.mxu0 0.0
  %2323 = vmatprep.subr.mxu0 0.0
  %2324 = vmatpush1.msra.mxu0 0.0
  %2325 = vmatprep.subr.mxu0 0.0
  %2326 = vmatpush1.msra.mxu0 0.0
  %2327 = vmatprep.subr.mxu0 0.0
  %2328 = vmatpush1.msra.mxu0 0.0
  %2329 = vmatprep.subr.mxu0 0.0
  %2330 = vmatpush1.msra.mxu0 0.0
  %2331 = vmatprep.subr.mxu0 0.0
  %2332 = vmatpush1.msra.mxu0 0.0
  %2333 = vmatprep.subr.mxu0 0.0
  %2334 = vmatpush1.msra.mxu0 0.0
  %2335 = vmatprep.subr.mxu0 0.0
  %2336 = vmatpush1.msra.mxu0 0.0
  %2337 = vmatprep.subr.mxu0 0.0
  %2338 = vmatpush1.msra.mxu0 0.0
  %2339 = vmatprep.subr.mxu0 0.0
  %2340 = vmatpush1.msra.mxu0 0.0
  %2341 = vmatprep.subr.mxu0 0.0
  %2342 = vmatpush1.msra.mxu0 0.0
  %2343 = vmatprep.subr.mxu0 0.0
  %2344 = vmatpush1.msra.mxu0 0.0
  %2345 = vmatprep.subr.mxu0 0.0
  %2346 = vmatpush1.msra.mxu0 0.0
  %2347 = vmatprep.subr.mxu0 0.0
  %2348 = vmatpush1.msra.mxu0 0.0
  %2349 = vmatprep.subr.mxu0 0.0
  %2350 = vmatpush1.msra.mxu0 0.0
  %2351 = vmatprep.subr.mxu0 0.0
  %2352 = vmatpush1.msra.mxu0 0.0
  %2353 = vmatprep.subr.mxu0 0.0
  %2354 = vmatpush1.msra.mxu0 0.0
  %2355 = vmatprep.subr.mxu0 0.0
  %2356 = vmatpush1.msra.mxu0 0.0
  %2357 = vmatprep.subr.mxu0 0.0
  %2358 = vmatpush1.msra.mxu0 0.0
  %2359 = vmatprep.subr.mxu0 0.0
  %2360 = vmatpush1.msra.mxu0 0.0
  %2361 = vmatprep.mubr.f32.mxu0 0.0
  %2362 = vmatmul.mubr.f32.gmra.mrb[0].mxu0 %v2065
  %v2363 = vpop.f32.mrb[0].mxu0
  %v2364 = vadd.f32 0.0, %v2363
  %v2365 = vpop.f32.mrb[0].mxu0
  %v2366 = vadd.f32 0.0, %v2365
  %2367 = vdwg.mxu0
  %v2368 = vadd.f32 %v2027, %v2151
  %v2369 = vadd.f32 %v2028, %v2153
  %v2370 = vadd.f32 %v2029, %v2222
  %v2371 = vadd.f32 %v2030, %v2224
  %v2372 = vadd.f32 %v2031, %v2293
  %v2373 = vadd.f32 %v2032, %v2295
  %v2374 = vadd.f32 %v2033, %v2364
  %v2375 = vadd.f32 %v2034, %v2366
  %s2376 = scalar_lea.vmem %s1, 28
  %v2377 = vld [vmem:[%s2376] sm:$0xf]
  %2378 = vrot.lane.b32.xlu0 %v20, 63
  %v2379 = vpop.permute.xlu0 %2378
  %2380 = vrot.lane.b32.xlu0 %v31, 63
  %v2381 = vpop.permute.xlu0 %2380
  %2382 = vrot.lane.b32.xlu0 %v21, 63
  %v2383 = vpop.permute.xlu0 %2382
  %2384 = vrot.lane.b32.xlu0 %v32, 63
  %v2385 = vpop.permute.xlu0 %2384
  %2386 = vrot.lane.b32.xlu0 %v22, 63
  %v2387 = vpop.permute.xlu0 %2386
  %2388 = vrot.lane.b32.xlu0 %v33, 63
  %v2389 = vpop.permute.xlu0 %2388
  %2390 = vrot.lane.b32.xlu0 %v23, 63
  %v2391 = vpop.permute.xlu0 %2390
  %2392 = vrot.lane.b32.xlu0 %v34, 63
  %v2393 = vpop.permute.xlu0 %2392
  %vm2394 = vcmask 515072
  %v2395 = vsel %vm2394, %v2379, %v2381
  %v2396 = vsel %vm2394, %v2381, %v2383
  %v2397 = vsel %vm2394, %v2383, %v2385
  %v2398 = vsel %vm2394, %v2385, %v2387
  %v2399 = vsel %vm2394, %v2387, %v2389
  %v2400 = vsel %vm2394, %v2389, %v2391
  %v2401 = vsel %vm2394, %v2391, %v2393
  %v2404 = vsel %vm2394, %v2393, %v2379
  %v2406 = vsel %vm62, %v2377, 0
  %v2408 = vsel %vm66, %v2395, 0
  %v2410 = vsel %vm66, %v2396, 0
  %v2412 = vsel %vm66, %v2397, 0
  %v2414 = vsel %vm66, %v2398, 0
  %v2416 = vsel %vm66, %v2399, 0
  %v2418 = vsel %vm66, %v2400, 0
  %v2420 = vsel %vm66, %v2401, 0
  %v2423 = vsel %vm66, %v2404, 0
  %2425 = vmatprep.subr.mxu0 %v2410
  %2426 = vmatpush1.msra.mxu0 %v2408
  %2427 = vmatprep.subr.mxu0 0.0
  %2428 = vmatpush1.msra.mxu0 0.0
  %2429 = vmatprep.subr.mxu0 0.0
  %2430 = vmatpush1.msra.mxu0 0.0
  %2431 = vmatprep.subr.mxu0 0.0
  %2432 = vmatpush1.msra.mxu0 0.0
  %2433 = vmatprep.subr.mxu0 0.0
  %2434 = vmatpush1.msra.mxu0 0.0
  %2435 = vmatprep.subr.mxu0 0.0
  %2436 = vmatpush1.msra.mxu0 0.0
  %2437 = vmatprep.subr.mxu0 0.0
  %2438 = vmatpush1.msra.mxu0 0.0
  %2439 = vmatprep.subr.mxu0 0.0
  %2440 = vmatpush1.msra.mxu0 0.0
  %2441 = vmatprep.subr.mxu0 0.0
  %2442 = vmatpush1.msra.mxu0 0.0
  %2443 = vmatprep.subr.mxu0 0.0
  %2444 = vmatpush1.msra.mxu0 0.0
  %2445 = vmatprep.subr.mxu0 0.0
  %2446 = vmatpush1.msra.mxu0 0.0
  %2447 = vmatprep.subr.mxu0 0.0
  %2448 = vmatpush1.msra.mxu0 0.0
  %2449 = vmatprep.subr.mxu0 0.0
  %2450 = vmatpush1.msra.mxu0 0.0
  %2451 = vmatprep.subr.mxu0 0.0
  %2452 = vmatpush1.msra.mxu0 0.0
  %2453 = vmatprep.subr.mxu0 0.0
  %2454 = vmatpush1.msra.mxu0 0.0
  %2455 = vmatprep.subr.mxu0 0.0
  %2456 = vmatpush1.msra.mxu0 0.0
  %2457 = vmatprep.subr.mxu0 0.0
  %2458 = vmatpush1.msra.mxu0 0.0
  %2459 = vmatprep.subr.mxu0 0.0
  %2460 = vmatpush1.msra.mxu0 0.0
  %2461 = vmatprep.subr.mxu0 0.0
  %2462 = vmatpush1.msra.mxu0 0.0
  %2463 = vmatprep.subr.mxu0 0.0
  %2464 = vmatpush1.msra.mxu0 0.0
  %2465 = vmatprep.subr.mxu0 0.0
  %2466 = vmatpush1.msra.mxu0 0.0
  %2467 = vmatprep.subr.mxu0 0.0
  %2468 = vmatpush1.msra.mxu0 0.0
  %2469 = vmatprep.subr.mxu0 0.0
  %2470 = vmatpush1.msra.mxu0 0.0
  %2471 = vmatprep.subr.mxu0 0.0
  %2472 = vmatpush1.msra.mxu0 0.0
  %2473 = vmatprep.subr.mxu0 0.0
  %2474 = vmatpush1.msra.mxu0 0.0
  %2475 = vmatprep.subr.mxu0 0.0
  %2476 = vmatpush1.msra.mxu0 0.0
  %2477 = vmatprep.subr.mxu0 0.0
  %2478 = vmatpush1.msra.mxu0 0.0
  %2479 = vmatprep.subr.mxu0 0.0
  %2480 = vmatpush1.msra.mxu0 0.0
  %2481 = vmatprep.subr.mxu0 0.0
  %2482 = vmatpush1.msra.mxu0 0.0
  %2483 = vmatprep.subr.mxu0 0.0
  %2484 = vmatpush1.msra.mxu0 0.0
  %2485 = vmatprep.subr.mxu0 0.0
  %2486 = vmatpush1.msra.mxu0 0.0
  %2487 = vmatprep.subr.mxu0 0.0
  %2488 = vmatpush1.msra.mxu0 0.0
  %2489 = vmatprep.mubr.f32.mxu0 0.0
  %2490 = vmatmul.mubr.f32.gmra.mrb[0].mxu0 %v2406
  %v2491 = vpop.f32.mrb[0].mxu0
  %v2492 = vadd.f32 0.0, %v2491
  %v2493 = vpop.f32.mrb[0].mxu0
  %v2494 = vadd.f32 0.0, %v2493
  %2495 = vdwg.mxu0
  %2496 = vmatprep.subr.mxu0 %v2414
  %2497 = vmatpush1.msra.mxu0 %v2412
  %2498 = vmatprep.subr.mxu0 0.0
  %2499 = vmatpush1.msra.mxu0 0.0
  %2500 = vmatprep.subr.mxu0 0.0
  %2501 = vmatpush1.msra.mxu0 0.0
  %2502 = vmatprep.subr.mxu0 0.0
  %2503 = vmatpush1.msra.mxu0 0.0
  %2504 = vmatprep.subr.mxu0 0.0
  %2505 = vmatpush1.msra.mxu0 0.0
  %2506 = vmatprep.subr.mxu0 0.0
  %2507 = vmatpush1.msra.mxu0 0.0
  %2508 = vmatprep.subr.mxu0 0.0
  %2509 = vmatpush1.msra.mxu0 0.0
  %2510 = vmatprep.subr.mxu0 0.0
  %2511 = vmatpush1.msra.mxu0 0.0
  %2512 = vmatprep.subr.mxu0 0.0
  %2513 = vmatpush1.msra.mxu0 0.0
  %2514 = vmatprep.subr.mxu0 0.0
  %2515 = vmatpush1.msra.mxu0 0.0
  %2516 = vmatprep.subr.mxu0 0.0
  %2517 = vmatpush1.msra.mxu0 0.0
  %2518 = vmatprep.subr.mxu0 0.0
  %2519 = vmatpush1.msra.mxu0 0.0
  %2520 = vmatprep.subr.mxu0 0.0
  %2521 = vmatpush1.msra.mxu0 0.0
  %2522 = vmatprep.subr.mxu0 0.0
  %2523 = vmatpush1.msra.mxu0 0.0
  %2524 = vmatprep.subr.mxu0 0.0
  %2525 = vmatpush1.msra.mxu0 0.0
  %2526 = vmatprep.subr.mxu0 0.0
  %2527 = vmatpush1.msra.mxu0 0.0
  %2528 = vmatprep.subr.mxu0 0.0
  %2529 = vmatpush1.msra.mxu0 0.0
  %2530 = vmatprep.subr.mxu0 0.0
  %2531 = vmatpush1.msra.mxu0 0.0
  %2532 = vmatprep.subr.mxu0 0.0
  %2533 = vmatpush1.msra.mxu0 0.0
  %2534 = vmatprep.subr.mxu0 0.0
  %2535 = vmatpush1.msra.mxu0 0.0
  %2536 = vmatprep.subr.mxu0 0.0
  %2537 = vmatpush1.msra.mxu0 0.0
  %2538 = vmatprep.subr.mxu0 0.0
  %2539 = vmatpush1.msra.mxu0 0.0
  %2540 = vmatprep.subr.mxu0 0.0
  %2541 = vmatpush1.msra.mxu0 0.0
  %2542 = vmatprep.subr.mxu0 0.0
  %2543 = vmatpush1.msra.mxu0 0.0
  %2544 = vmatprep.subr.mxu0 0.0
  %2545 = vmatpush1.msra.mxu0 0.0
  %2546 = vmatprep.subr.mxu0 0.0
  %2547 = vmatpush1.msra.mxu0 0.0
  %2548 = vmatprep.subr.mxu0 0.0
  %2549 = vmatpush1.msra.mxu0 0.0
  %2550 = vmatprep.subr.mxu0 0.0
  %2551 = vmatpush1.msra.mxu0 0.0
  %2552 = vmatprep.subr.mxu0 0.0
  %2553 = vmatpush1.msra.mxu0 0.0
  %2554 = vmatprep.subr.mxu0 0.0
  %2555 = vmatpush1.msra.mxu0 0.0
  %2556 = vmatprep.subr.mxu0 0.0
  %2557 = vmatpush1.msra.mxu0 0.0
  %2558 = vmatprep.subr.mxu0 0.0
  %2559 = vmatpush1.msra.mxu0 0.0
  %2560 = vmatprep.mubr.f32.mxu0 0.0
  %2561 = vmatmul.mubr.f32.gmra.mrb[0].mxu0 %v2406
  %v2562 = vpop.f32.mrb[0].mxu0
  %v2563 = vadd.f32 0.0, %v2562
  %v2564 = vpop.f32.mrb[0].mxu0
  %v2565 = vadd.f32 0.0, %v2564
  %2566 = vdwg.mxu0
  %2567 = vmatprep.subr.mxu0 %v2418
  %2568 = vmatpush1.msra.mxu0 %v2416
  %2569 = vmatprep.subr.mxu0 0.0
  %2570 = vmatpush1.msra.mxu0 0.0
  %2571 = vmatprep.subr.mxu0 0.0
  %2572 = vmatpush1.msra.mxu0 0.0
  %2573 = vmatprep.subr.mxu0 0.0
  %2574 = vmatpush1.msra.mxu0 0.0
  %2575 = vmatprep.subr.mxu0 0.0
  %2576 = vmatpush1.msra.mxu0 0.0
  %2577 = vmatprep.subr.mxu0 0.0
  %2578 = vmatpush1.msra.mxu0 0.0
  %2579 = vmatprep.subr.mxu0 0.0
  %2580 = vmatpush1.msra.mxu0 0.0
  %2581 = vmatprep.subr.mxu0 0.0
  %2582 = vmatpush1.msra.mxu0 0.0
  %2583 = vmatprep.subr.mxu0 0.0
  %2584 = vmatpush1.msra.mxu0 0.0
  %2585 = vmatprep.subr.mxu0 0.0
  %2586 = vmatpush1.msra.mxu0 0.0
  %2587 = vmatprep.subr.mxu0 0.0
  %2588 = vmatpush1.msra.mxu0 0.0
  %2589 = vmatprep.subr.mxu0 0.0
  %2590 = vmatpush1.msra.mxu0 0.0
  %2591 = vmatprep.subr.mxu0 0.0
  %2592 = vmatpush1.msra.mxu0 0.0
  %2593 = vmatprep.subr.mxu0 0.0
  %2594 = vmatpush1.msra.mxu0 0.0
  %2595 = vmatprep.subr.mxu0 0.0
  %2596 = vmatpush1.msra.mxu0 0.0
  %2597 = vmatprep.subr.mxu0 0.0
  %2598 = vmatpush1.msra.mxu0 0.0
  %2599 = vmatprep.subr.mxu0 0.0
  %2600 = vmatpush1.msra.mxu0 0.0
  %2601 = vmatprep.subr.mxu0 0.0
  %2602 = vmatpush1.msra.mxu0 0.0
  %2603 = vmatprep.subr.mxu0 0.0
  %2604 = vmatpush1.msra.mxu0 0.0
  %2605 = vmatprep.subr.mxu0 0.0
  %2606 = vmatpush1.msra.mxu0 0.0
  %2607 = vmatprep.subr.mxu0 0.0
  %2608 = vmatpush1.msra.mxu0 0.0
  %2609 = vmatprep.subr.mxu0 0.0
  %2610 = vmatpush1.msra.mxu0 0.0
  %2611 = vmatprep.subr.mxu0 0.0
  %2612 = vmatpush1.msra.mxu0 0.0
  %2613 = vmatprep.subr.mxu0 0.0
  %2614 = vmatpush1.msra.mxu0 0.0
  %2615 = vmatprep.subr.mxu0 0.0
  %2616 = vmatpush1.msra.mxu0 0.0
  %2617 = vmatprep.subr.mxu0 0.0
  %2618 = vmatpush1.msra.mxu0 0.0
  %2619 = vmatprep.subr.mxu0 0.0
  %2620 = vmatpush1.msra.mxu0 0.0
  %2621 = vmatprep.subr.mxu0 0.0
  %2622 = vmatpush1.msra.mxu0 0.0
  %2623 = vmatprep.subr.mxu0 0.0
  %2624 = vmatpush1.msra.mxu0 0.0
  %2625 = vmatprep.subr.mxu0 0.0
  %2626 = vmatpush1.msra.mxu0 0.0
  %2627 = vmatprep.subr.mxu0 0.0
  %2628 = vmatpush1.msra.mxu0 0.0
  %2629 = vmatprep.subr.mxu0 0.0
  %2630 = vmatpush1.msra.mxu0 0.0
  %2631 = vmatprep.mubr.f32.mxu0 0.0
  %2632 = vmatmul.mubr.f32.gmra.mrb[0].mxu0 %v2406
  %v2633 = vpop.f32.mrb[0].mxu0
  %v2634 = vadd.f32 0.0, %v2633
  %v2635 = vpop.f32.mrb[0].mxu0
  %v2636 = vadd.f32 0.0, %v2635
  %2637 = vdwg.mxu0
  %2638 = vmatprep.subr.mxu0 %v2423
  %2639 = vmatpush1.msra.mxu0 %v2420
  %2640 = vmatprep.subr.mxu0 0.0
  %2641 = vmatpush1.msra.mxu0 0.0
  %2642 = vmatprep.subr.mxu0 0.0
  %2643 = vmatpush1.msra.mxu0 0.0
  %2644 = vmatprep.subr.mxu0 0.0
  %2645 = vmatpush1.msra.mxu0 0.0
  %2646 = vmatprep.subr.mxu0 0.0
  %2647 = vmatpush1.msra.mxu0 0.0
  %2648 = vmatprep.subr.mxu0 0.0
  %2649 = vmatpush1.msra.mxu0 0.0
  %2650 = vmatprep.subr.mxu0 0.0
  %2651 = vmatpush1.msra.mxu0 0.0
  %2652 = vmatprep.subr.mxu0 0.0
  %2653 = vmatpush1.msra.mxu0 0.0
  %2654 = vmatprep.subr.mxu0 0.0
  %2655 = vmatpush1.msra.mxu0 0.0
  %2656 = vmatprep.subr.mxu0 0.0
  %2657 = vmatpush1.msra.mxu0 0.0
  %2658 = vmatprep.subr.mxu0 0.0
  %2659 = vmatpush1.msra.mxu0 0.0
  %2660 = vmatprep.subr.mxu0 0.0
  %2661 = vmatpush1.msra.mxu0 0.0
  %2662 = vmatprep.subr.mxu0 0.0
  %2663 = vmatpush1.msra.mxu0 0.0
  %2664 = vmatprep.subr.mxu0 0.0
  %2665 = vmatpush1.msra.mxu0 0.0
  %2666 = vmatprep.subr.mxu0 0.0
  %2667 = vmatpush1.msra.mxu0 0.0
  %2668 = vmatprep.subr.mxu0 0.0
  %2669 = vmatpush1.msra.mxu0 0.0
  %2670 = vmatprep.subr.mxu0 0.0
  %2671 = vmatpush1.msra.mxu0 0.0
  %2672 = vmatprep.subr.mxu0 0.0
  %2673 = vmatpush1.msra.mxu0 0.0
  %2674 = vmatprep.subr.mxu0 0.0
  %2675 = vmatpush1.msra.mxu0 0.0
  %2676 = vmatprep.subr.mxu0 0.0
  %2677 = vmatpush1.msra.mxu0 0.0
  %2678 = vmatprep.subr.mxu0 0.0
  %2679 = vmatpush1.msra.mxu0 0.0
  %2680 = vmatprep.subr.mxu0 0.0
  %2681 = vmatpush1.msra.mxu0 0.0
  %2682 = vmatprep.subr.mxu0 0.0
  %2683 = vmatpush1.msra.mxu0 0.0
  %2684 = vmatprep.subr.mxu0 0.0
  %2685 = vmatpush1.msra.mxu0 0.0
  %2686 = vmatprep.subr.mxu0 0.0
  %2687 = vmatpush1.msra.mxu0 0.0
  %2688 = vmatprep.subr.mxu0 0.0
  %2689 = vmatpush1.msra.mxu0 0.0
  %2690 = vmatprep.subr.mxu0 0.0
  %2691 = vmatpush1.msra.mxu0 0.0
  %2692 = vmatprep.subr.mxu0 0.0
  %2693 = vmatpush1.msra.mxu0 0.0
  %2694 = vmatprep.subr.mxu0 0.0
  %2695 = vmatpush1.msra.mxu0 0.0
  %2696 = vmatprep.subr.mxu0 0.0
  %2697 = vmatpush1.msra.mxu0 0.0
  %2698 = vmatprep.subr.mxu0 0.0
  %2699 = vmatpush1.msra.mxu0 0.0
  %2700 = vmatprep.subr.mxu0 0.0
  %2701 = vmatpush1.msra.mxu0 0.0
  %2702 = vmatprep.mubr.f32.mxu0 0.0
  %2703 = vmatmul.mubr.f32.gmra.mrb[0].mxu0 %v2406
  %v2704 = vpop.f32.mrb[0].mxu0
  %v2705 = vadd.f32 0.0, %v2704
  %v2706 = vpop.f32.mrb[0].mxu0
  %v2707 = vadd.f32 0.0, %v2706
  %2708 = vdwg.mxu0
  %v2709 = vadd.f32 %v2368, %v2492
  %v2710 = vadd.f32 %v2369, %v2494
  %v2711 = vadd.f32 %v2370, %v2563
  %v2712 = vadd.f32 %v2371, %v2565
  %v2713 = vadd.f32 %v2372, %v2634
  %v2714 = vadd.f32 %v2373, %v2636
  %v2715 = vadd.f32 %v2374, %v2705
  %v2716 = vadd.f32 %v2375, %v2707
  %s2717 = scalar_lea.vmem %s1, 32
  %v2718 = vld [vmem:[%s2717] sm:$0xf]
  %2719 = vrot.lane.b32.xlu0 %v20, 62
  %v2720 = vpop.permute.xlu0 %2719
  %2721 = vrot.lane.b32.xlu0 %v31, 62
  %v2722 = vpop.permute.xlu0 %2721
  %2723 = vrot.lane.b32.xlu0 %v21, 62
  %v2724 = vpop.permute.xlu0 %2723
  %2725 = vrot.lane.b32.xlu0 %v32, 62
  %v2726 = vpop.permute.xlu0 %2725
  %2727 = vrot.lane.b32.xlu0 %v22, 62
  %v2728 = vpop.permute.xlu0 %2727
  %2729 = vrot.lane.b32.xlu0 %v33, 62
  %v2730 = vpop.permute.xlu0 %2729
  %2731 = vrot.lane.b32.xlu0 %v23, 62
  %v2732 = vpop.permute.xlu0 %2731
  %2733 = vrot.lane.b32.xlu0 %v34, 62
  %v2734 = vpop.permute.xlu0 %2733
  %vm2735 = vcmask 506880
  %v2736 = vsel %vm2735, %v2720, %v2722
  %v2737 = vsel %vm2735, %v2722, %v2724
  %v2738 = vsel %vm2735, %v2724, %v2726
  %v2739 = vsel %vm2735, %v2726, %v2728
  %v2740 = vsel %vm2735, %v2728, %v2730
  %v2741 = vsel %vm2735, %v2730, %v2732
  %v2742 = vsel %vm2735, %v2732, %v2734
  %v2745 = vsel %vm2735, %v2734, %v2720
  %v2747 = vsel %vm62, %v2718, 0
  %v2749 = vsel %vm66, %v2736, 0
  %v2751 = vsel %vm66, %v2737, 0
  %v2753 = vsel %vm66, %v2738, 0
  %v2755 = vsel %vm66, %v2739, 0
  %v2757 = vsel %vm66, %v2740, 0
  %v2759 = vsel %vm66, %v2741, 0
  %v2761 = vsel %vm66, %v2742, 0
  %v2764 = vsel %vm66, %v2745, 0
  %2766 = vmatprep.subr.mxu0 %v2751
  %2767 = vmatpush1.msra.mxu0 %v2749
  %2768 = vmatprep.subr.mxu0 0.0
  %2769 = vmatpush1.msra.mxu0 0.0
  %2770 = vmatprep.subr.mxu0 0.0
  %2771 = vmatpush1.msra.mxu0 0.0
  %2772 = vmatprep.subr.mxu0 0.0
  %2773 = vmatpush1.msra.mxu0 0.0
  %2774 = vmatprep.subr.mxu0 0.0
  %2775 = vmatpush1.msra.mxu0 0.0
  %2776 = vmatprep.subr.mxu0 0.0
  %2777 = vmatpush1.msra.mxu0 0.0
  %2778 = vmatprep.subr.mxu0 0.0
  %2779 = vmatpush1.msra.mxu0 0.0
  %2780 = vmatprep.subr.mxu0 0.0
  %2781 = vmatpush1.msra.mxu0 0.0
  %2782 = vmatprep.subr.mxu0 0.0
  %2783 = vmatpush1.msra.mxu0 0.0
  %2784 = vmatprep.subr.mxu0 0.0
  %2785 = vmatpush1.msra.mxu0 0.0
  %2786 = vmatprep.subr.mxu0 0.0
  %2787 = vmatpush1.msra.mxu0 0.0
  %2788 = vmatprep.subr.mxu0 0.0
  %2789 = vmatpush1.msra.mxu0 0.0
  %2790 = vmatprep.subr.mxu0 0.0
  %2791 = vmatpush1.msra.mxu0 0.0
  %2792 = vmatprep.subr.mxu0 0.0
  %2793 = vmatpush1.msra.mxu0 0.0
  %2794 = vmatprep.subr.mxu0 0.0
  %2795 = vmatpush1.msra.mxu0 0.0
  %2796 = vmatprep.subr.mxu0 0.0
  %2797 = vmatpush1.msra.mxu0 0.0
  %2798 = vmatprep.subr.mxu0 0.0
  %2799 = vmatpush1.msra.mxu0 0.0
  %2800 = vmatprep.subr.mxu0 0.0
  %2801 = vmatpush1.msra.mxu0 0.0
  %2802 = vmatprep.subr.mxu0 0.0
  %2803 = vmatpush1.msra.mxu0 0.0
  %2804 = vmatprep.subr.mxu0 0.0
  %2805 = vmatpush1.msra.mxu0 0.0
  %2806 = vmatprep.subr.mxu0 0.0
  %2807 = vmatpush1.msra.mxu0 0.0
  %2808 = vmatprep.subr.mxu0 0.0
  %2809 = vmatpush1.msra.mxu0 0.0
  %2810 = vmatprep.subr.mxu0 0.0
  %2811 = vmatpush1.msra.mxu0 0.0
  %2812 = vmatprep.subr.mxu0 0.0
  %2813 = vmatpush1.msra.mxu0 0.0
  %2814 = vmatprep.subr.mxu0 0.0
  %2815 = vmatpush1.msra.mxu0 0.0
  %2816 = vmatprep.subr.mxu0 0.0
  %2817 = vmatpush1.msra.mxu0 0.0
  %2818 = vmatprep.subr.mxu0 0.0
  %2819 = vmatpush1.msra.mxu0 0.0
  %2820 = vmatprep.subr.mxu0 0.0
  %2821 = vmatpush1.msra.mxu0 0.0
  %2822 = vmatprep.subr.mxu0 0.0
  %2823 = vmatpush1.msra.mxu0 0.0
  %2824 = vmatprep.subr.mxu0 0.0
  %2825 = vmatpush1.msra.mxu0 0.0
  %2826 = vmatprep.subr.mxu0 0.0
  %2827 = vmatpush1.msra.mxu0 0.0
  %2828 = vmatprep.subr.mxu0 0.0
  %2829 = vmatpush1.msra.mxu0 0.0
  %2830 = vmatprep.mubr.f32.mxu0 0.0
  %2831 = vmatmul.mubr.f32.gmra.mrb[0].mxu0 %v2747
  %v2832 = vpop.f32.mrb[0].mxu0
  %v2833 = vadd.f32 0.0, %v2832
  %v2834 = vpop.f32.mrb[0].mxu0
  %v2835 = vadd.f32 0.0, %v2834
  %2836 = vdwg.mxu0
  %2837 = vmatprep.subr.mxu0 %v2755
  %2838 = vmatpush1.msra.mxu0 %v2753
  %2839 = vmatprep.subr.mxu0 0.0
  %2840 = vmatpush1.msra.mxu0 0.0
  %2841 = vmatprep.subr.mxu0 0.0
  %2842 = vmatpush1.msra.mxu0 0.0
  %2843 = vmatprep.subr.mxu0 0.0
  %2844 = vmatpush1.msra.mxu0 0.0
  %2845 = vmatprep.subr.mxu0 0.0
  %2846 = vmatpush1.msra.mxu0 0.0
  %2847 = vmatprep.subr.mxu0 0.0
  %2848 = vmatpush1.msra.mxu0 0.0
  %2849 = vmatprep.subr.mxu0 0.0
  %2850 = vmatpush1.msra.mxu0 0.0
  %2851 = vmatprep.subr.mxu0 0.0
  %2852 = vmatpush1.msra.mxu0 0.0
  %2853 = vmatprep.subr.mxu0 0.0
  %2854 = vmatpush1.msra.mxu0 0.0
  %2855 = vmatprep.subr.mxu0 0.0
  %2856 = vmatpush1.msra.mxu0 0.0
  %2857 = vmatprep.subr.mxu0 0.0
  %2858 = vmatpush1.msra.mxu0 0.0
  %2859 = vmatprep.subr.mxu0 0.0
  %2860 = vmatpush1.msra.mxu0 0.0
  %2861 = vmatprep.subr.mxu0 0.0
  %2862 = vmatpush1.msra.mxu0 0.0
  %2863 = vmatprep.subr.mxu0 0.0
  %2864 = vmatpush1.msra.mxu0 0.0
  %2865 = vmatprep.subr.mxu0 0.0
  %2866 = vmatpush1.msra.mxu0 0.0
  %2867 = vmatprep.subr.mxu0 0.0
  %2868 = vmatpush1.msra.mxu0 0.0
  %2869 = vmatprep.subr.mxu0 0.0
  %2870 = vmatpush1.msra.mxu0 0.0
  %2871 = vmatprep.subr.mxu0 0.0
  %2872 = vmatpush1.msra.mxu0 0.0
  %2873 = vmatprep.subr.mxu0 0.0
  %2874 = vmatpush1.msra.mxu0 0.0
  %2875 = vmatprep.subr.mxu0 0.0
  %2876 = vmatpush1.msra.mxu0 0.0
  %2877 = vmatprep.subr.mxu0 0.0
  %2878 = vmatpush1.msra.mxu0 0.0
  %2879 = vmatprep.subr.mxu0 0.0
  %2880 = vmatpush1.msra.mxu0 0.0
  %2881 = vmatprep.subr.mxu0 0.0
  %2882 = vmatpush1.msra.mxu0 0.0
  %2883 = vmatprep.subr.mxu0 0.0
  %2884 = vmatpush1.msra.mxu0 0.0
  %2885 = vmatprep.subr.mxu0 0.0
  %2886 = vmatpush1.msra.mxu0 0.0
  %2887 = vmatprep.subr.mxu0 0.0
  %2888 = vmatpush1.msra.mxu0 0.0
  %2889 = vmatprep.subr.mxu0 0.0
  %2890 = vmatpush1.msra.mxu0 0.0
  %2891 = vmatprep.subr.mxu0 0.0
  %2892 = vmatpush1.msra.mxu0 0.0
  %2893 = vmatprep.subr.mxu0 0.0
  %2894 = vmatpush1.msra.mxu0 0.0
  %2895 = vmatprep.subr.mxu0 0.0
  %2896 = vmatpush1.msra.mxu0 0.0
  %2897 = vmatprep.subr.mxu0 0.0
  %2898 = vmatpush1.msra.mxu0 0.0
  %2899 = vmatprep.subr.mxu0 0.0
  %2900 = vmatpush1.msra.mxu0 0.0
  %2901 = vmatprep.mubr.f32.mxu0 0.0
  %2902 = vmatmul.mubr.f32.gmra.mrb[0].mxu0 %v2747
  %v2903 = vpop.f32.mrb[0].mxu0
  %v2904 = vadd.f32 0.0, %v2903
  %v2905 = vpop.f32.mrb[0].mxu0
  %v2906 = vadd.f32 0.0, %v2905
  %2907 = vdwg.mxu0
  %2908 = vmatprep.subr.mxu0 %v2759
  %2909 = vmatpush1.msra.mxu0 %v2757
  %2910 = vmatprep.subr.mxu0 0.0
  %2911 = vmatpush1.msra.mxu0 0.0
  %2912 = vmatprep.subr.mxu0 0.0
  %2913 = vmatpush1.msra.mxu0 0.0
  %2914 = vmatprep.subr.mxu0 0.0
  %2915 = vmatpush1.msra.mxu0 0.0
  %2916 = vmatprep.subr.mxu0 0.0
  %2917 = vmatpush1.msra.mxu0 0.0
  %2918 = vmatprep.subr.mxu0 0.0
  %2919 = vmatpush1.msra.mxu0 0.0
  %2920 = vmatprep.subr.mxu0 0.0
  %2921 = vmatpush1.msra.mxu0 0.0
  %2922 = vmatprep.subr.mxu0 0.0
  %2923 = vmatpush1.msra.mxu0 0.0
  %2924 = vmatprep.subr.mxu0 0.0
  %2925 = vmatpush1.msra.mxu0 0.0
  %2926 = vmatprep.subr.mxu0 0.0
  %2927 = vmatpush1.msra.mxu0 0.0
  %2928 = vmatprep.subr.mxu0 0.0
  %2929 = vmatpush1.msra.mxu0 0.0
  %2930 = vmatprep.subr.mxu0 0.0
  %2931 = vmatpush1.msra.mxu0 0.0
  %2932 = vmatprep.subr.mxu0 0.0
  %2933 = vmatpush1.msra.mxu0 0.0
  %2934 = vmatprep.subr.mxu0 0.0
  %2935 = vmatpush1.msra.mxu0 0.0
  %2936 = vmatprep.subr.mxu0 0.0
  %2937 = vmatpush1.msra.mxu0 0.0
  %2938 = vmatprep.subr.mxu0 0.0
  %2939 = vmatpush1.msra.mxu0 0.0
  %2940 = vmatprep.subr.mxu0 0.0
  %2941 = vmatpush1.msra.mxu0 0.0
  %2942 = vmatprep.subr.mxu0 0.0
  %2943 = vmatpush1.msra.mxu0 0.0
  %2944 = vmatprep.subr.mxu0 0.0
  %2945 = vmatpush1.msra.mxu0 0.0
  %2946 = vmatprep.subr.mxu0 0.0
  %2947 = vmatpush1.msra.mxu0 0.0
  %2948 = vmatprep.subr.mxu0 0.0
  %2949 = vmatpush1.msra.mxu0 0.0
  %2950 = vmatprep.subr.mxu0 0.0
  %2951 = vmatpush1.msra.mxu0 0.0
  %2952 = vmatprep.subr.mxu0 0.0
  %2953 = vmatpush1.msra.mxu0 0.0
  %2954 = vmatprep.subr.mxu0 0.0
  %2955 = vmatpush1.msra.mxu0 0.0
  %2956 = vmatprep.subr.mxu0 0.0
  %2957 = vmatpush1.msra.mxu0 0.0
  %2958 = vmatprep.subr.mxu0 0.0
  %2959 = vmatpush1.msra.mxu0 0.0
  %2960 = vmatprep.subr.mxu0 0.0
  %2961 = vmatpush1.msra.mxu0 0.0
  %2962 = vmatprep.subr.mxu0 0.0
  %2963 = vmatpush1.msra.mxu0 0.0
  %2964 = vmatprep.subr.mxu0 0.0
  %2965 = vmatpush1.msra.mxu0 0.0
  %2966 = vmatprep.subr.mxu0 0.0
  %2967 = vmatpush1.msra.mxu0 0.0
  %2968 = vmatprep.subr.mxu0 0.0
  %2969 = vmatpush1.msra.mxu0 0.0
  %2970 = vmatprep.subr.mxu0 0.0
  %2971 = vmatpush1.msra.mxu0 0.0
  %2972 = vmatprep.mubr.f32.mxu0 0.0
  %2973 = vmatmul.mubr.f32.gmra.mrb[0].mxu0 %v2747
  %v2974 = vpop.f32.mrb[0].mxu0
  %v2975 = vadd.f32 0.0, %v2974
  %v2976 = vpop.f32.mrb[0].mxu0
  %v2977 = vadd.f32 0.0, %v2976
  %2978 = vdwg.mxu0
  %2979 = vmatprep.subr.mxu0 %v2764
  %2980 = vmatpush1.msra.mxu0 %v2761
  %2981 = vmatprep.subr.mxu0 0.0
  %2982 = vmatpush1.msra.mxu0 0.0
  %2983 = vmatprep.subr.mxu0 0.0
  %2984 = vmatpush1.msra.mxu0 0.0
  %2985 = vmatprep.subr.mxu0 0.0
  %2986 = vmatpush1.msra.mxu0 0.0
  %2987 = vmatprep.subr.mxu0 0.0
  %2988 = vmatpush1.msra.mxu0 0.0
  %2989 = vmatprep.subr.mxu0 0.0
  %2990 = vmatpush1.msra.mxu0 0.0
  %2991 = vmatprep.subr.mxu0 0.0
  %2992 = vmatpush1.msra.mxu0 0.0
  %2993 = vmatprep.subr.mxu0 0.0
  %2994 = vmatpush1.msra.mxu0 0.0
  %2995 = vmatprep.subr.mxu0 0.0
  %2996 = vmatpush1.msra.mxu0 0.0
  %2997 = vmatprep.subr.mxu0 0.0
  %2998 = vmatpush1.msra.mxu0 0.0
  %2999 = vmatprep.subr.mxu0 0.0
  %3000 = vmatpush1.msra.mxu0 0.0
  %3001 = vmatprep.subr.mxu0 0.0
  %3002 = vmatpush1.msra.mxu0 0.0
  %3003 = vmatprep.subr.mxu0 0.0
  %3004 = vmatpush1.msra.mxu0 0.0
  %3005 = vmatprep.subr.mxu0 0.0
  %3006 = vmatpush1.msra.mxu0 0.0
  %3007 = vmatprep.subr.mxu0 0.0
  %3008 = vmatpush1.msra.mxu0 0.0
  %3009 = vmatprep.subr.mxu0 0.0
  %3010 = vmatpush1.msra.mxu0 0.0
  %3011 = vmatprep.subr.mxu0 0.0
  %3012 = vmatpush1.msra.mxu0 0.0
  %3013 = vmatprep.subr.mxu0 0.0
  %3014 = vmatpush1.msra.mxu0 0.0
  %3015 = vmatprep.subr.mxu0 0.0
  %3016 = vmatpush1.msra.mxu0 0.0
  %3017 = vmatprep.subr.mxu0 0.0
  %3018 = vmatpush1.msra.mxu0 0.0
  %3019 = vmatprep.subr.mxu0 0.0
  %3020 = vmatpush1.msra.mxu0 0.0
  %3021 = vmatprep.subr.mxu0 0.0
  %3022 = vmatpush1.msra.mxu0 0.0
  %3023 = vmatprep.subr.mxu0 0.0
  %3024 = vmatpush1.msra.mxu0 0.0
  %3025 = vmatprep.subr.mxu0 0.0
  %3026 = vmatpush1.msra.mxu0 0.0
  %3027 = vmatprep.subr.mxu0 0.0
  %3028 = vmatpush1.msra.mxu0 0.0
  %3029 = vmatprep.subr.mxu0 0.0
  %3030 = vmatpush1.msra.mxu0 0.0
  %3031 = vmatprep.subr.mxu0 0.0
  %3032 = vmatpush1.msra.mxu0 0.0
  %3033 = vmatprep.subr.mxu0 0.0
  %3034 = vmatpush1.msra.mxu0 0.0
  %3035 = vmatprep.subr.mxu0 0.0
  %3036 = vmatpush1.msra.mxu0 0.0
  %3037 = vmatprep.subr.mxu0 0.0
  %3038 = vmatpush1.msra.mxu0 0.0
  %3039 = vmatprep.subr.mxu0 0.0
  %3040 = vmatpush1.msra.mxu0 0.0
  %3041 = vmatprep.subr.mxu0 0.0
  %3042 = vmatpush1.msra.mxu0 0.0
  %3043 = vmatprep.mubr.f32.mxu0 0.0
  %3044 = vmatmul.mubr.f32.gmra.mrb[0].mxu0 %v2747
  %v3045 = vpop.f32.mrb[0].mxu0
  %v3046 = vadd.f32 0.0, %v3045
  %v3047 = vpop.f32.mrb[0].mxu0
  %v3048 = vadd.f32 0.0, %v3047
  %3049 = vdwg.mxu0
  %v3050 = vadd.f32 %v2709, %v2833
  %v3051 = vadd.f32 %v2710, %v2835
  %v3052 = vadd.f32 %v2711, %v2904
  %v3053 = vadd.f32 %v2712, %v2906
  %v3054 = vadd.f32 %v2713, %v2975
  %v3055 = vadd.f32 %v2714, %v2977
  %v3056 = vadd.f32 %v2715, %v3046
  %v3057 = vadd.f32 %v2716, %v3048
  %v3058 = vld [vmem:[%s2] sm:$0xf]
  %3060 = vset.pattern.permute.xlu0 0
  %3061 = vperm.xlu0 %3060, %v3058
  %v3062 = vpop.permute.xlu0 %3061
  %v3064 = vadd.f32 %v3050, %v3062
  %v3065 = vadd.f32 %v3051, %v3062
  %v3066 = vadd.f32 %v3052, %v3062
  %v3067 = vadd.f32 %v3053, %v3062
  %v3068 = vadd.f32 %v3054, %v3062
  %v3069 = vadd.f32 %v3055, %v3062
  %v3070 = vadd.f32 %v3056, %v3062
  %v3071 = vadd.f32 %v3057, %v3062
  %v3072 = vmax.f32 %v3064, 0.0
  %v3073 = vmax.f32 %v3065, 0.0
  %v3074 = vmax.f32 %v3066, 0.0
  %v3075 = vmax.f32 %v3067, 0.0
  %v3076 = vmax.f32 %v3068, 0.0
  %v3077 = vmax.f32 %v3069, 0.0
  %v3078 = vmax.f32 %v3070, 0.0
  %v3079 = vmax.f32 %v3071, 0.0
  %v3080 = vld [vmem:[%s3] sm:$0xff]
  %s3081 = scalar_lea.vmem %s3, 8
  %v3082 = vld [vmem:[%s3081] sm:$0xff]
  %3091 = vrot.lane.b32.xlu0 %v3072, 127
  %v3092 = vpop.permute.xlu0 %3091
  %3093 = vrot.lane.b32.xlu0 %v3073, 127
  %v3094 = vpop.permute.xlu0 %3093
  %3095 = vrot.lane.b32.xlu0 %v3074, 127
  %v3096 = vpop.permute.xlu0 %3095
  %3097 = vrot.lane.b32.xlu0 %v3075, 127
  %v3098 = vpop.permute.xlu0 %3097
  %3099 = vrot.lane.b32.xlu0 %v3076, 127
  %v3100 = vpop.permute.xlu0 %3099
  %3101 = vrot.lane.b32.xlu0 %v3077, 127
  %v3102 = vpop.permute.xlu0 %3101
  %3103 = vrot.lane.b32.xlu0 %v3078, 127
  %v3104 = vpop.permute.xlu0 %3103
  %3105 = vrot.lane.b32.xlu0 %v3079, 127
  %v3106 = vpop.permute.xlu0 %3105
  %v3107 = vsel %vm51, %v3092, %v3094
  %v3108 = vsel %vm51, %v3094, %v3096
  %v3109 = vsel %vm51, %v3096, %v3098
  %v3110 = vsel %vm51, %v3098, %v3100
  %v3111 = vsel %vm51, %v3100, %v3102
  %v3112 = vsel %vm51, %v3102, %v3104
  %v3113 = vsel %vm51, %v3104, %v3106
  %v3116 = vsel %vm51, %v3106, %v3092
  %vm3117 = vcmask 31744
  %v3119 = vsel %vm3117, %v3082, 0
  %vm3121 = vcmask 1043456
  %v3122 = vsel %vm3121, %v3107, 0
  %v3124 = vsel %vm3121, %v3108, 0
  %v3126 = vsel %vm3121, %v3109, 0
  %v3128 = vsel %vm3121, %v3110, 0
  %v3130 = vsel %vm3121, %v3111, 0
  %v3132 = vsel %vm3121, %v3112, 0
  %v3134 = vsel %vm3121, %v3113, 0
  %v3137 = vsel %vm3121, %v3116, 0
  %3139 = vmatprep.subr.mxu0 %v3124
  %3140 = vmatpush1.msra.mxu0 %v3122
  %3141 = vmatprep.subr.mxu0 0.0
  %3142 = vmatpush1.msra.mxu0 0.0
  %3143 = vmatprep.subr.mxu0 0.0
  %3144 = vmatpush1.msra.mxu0 0.0
  %3145 = vmatprep.subr.mxu0 0.0
  %3146 = vmatpush1.msra.mxu0 0.0
  %3147 = vmatprep.subr.mxu0 0.0
  %3148 = vmatpush1.msra.mxu0 0.0
  %3149 = vmatprep.subr.mxu0 0.0
  %3150 = vmatpush1.msra.mxu0 0.0
  %3151 = vmatprep.subr.mxu0 0.0
  %3152 = vmatpush1.msra.mxu0 0.0
  %3153 = vmatprep.subr.mxu0 0.0
  %3154 = vmatpush1.msra.mxu0 0.0
  %3155 = vmatprep.subr.mxu0 0.0
  %3156 = vmatpush1.msra.mxu0 0.0
  %3157 = vmatprep.subr.mxu0 0.0
  %3158 = vmatpush1.msra.mxu0 0.0
  %3159 = vmatprep.subr.mxu0 0.0
  %3160 = vmatpush1.msra.mxu0 0.0
  %3161 = vmatprep.subr.mxu0 0.0
  %3162 = vmatpush1.msra.mxu0 0.0
  %3163 = vmatprep.subr.mxu0 0.0
  %3164 = vmatpush1.msra.mxu0 0.0
  %3165 = vmatprep.subr.mxu0 0.0
  %3166 = vmatpush1.msra.mxu0 0.0
  %3167 = vmatprep.subr.mxu0 0.0
  %3168 = vmatpush1.msra.mxu0 0.0
  %3169 = vmatprep.subr.mxu0 0.0
  %3170 = vmatpush1.msra.mxu0 0.0
  %3171 = vmatprep.subr.mxu0 0.0
  %3172 = vmatpush1.msra.mxu0 0.0
  %3173 = vmatprep.subr.mxu0 0.0
  %3174 = vmatpush1.msra.mxu0 0.0
  %3175 = vmatprep.subr.mxu0 0.0
  %3176 = vmatpush1.msra.mxu0 0.0
  %3177 = vmatprep.subr.mxu0 0.0
  %3178 = vmatpush1.msra.mxu0 0.0
  %3179 = vmatprep.subr.mxu0 0.0
  %3180 = vmatpush1.msra.mxu0 0.0
  %3181 = vmatprep.subr.mxu0 0.0
  %3182 = vmatpush1.msra.mxu0 0.0
  %3183 = vmatprep.subr.mxu0 0.0
  %3184 = vmatpush1.msra.mxu0 0.0
  %3185 = vmatprep.subr.mxu0 0.0
  %3186 = vmatpush1.msra.mxu0 0.0
  %3187 = vmatprep.subr.mxu0 0.0
  %3188 = vmatpush1.msra.mxu0 0.0
  %3189 = vmatprep.subr.mxu0 0.0
  %3190 = vmatpush1.msra.mxu0 0.0
  %3191 = vmatprep.subr.mxu0 0.0
  %3192 = vmatpush1.msra.mxu0 0.0
  %3193 = vmatprep.subr.mxu0 0.0
  %3194 = vmatpush1.msra.mxu0 0.0
  %3195 = vmatprep.subr.mxu0 0.0
  %3196 = vmatpush1.msra.mxu0 0.0
  %3197 = vmatprep.subr.mxu0 0.0
  %3198 = vmatpush1.msra.mxu0 0.0
  %3199 = vmatprep.subr.mxu0 0.0
  %3200 = vmatpush1.msra.mxu0 0.0
  %3201 = vmatprep.subr.mxu0 0.0
  %3202 = vmatpush1.msra.mxu0 0.0
  %3203 = vmatprep.mubr.f32.mxu0 0.0
  %3204 = vmatmul.mubr.f32.gmra.mrb[0].mxu0 %v3119
  %v3205 = vpop.f32.mrb[0].mxu0
  %v3206 = vadd.f32 0.0, %v3205
  %v3207 = vpop.f32.mrb[0].mxu0
  %v3208 = vadd.f32 0.0, %v3207
  %3209 = vdwg.mxu0
  %3210 = vmatprep.subr.mxu0 %v3128
  %3211 = vmatpush1.msra.mxu0 %v3126
  %3212 = vmatprep.subr.mxu0 0.0
  %3213 = vmatpush1.msra.mxu0 0.0
  %3214 = vmatprep.subr.mxu0 0.0
  %3215 = vmatpush1.msra.mxu0 0.0
  %3216 = vmatprep.subr.mxu0 0.0
  %3217 = vmatpush1.msra.mxu0 0.0
  %3218 = vmatprep.subr.mxu0 0.0
  %3219 = vmatpush1.msra.mxu0 0.0
  %3220 = vmatprep.subr.mxu0 0.0
  %3221 = vmatpush1.msra.mxu0 0.0
  %3222 = vmatprep.subr.mxu0 0.0
  %3223 = vmatpush1.msra.mxu0 0.0
  %3224 = vmatprep.subr.mxu0 0.0
  %3225 = vmatpush1.msra.mxu0 0.0
  %3226 = vmatprep.subr.mxu0 0.0
  %3227 = vmatpush1.msra.mxu0 0.0
  %3228 = vmatprep.subr.mxu0 0.0
  %3229 = vmatpush1.msra.mxu0 0.0
  %3230 = vmatprep.subr.mxu0 0.0
  %3231 = vmatpush1.msra.mxu0 0.0
  %3232 = vmatprep.subr.mxu0 0.0
  %3233 = vmatpush1.msra.mxu0 0.0
  %3234 = vmatprep.subr.mxu0 0.0
  %3235 = vmatpush1.msra.mxu0 0.0
  %3236 = vmatprep.subr.mxu0 0.0
  %3237 = vmatpush1.msra.mxu0 0.0
  %3238 = vmatprep.subr.mxu0 0.0
  %3239 = vmatpush1.msra.mxu0 0.0
  %3240 = vmatprep.subr.mxu0 0.0
  %3241 = vmatpush1.msra.mxu0 0.0
  %3242 = vmatprep.subr.mxu0 0.0
  %3243 = vmatpush1.msra.mxu0 0.0
  %3244 = vmatprep.subr.mxu0 0.0
  %3245 = vmatpush1.msra.mxu0 0.0
  %3246 = vmatprep.subr.mxu0 0.0
  %3247 = vmatpush1.msra.mxu0 0.0
  %3248 = vmatprep.subr.mxu0 0.0
  %3249 = vmatpush1.msra.mxu0 0.0
  %3250 = vmatprep.subr.mxu0 0.0
  %3251 = vmatpush1.msra.mxu0 0.0
  %3252 = vmatprep.subr.mxu0 0.0
  %3253 = vmatpush1.msra.mxu0 0.0
  %3254 = vmatprep.subr.mxu0 0.0
  %3255 = vmatpush1.msra.mxu0 0.0
  %3256 = vmatprep.subr.mxu0 0.0
  %3257 = vmatpush1.msra.mxu0 0.0
  %3258 = vmatprep.subr.mxu0 0.0
  %3259 = vmatpush1.msra.mxu0 0.0
  %3260 = vmatprep.subr.mxu0 0.0
  %3261 = vmatpush1.msra.mxu0 0.0
  %3262 = vmatprep.subr.mxu0 0.0
  %3263 = vmatpush1.msra.mxu0 0.0
  %3264 = vmatprep.subr.mxu0 0.0
  %3265 = vmatpush1.msra.mxu0 0.0
  %3266 = vmatprep.subr.mxu0 0.0
  %3267 = vmatpush1.msra.mxu0 0.0
  %3268 = vmatprep.subr.mxu0 0.0
  %3269 = vmatpush1.msra.mxu0 0.0
  %3270 = vmatprep.subr.mxu0 0.0
  %3271 = vmatpush1.msra.mxu0 0.0
  %3272 = vmatprep.subr.mxu0 0.0
  %3273 = vmatpush1.msra.mxu0 0.0
  %3274 = vmatprep.mubr.f32.mxu0 0.0
  %3275 = vmatmul.mubr.f32.gmra.mrb[0].mxu0 %v3119
  %v3276 = vpop.f32.mrb[0].mxu0
  %v3277 = vadd.f32 0.0, %v3276
  %v3278 = vpop.f32.mrb[0].mxu0
  %v3279 = vadd.f32 0.0, %v3278
  %3280 = vdwg.mxu0
  %3281 = vmatprep.subr.mxu0 %v3132
  %3282 = vmatpush1.msra.mxu0 %v3130
  %3283 = vmatprep.subr.mxu0 0.0
  %3284 = vmatpush1.msra.mxu0 0.0
  %3285 = vmatprep.subr.mxu0 0.0
  %3286 = vmatpush1.msra.mxu0 0.0
  %3287 = vmatprep.subr.mxu0 0.0
  %3288 = vmatpush1.msra.mxu0 0.0
  %3289 = vmatprep.subr.mxu0 0.0
  %3290 = vmatpush1.msra.mxu0 0.0
  %3291 = vmatprep.subr.mxu0 0.0
  %3292 = vmatpush1.msra.mxu0 0.0
  %3293 = vmatprep.subr.mxu0 0.0
  %3294 = vmatpush1.msra.mxu0 0.0
  %3295 = vmatprep.subr.mxu0 0.0
  %3296 = vmatpush1.msra.mxu0 0.0
  %3297 = vmatprep.subr.mxu0 0.0
  %3298 = vmatpush1.msra.mxu0 0.0
  %3299 = vmatprep.subr.mxu0 0.0
  %3300 = vmatpush1.msra.mxu0 0.0
  %3301 = vmatprep.subr.mxu0 0.0
  %3302 = vmatpush1.msra.mxu0 0.0
  %3303 = vmatprep.subr.mxu0 0.0
  %3304 = vmatpush1.msra.mxu0 0.0
  %3305 = vmatprep.subr.mxu0 0.0
  %3306 = vmatpush1.msra.mxu0 0.0
  %3307 = vmatprep.subr.mxu0 0.0
  %3308 = vmatpush1.msra.mxu0 0.0
  %3309 = vmatprep.subr.mxu0 0.0
  %3310 = vmatpush1.msra.mxu0 0.0
  %3311 = vmatprep.subr.mxu0 0.0
  %3312 = vmatpush1.msra.mxu0 0.0
  %3313 = vmatprep.subr.mxu0 0.0
  %3314 = vmatpush1.msra.mxu0 0.0
  %3315 = vmatprep.subr.mxu0 0.0
  %3316 = vmatpush1.msra.mxu0 0.0
  %3317 = vmatprep.subr.mxu0 0.0
  %3318 = vmatpush1.msra.mxu0 0.0
  %3319 = vmatprep.subr.mxu0 0.0
  %3320 = vmatpush1.msra.mxu0 0.0
  %3321 = vmatprep.subr.mxu0 0.0
  %3322 = vmatpush1.msra.mxu0 0.0
  %3323 = vmatprep.subr.mxu0 0.0
  %3324 = vmatpush1.msra.mxu0 0.0
  %3325 = vmatprep.subr.mxu0 0.0
  %3326 = vmatpush1.msra.mxu0 0.0
  %3327 = vmatprep.subr.mxu0 0.0
  %3328 = vmatpush1.msra.mxu0 0.0
  %3329 = vmatprep.subr.mxu0 0.0
  %3330 = vmatpush1.msra.mxu0 0.0
  %3331 = vmatprep.subr.mxu0 0.0
  %3332 = vmatpush1.msra.mxu0 0.0
  %3333 = vmatprep.subr.mxu0 0.0
  %3334 = vmatpush1.msra.mxu0 0.0
  %3335 = vmatprep.subr.mxu0 0.0
  %3336 = vmatpush1.msra.mxu0 0.0
  %3337 = vmatprep.subr.mxu0 0.0
  %3338 = vmatpush1.msra.mxu0 0.0
  %3339 = vmatprep.subr.mxu0 0.0
  %3340 = vmatpush1.msra.mxu0 0.0
  %3341 = vmatprep.subr.mxu0 0.0
  %3342 = vmatpush1.msra.mxu0 0.0
  %3343 = vmatprep.subr.mxu0 0.0
  %3344 = vmatpush1.msra.mxu0 0.0
  %3345 = vmatprep.mubr.f32.mxu0 0.0
  %3346 = vmatmul.mubr.f32.gmra.mrb[0].mxu0 %v3119
  %v3347 = vpop.f32.mrb[0].mxu0
  %v3348 = vadd.f32 0.0, %v3347
  %v3349 = vpop.f32.mrb[0].mxu0
  %v3350 = vadd.f32 0.0, %v3349
  %3351 = vdwg.mxu0
  %3352 = vmatprep.subr.mxu0 %v3137
  %3353 = vmatpush1.msra.mxu0 %v3134
  %3354 = vmatprep.subr.mxu0 0.0
  %3355 = vmatpush1.msra.mxu0 0.0
  %3356 = vmatprep.subr.mxu0 0.0
  %3357 = vmatpush1.msra.mxu0 0.0
  %3358 = vmatprep.subr.mxu0 0.0
  %3359 = vmatpush1.msra.mxu0 0.0
  %3360 = vmatprep.subr.mxu0 0.0
  %3361 = vmatpush1.msra.mxu0 0.0
  %3362 = vmatprep.subr.mxu0 0.0
  %3363 = vmatpush1.msra.mxu0 0.0
  %3364 = vmatprep.subr.mxu0 0.0
  %3365 = vmatpush1.msra.mxu0 0.0
  %3366 = vmatprep.subr.mxu0 0.0
  %3367 = vmatpush1.msra.mxu0 0.0
  %3368 = vmatprep.subr.mxu0 0.0
  %3369 = vmatpush1.msra.mxu0 0.0
  %3370 = vmatprep.subr.mxu0 0.0
  %3371 = vmatpush1.msra.mxu0 0.0
  %3372 = vmatprep.subr.mxu0 0.0
  %3373 = vmatpush1.msra.mxu0 0.0
  %3374 = vmatprep.subr.mxu0 0.0
  %3375 = vmatpush1.msra.mxu0 0.0
  %3376 = vmatprep.subr.mxu0 0.0
  %3377 = vmatpush1.msra.mxu0 0.0
  %3378 = vmatprep.subr.mxu0 0.0
  %3379 = vmatpush1.msra.mxu0 0.0
  %3380 = vmatprep.subr.mxu0 0.0
  %3381 = vmatpush1.msra.mxu0 0.0
  %3382 = vmatprep.subr.mxu0 0.0
  %3383 = vmatpush1.msra.mxu0 0.0
  %3384 = vmatprep.subr.mxu0 0.0
  %3385 = vmatpush1.msra.mxu0 0.0
  %3386 = vmatprep.subr.mxu0 0.0
  %3387 = vmatpush1.msra.mxu0 0.0
  %3388 = vmatprep.subr.mxu0 0.0
  %3389 = vmatpush1.msra.mxu0 0.0
  %3390 = vmatprep.subr.mxu0 0.0
  %3391 = vmatpush1.msra.mxu0 0.0
  %3392 = vmatprep.subr.mxu0 0.0
  %3393 = vmatpush1.msra.mxu0 0.0
  %3394 = vmatprep.subr.mxu0 0.0
  %3395 = vmatpush1.msra.mxu0 0.0
  %3396 = vmatprep.subr.mxu0 0.0
  %3397 = vmatpush1.msra.mxu0 0.0
  %3398 = vmatprep.subr.mxu0 0.0
  %3399 = vmatpush1.msra.mxu0 0.0
  %3400 = vmatprep.subr.mxu0 0.0
  %3401 = vmatpush1.msra.mxu0 0.0
  %3402 = vmatprep.subr.mxu0 0.0
  %3403 = vmatpush1.msra.mxu0 0.0
  %3404 = vmatprep.subr.mxu0 0.0
  %3405 = vmatpush1.msra.mxu0 0.0
  %3406 = vmatprep.subr.mxu0 0.0
  %3407 = vmatpush1.msra.mxu0 0.0
  %3408 = vmatprep.subr.mxu0 0.0
  %3409 = vmatpush1.msra.mxu0 0.0
  %3410 = vmatprep.subr.mxu0 0.0
  %3411 = vmatpush1.msra.mxu0 0.0
  %3412 = vmatprep.subr.mxu0 0.0
  %3413 = vmatpush1.msra.mxu0 0.0
  %3414 = vmatprep.subr.mxu0 0.0
  %3415 = vmatpush1.msra.mxu0 0.0
  %3416 = vmatprep.mubr.f32.mxu0 0.0
  %3417 = vmatmul.mubr.f32.gmra.mrb[0].mxu0 %v3119
  %v3418 = vpop.f32.mrb[0].mxu0
  %v3419 = vadd.f32 0.0, %v3418
  %v3420 = vpop.f32.mrb[0].mxu0
  %v3421 = vadd.f32 0.0, %v3420
  %3422 = vdwg.mxu0
  %v3424 = vsel %vm3117, %v3080, 0
  %v3426 = vsel %vm3121, %v3072, 0
  %v3428 = vsel %vm3121, %v3073, 0
  %v3430 = vsel %vm3121, %v3074, 0
  %v3432 = vsel %vm3121, %v3075, 0
  %v3434 = vsel %vm3121, %v3076, 0
  %v3436 = vsel %vm3121, %v3077, 0
  %v3438 = vsel %vm3121, %v3078, 0
  %v3440 = vsel %vm3121, %v3079, 0
  %3442 = vmatprep.subr.mxu0 %v3428
  %3443 = vmatpush1.msra.mxu0 %v3426
  %3444 = vmatprep.subr.mxu0 0.0
  %3445 = vmatpush1.msra.mxu0 0.0
  %3446 = vmatprep.subr.mxu0 0.0
  %3447 = vmatpush1.msra.mxu0 0.0
  %3448 = vmatprep.subr.mxu0 0.0
  %3449 = vmatpush1.msra.mxu0 0.0
  %3450 = vmatprep.subr.mxu0 0.0
  %3451 = vmatpush1.msra.mxu0 0.0
  %3452 = vmatprep.subr.mxu0 0.0
  %3453 = vmatpush1.msra.mxu0 0.0
  %3454 = vmatprep.subr.mxu0 0.0
  %3455 = vmatpush1.msra.mxu0 0.0
  %3456 = vmatprep.subr.mxu0 0.0
  %3457 = vmatpush1.msra.mxu0 0.0
  %3458 = vmatprep.subr.mxu0 0.0
  %3459 = vmatpush1.msra.mxu0 0.0
  %3460 = vmatprep.subr.mxu0 0.0
  %3461 = vmatpush1.msra.mxu0 0.0
  %3462 = vmatprep.subr.mxu0 0.0
  %3463 = vmatpush1.msra.mxu0 0.0
  %3464 = vmatprep.subr.mxu0 0.0
  %3465 = vmatpush1.msra.mxu0 0.0
  %3466 = vmatprep.subr.mxu0 0.0
  %3467 = vmatpush1.msra.mxu0 0.0
  %3468 = vmatprep.subr.mxu0 0.0
  %3469 = vmatpush1.msra.mxu0 0.0
  %3470 = vmatprep.subr.mxu0 0.0
  %3471 = vmatpush1.msra.mxu0 0.0
  %3472 = vmatprep.subr.mxu0 0.0
  %3473 = vmatpush1.msra.mxu0 0.0
  %3474 = vmatprep.subr.mxu0 0.0
  %3475 = vmatpush1.msra.mxu0 0.0
  %3476 = vmatprep.subr.mxu0 0.0
  %3477 = vmatpush1.msra.mxu0 0.0
  %3478 = vmatprep.subr.mxu0 0.0
  %3479 = vmatpush1.msra.mxu0 0.0
  %3480 = vmatprep.subr.mxu0 0.0
  %3481 = vmatpush1.msra.mxu0 0.0
  %3482 = vmatprep.subr.mxu0 0.0
  %3483 = vmatpush1.msra.mxu0 0.0
  %3484 = vmatprep.subr.mxu0 0.0
  %3485 = vmatpush1.msra.mxu0 0.0
  %3486 = vmatprep.subr.mxu0 0.0
  %3487 = vmatpush1.msra.mxu0 0.0
  %3488 = vmatprep.subr.mxu0 0.0
  %3489 = vmatpush1.msra.mxu0 0.0
  %3490 = vmatprep.subr.mxu0 0.0
  %3491 = vmatpush1.msra.mxu0 0.0
  %3492 = vmatprep.subr.mxu0 0.0
  %3493 = vmatpush1.msra.mxu0 0.0
  %3494 = vmatprep.subr.mxu0 0.0
  %3495 = vmatpush1.msra.mxu0 0.0
  %3496 = vmatprep.subr.mxu0 0.0
  %3497 = vmatpush1.msra.mxu0 0.0
  %3498 = vmatprep.subr.mxu0 0.0
  %3499 = vmatpush1.msra.mxu0 0.0
  %3500 = vmatprep.subr.mxu0 0.0
  %3501 = vmatpush1.msra.mxu0 0.0
  %3502 = vmatprep.subr.mxu0 0.0
  %3503 = vmatpush1.msra.mxu0 0.0
  %3504 = vmatprep.subr.mxu0 0.0
  %3505 = vmatpush1.msra.mxu0 0.0
  %3506 = vmatprep.mubr.f32.mxu0 0.0
  %3507 = vmatmul.mubr.f32.gmra.mrb[0].mxu0 %v3424
  %v3508 = vpop.f32.mrb[0].mxu0
  %v3509 = vadd.f32 %v3206, %v3508
  %v3510 = vpop.f32.mrb[0].mxu0
  %v3511 = vadd.f32 %v3208, %v3510
  %3512 = vdwg.mxu0
  %3513 = vmatprep.subr.mxu0 %v3432
  %3514 = vmatpush1.msra.mxu0 %v3430
  %3515 = vmatprep.subr.mxu0 0.0
  %3516 = vmatpush1.msra.mxu0 0.0
  %3517 = vmatprep.subr.mxu0 0.0
  %3518 = vmatpush1.msra.mxu0 0.0
  %3519 = vmatprep.subr.mxu0 0.0
  %3520 = vmatpush1.msra.mxu0 0.0
  %3521 = vmatprep.subr.mxu0 0.0
  %3522 = vmatpush1.msra.mxu0 0.0
  %3523 = vmatprep.subr.mxu0 0.0
  %3524 = vmatpush1.msra.mxu0 0.0
  %3525 = vmatprep.subr.mxu0 0.0
  %3526 = vmatpush1.msra.mxu0 0.0
  %3527 = vmatprep.subr.mxu0 0.0
  %3528 = vmatpush1.msra.mxu0 0.0
  %3529 = vmatprep.subr.mxu0 0.0
  %3530 = vmatpush1.msra.mxu0 0.0
  %3531 = vmatprep.subr.mxu0 0.0
  %3532 = vmatpush1.msra.mxu0 0.0
  %3533 = vmatprep.subr.mxu0 0.0
  %3534 = vmatpush1.msra.mxu0 0.0
  %3535 = vmatprep.subr.mxu0 0.0
  %3536 = vmatpush1.msra.mxu0 0.0
  %3537 = vmatprep.subr.mxu0 0.0
  %3538 = vmatpush1.msra.mxu0 0.0
  %3539 = vmatprep.subr.mxu0 0.0
  %3540 = vmatpush1.msra.mxu0 0.0
  %3541 = vmatprep.subr.mxu0 0.0
  %3542 = vmatpush1.msra.mxu0 0.0
  %3543 = vmatprep.subr.mxu0 0.0
  %3544 = vmatpush1.msra.mxu0 0.0
  %3545 = vmatprep.subr.mxu0 0.0
  %3546 = vmatpush1.msra.mxu0 0.0
  %3547 = vmatprep.subr.mxu0 0.0
  %3548 = vmatpush1.msra.mxu0 0.0
  %3549 = vmatprep.subr.mxu0 0.0
  %3550 = vmatpush1.msra.mxu0 0.0
  %3551 = vmatprep.subr.mxu0 0.0
  %3552 = vmatpush1.msra.mxu0 0.0
  %3553 = vmatprep.subr.mxu0 0.0
  %3554 = vmatpush1.msra.mxu0 0.0
  %3555 = vmatprep.subr.mxu0 0.0
  %3556 = vmatpush1.msra.mxu0 0.0
  %3557 = vmatprep.subr.mxu0 0.0
  %3558 = vmatpush1.msra.mxu0 0.0
  %3559 = vmatprep.subr.mxu0 0.0
  %3560 = vmatpush1.msra.mxu0 0.0
  %3561 = vmatprep.subr.mxu0 0.0
  %3562 = vmatpush1.msra.mxu0 0.0
  %3563 = vmatprep.subr.mxu0 0.0
  %3564 = vmatpush1.msra.mxu0 0.0
  %3565 = vmatprep.subr.mxu0 0.0
  %3566 = vmatpush1.msra.mxu0 0.0
  %3567 = vmatprep.subr.mxu0 0.0
  %3568 = vmatpush1.msra.mxu0 0.0
  %3569 = vmatprep.subr.mxu0 0.0
  %3570 = vmatpush1.msra.mxu0 0.0
  %3571 = vmatprep.subr.mxu0 0.0
  %3572 = vmatpush1.msra.mxu0 0.0
  %3573 = vmatprep.subr.mxu0 0.0
  %3574 = vmatpush1.msra.mxu0 0.0
  %3575 = vmatprep.subr.mxu0 0.0
  %3576 = vmatpush1.msra.mxu0 0.0
  %3577 = vmatprep.mubr.f32.mxu0 0.0
  %3578 = vmatmul.mubr.f32.gmra.mrb[0].mxu0 %v3424
  %v3579 = vpop.f32.mrb[0].mxu0
  %v3580 = vadd.f32 %v3277, %v3579
  %v3581 = vpop.f32.mrb[0].mxu0
  %v3582 = vadd.f32 %v3279, %v3581
  %3583 = vdwg.mxu0
  %3584 = vmatprep.subr.mxu0 %v3436
  %3585 = vmatpush1.msra.mxu0 %v3434
  %3586 = vmatprep.subr.mxu0 0.0
  %3587 = vmatpush1.msra.mxu0 0.0
  %3588 = vmatprep.subr.mxu0 0.0
  %3589 = vmatpush1.msra.mxu0 0.0
  %3590 = vmatprep.subr.mxu0 0.0
  %3591 = vmatpush1.msra.mxu0 0.0
  %3592 = vmatprep.subr.mxu0 0.0
  %3593 = vmatpush1.msra.mxu0 0.0
  %3594 = vmatprep.subr.mxu0 0.0
  %3595 = vmatpush1.msra.mxu0 0.0
  %3596 = vmatprep.subr.mxu0 0.0
  %3597 = vmatpush1.msra.mxu0 0.0
  %3598 = vmatprep.subr.mxu0 0.0
  %3599 = vmatpush1.msra.mxu0 0.0
  %3600 = vmatprep.subr.mxu0 0.0
  %3601 = vmatpush1.msra.mxu0 0.0
  %3602 = vmatprep.subr.mxu0 0.0
  %3603 = vmatpush1.msra.mxu0 0.0
  %3604 = vmatprep.subr.mxu0 0.0
  %3605 = vmatpush1.msra.mxu0 0.0
  %3606 = vmatprep.subr.mxu0 0.0
  %3607 = vmatpush1.msra.mxu0 0.0
  %3608 = vmatprep.subr.mxu0 0.0
  %3609 = vmatpush1.msra.mxu0 0.0
  %3610 = vmatprep.subr.mxu0 0.0
  %3611 = vmatpush1.msra.mxu0 0.0
  %3612 = vmatprep.subr.mxu0 0.0
  %3613 = vmatpush1.msra.mxu0 0.0
  %3614 = vmatprep.subr.mxu0 0.0
  %3615 = vmatpush1.msra.mxu0 0.0
  %3616 = vmatprep.subr.mxu0 0.0
  %3617 = vmatpush1.msra.mxu0 0.0
  %3618 = vmatprep.subr.mxu0 0.0
  %3619 = vmatpush1.msra.mxu0 0.0
  %3620 = vmatprep.subr.mxu0 0.0
  %3621 = vmatpush1.msra.mxu0 0.0
  %3622 = vmatprep.subr.mxu0 0.0
  %3623 = vmatpush1.msra.mxu0 0.0
  %3624 = vmatprep.subr.mxu0 0.0
  %3625 = vmatpush1.msra.mxu0 0.0
  %3626 = vmatprep.subr.mxu0 0.0
  %3627 = vmatpush1.msra.mxu0 0.0
  %3628 = vmatprep.subr.mxu0 0.0
  %3629 = vmatpush1.msra.mxu0 0.0
  %3630 = vmatprep.subr.mxu0 0.0
  %3631 = vmatpush1.msra.mxu0 0.0
  %3632 = vmatprep.subr.mxu0 0.0
  %3633 = vmatpush1.msra.mxu0 0.0
  %3634 = vmatprep.subr.mxu0 0.0
  %3635 = vmatpush1.msra.mxu0 0.0
  %3636 = vmatprep.subr.mxu0 0.0
  %3637 = vmatpush1.msra.mxu0 0.0
  %3638 = vmatprep.subr.mxu0 0.0
  %3639 = vmatpush1.msra.mxu0 0.0
  %3640 = vmatprep.subr.mxu0 0.0
  %3641 = vmatpush1.msra.mxu0 0.0
  %3642 = vmatprep.subr.mxu0 0.0
  %3643 = vmatpush1.msra.mxu0 0.0
  %3644 = vmatprep.subr.mxu0 0.0
  %3645 = vmatpush1.msra.mxu0 0.0
  %3646 = vmatprep.subr.mxu0 0.0
  %3647 = vmatpush1.msra.mxu0 0.0
  %3648 = vmatprep.mubr.f32.mxu0 0.0
  %3649 = vmatmul.mubr.f32.gmra.mrb[0].mxu0 %v3424
  %v3650 = vpop.f32.mrb[0].mxu0
  %v3651 = vadd.f32 %v3348, %v3650
  %v3652 = vpop.f32.mrb[0].mxu0
  %v3653 = vadd.f32 %v3350, %v3652
  %3654 = vdwg.mxu0
  %3655 = vmatprep.subr.mxu0 %v3440
  %3656 = vmatpush1.msra.mxu0 %v3438
  %3657 = vmatprep.subr.mxu0 0.0
  %3658 = vmatpush1.msra.mxu0 0.0
  %3659 = vmatprep.subr.mxu0 0.0
  %3660 = vmatpush1.msra.mxu0 0.0
  %3661 = vmatprep.subr.mxu0 0.0
  %3662 = vmatpush1.msra.mxu0 0.0
  %3663 = vmatprep.subr.mxu0 0.0
  %3664 = vmatpush1.msra.mxu0 0.0
  %3665 = vmatprep.subr.mxu0 0.0
  %3666 = vmatpush1.msra.mxu0 0.0
  %3667 = vmatprep.subr.mxu0 0.0
  %3668 = vmatpush1.msra.mxu0 0.0
  %3669 = vmatprep.subr.mxu0 0.0
  %3670 = vmatpush1.msra.mxu0 0.0
  %3671 = vmatprep.subr.mxu0 0.0
  %3672 = vmatpush1.msra.mxu0 0.0
  %3673 = vmatprep.subr.mxu0 0.0
  %3674 = vmatpush1.msra.mxu0 0.0
  %3675 = vmatprep.subr.mxu0 0.0
  %3676 = vmatpush1.msra.mxu0 0.0
  %3677 = vmatprep.subr.mxu0 0.0
  %3678 = vmatpush1.msra.mxu0 0.0
  %3679 = vmatprep.subr.mxu0 0.0
  %3680 = vmatpush1.msra.mxu0 0.0
  %3681 = vmatprep.subr.mxu0 0.0
  %3682 = vmatpush1.msra.mxu0 0.0
  %3683 = vmatprep.subr.mxu0 0.0
  %3684 = vmatpush1.msra.mxu0 0.0
  %3685 = vmatprep.subr.mxu0 0.0
  %3686 = vmatpush1.msra.mxu0 0.0
  %3687 = vmatprep.subr.mxu0 0.0
  %3688 = vmatpush1.msra.mxu0 0.0
  %3689 = vmatprep.subr.mxu0 0.0
  %3690 = vmatpush1.msra.mxu0 0.0
  %3691 = vmatprep.subr.mxu0 0.0
  %3692 = vmatpush1.msra.mxu0 0.0
  %3693 = vmatprep.subr.mxu0 0.0
  %3694 = vmatpush1.msra.mxu0 0.0
  %3695 = vmatprep.subr.mxu0 0.0
  %3696 = vmatpush1.msra.mxu0 0.0
  %3697 = vmatprep.subr.mxu0 0.0
  %3698 = vmatpush1.msra.mxu0 0.0
  %3699 = vmatprep.subr.mxu0 0.0
  %3700 = vmatpush1.msra.mxu0 0.0
  %3701 = vmatprep.subr.mxu0 0.0
  %3702 = vmatpush1.msra.mxu0 0.0
  %3703 = vmatprep.subr.mxu0 0.0
  %3704 = vmatpush1.msra.mxu0 0.0
  %3705 = vmatprep.subr.mxu0 0.0
  %3706 = vmatpush1.msra.mxu0 0.0
  %3707 = vmatprep.subr.mxu0 0.0
  %3708 = vmatpush1.msra.mxu0 0.0
  %3709 = vmatprep.subr.mxu0 0.0
  %3710 = vmatpush1.msra.mxu0 0.0
  %3711 = vmatprep.subr.mxu0 0.0
  %3712 = vmatpush1.msra.mxu0 0.0
  %3713 = vmatprep.subr.mxu0 0.0
  %3714 = vmatpush1.msra.mxu0 0.0
  %3715 = vmatprep.subr.mxu0 0.0
  %3716 = vmatpush1.msra.mxu0 0.0
  %3717 = vmatprep.subr.mxu0 0.0
  %3718 = vmatpush1.msra.mxu0 0.0
  %3719 = vmatprep.mubr.f32.mxu0 0.0
  %3720 = vmatmul.mubr.f32.gmra.mrb[0].mxu0 %v3424
  %v3721 = vpop.f32.mrb[0].mxu0
  %v3722 = vadd.f32 %v3419, %v3721
  %v3723 = vpop.f32.mrb[0].mxu0
  %v3724 = vadd.f32 %v3421, %v3723
  %3725 = vdwg.mxu0
  %s3726 = scalar_lea.vmem %s3, 16
  %v3727 = vld [vmem:[%s3726] sm:$0xff]
  %3728 = vrot.lane.b32.xlu0 %v3072, 126
  %v3729 = vpop.permute.xlu0 %3728
  %3730 = vrot.lane.b32.xlu0 %v3073, 126
  %v3731 = vpop.permute.xlu0 %3730
  %3732 = vrot.lane.b32.xlu0 %v3074, 126
  %v3733 = vpop.permute.xlu0 %3732
  %3734 = vrot.lane.b32.xlu0 %v3075, 126
  %v3735 = vpop.permute.xlu0 %3734
  %3736 = vrot.lane.b32.xlu0 %v3076, 126
  %v3737 = vpop.permute.xlu0 %3736
  %3738 = vrot.lane.b32.xlu0 %v3077, 126
  %v3739 = vpop.permute.xlu0 %3738
  %3740 = vrot.lane.b32.xlu0 %v3078, 126
  %v3741 = vpop.permute.xlu0 %3740
  %3742 = vrot.lane.b32.xlu0 %v3079, 126
  %v3743 = vpop.permute.xlu0 %3742
  %v3744 = vsel %vm689, %v3729, %v3731
  %v3745 = vsel %vm689, %v3731, %v3733
  %v3746 = vsel %vm689, %v3733, %v3735
  %v3747 = vsel %vm689, %v3735, %v3737
  %v3748 = vsel %vm689, %v3737, %v3739
  %v3749 = vsel %vm689, %v3739, %v3741
  %v3750 = vsel %vm689, %v3741, %v3743
  %v3753 = vsel %vm689, %v3743, %v3729
  %v3755 = vsel %vm3117, %v3727, 0
  %v3757 = vsel %vm3121, %v3744, 0
  %v3759 = vsel %vm3121, %v3745, 0
  %v3761 = vsel %vm3121, %v3746, 0
  %v3763 = vsel %vm3121, %v3747, 0
  %v3765 = vsel %vm3121, %v3748, 0
  %v3767 = vsel %vm3121, %v3749, 0
  %v3769 = vsel %vm3121, %v3750, 0
  %v3772 = vsel %vm3121, %v3753, 0
  %3774 = vmatprep.subr.mxu0 %v3759
  %3775 = vmatpush1.msra.mxu0 %v3757
  %3776 = vmatprep.subr.mxu0 0.0
  %3777 = vmatpush1.msra.mxu0 0.0
  %3778 = vmatprep.subr.mxu0 0.0
  %3779 = vmatpush1.msra.mxu0 0.0
  %3780 = vmatprep.subr.mxu0 0.0
  %3781 = vmatpush1.msra.mxu0 0.0
  %3782 = vmatprep.subr.mxu0 0.0
  %3783 = vmatpush1.msra.mxu0 0.0
  %3784 = vmatprep.subr.mxu0 0.0
  %3785 = vmatpush1.msra.mxu0 0.0
  %3786 = vmatprep.subr.mxu0 0.0
  %3787 = vmatpush1.msra.mxu0 0.0
  %3788 = vmatprep.subr.mxu0 0.0
  %3789 = vmatpush1.msra.mxu0 0.0
  %3790 = vmatprep.subr.mxu0 0.0
  %3791 = vmatpush1.msra.mxu0 0.0
  %3792 = vmatprep.subr.mxu0 0.0
  %3793 = vmatpush1.msra.mxu0 0.0
  %3794 = vmatprep.subr.mxu0 0.0
  %3795 = vmatpush1.msra.mxu0 0.0
  %3796 = vmatprep.subr.mxu0 0.0
  %3797 = vmatpush1.msra.mxu0 0.0
  %3798 = vmatprep.subr.mxu0 0.0
  %3799 = vmatpush1.msra.mxu0 0.0
  %3800 = vmatprep.subr.mxu0 0.0
  %3801 = vmatpush1.msra.mxu0 0.0
  %3802 = vmatprep.subr.mxu0 0.0
  %3803 = vmatpush1.msra.mxu0 0.0
  %3804 = vmatprep.subr.mxu0 0.0
  %3805 = vmatpush1.msra.mxu0 0.0
  %3806 = vmatprep.subr.mxu0 0.0
  %3807 = vmatpush1.msra.mxu0 0.0
  %3808 = vmatprep.subr.mxu0 0.0
  %3809 = vmatpush1.msra.mxu0 0.0
  %3810 = vmatprep.subr.mxu0 0.0
  %3811 = vmatpush1.msra.mxu0 0.0
  %3812 = vmatprep.subr.mxu0 0.0
  %3813 = vmatpush1.msra.mxu0 0.0
  %3814 = vmatprep.subr.mxu0 0.0
  %3815 = vmatpush1.msra.mxu0 0.0
  %3816 = vmatprep.subr.mxu0 0.0
  %3817 = vmatpush1.msra.mxu0 0.0
  %3818 = vmatprep.subr.mxu0 0.0
  %3819 = vmatpush1.msra.mxu0 0.0
  %3820 = vmatprep.subr.mxu0 0.0
  %3821 = vmatpush1.msra.mxu0 0.0
  %3822 = vmatprep.subr.mxu0 0.0
  %3823 = vmatpush1.msra.mxu0 0.0
  %3824 = vmatprep.subr.mxu0 0.0
  %3825 = vmatpush1.msra.mxu0 0.0
  %3826 = vmatprep.subr.mxu0 0.0
  %3827 = vmatpush1.msra.mxu0 0.0
  %3828 = vmatprep.subr.mxu0 0.0
  %3829 = vmatpush1.msra.mxu0 0.0
  %3830 = vmatprep.subr.mxu0 0.0
  %3831 = vmatpush1.msra.mxu0 0.0
  %3832 = vmatprep.subr.mxu0 0.0
  %3833 = vmatpush1.msra.mxu0 0.0
  %3834 = vmatprep.subr.mxu0 0.0
  %3835 = vmatpush1.msra.mxu0 0.0
  %3836 = vmatprep.subr.mxu0 0.0
  %3837 = vmatpush1.msra.mxu0 0.0
  %3838 = vmatprep.mubr.f32.mxu0 0.0
  %3839 = vmatmul.mubr.f32.gmra.mrb[0].mxu0 %v3755
  %v3840 = vpop.f32.mrb[0].mxu0
  %v3841 = vadd.f32 0.0, %v3840
  %v3842 = vpop.f32.mrb[0].mxu0
  %v3843 = vadd.f32 0.0, %v3842
  %3844 = vdwg.mxu0
  %3845 = vmatprep.subr.mxu0 %v3763
  %3846 = vmatpush1.msra.mxu0 %v3761
  %3847 = vmatprep.subr.mxu0 0.0
  %3848 = vmatpush1.msra.mxu0 0.0
  %3849 = vmatprep.subr.mxu0 0.0
  %3850 = vmatpush1.msra.mxu0 0.0
  %3851 = vmatprep.subr.mxu0 0.0
  %3852 = vmatpush1.msra.mxu0 0.0
  %3853 = vmatprep.subr.mxu0 0.0
  %3854 = vmatpush1.msra.mxu0 0.0
  %3855 = vmatprep.subr.mxu0 0.0
  %3856 = vmatpush1.msra.mxu0 0.0
  %3857 = vmatprep.subr.mxu0 0.0
  %3858 = vmatpush1.msra.mxu0 0.0
  %3859 = vmatprep.subr.mxu0 0.0
  %3860 = vmatpush1.msra.mxu0 0.0
  %3861 = vmatprep.subr.mxu0 0.0
  %3862 = vmatpush1.msra.mxu0 0.0
  %3863 = vmatprep.subr.mxu0 0.0
  %3864 = vmatpush1.msra.mxu0 0.0
  %3865 = vmatprep.subr.mxu0 0.0
  %3866 = vmatpush1.msra.mxu0 0.0
  %3867 = vmatprep.subr.mxu0 0.0
  %3868 = vmatpush1.msra.mxu0 0.0
  %3869 = vmatprep.subr.mxu0 0.0
  %3870 = vmatpush1.msra.mxu0 0.0
  %3871 = vmatprep.subr.mxu0 0.0
  %3872 = vmatpush1.msra.mxu0 0.0
  %3873 = vmatprep.subr.mxu0 0.0
  %3874 = vmatpush1.msra.mxu0 0.0
  %3875 = vmatprep.subr.mxu0 0.0
  %3876 = vmatpush1.msra.mxu0 0.0
  %3877 = vmatprep.subr.mxu0 0.0
  %3878 = vmatpush1.msra.mxu0 0.0
  %3879 = vmatprep.subr.mxu0 0.0
  %3880 = vmatpush1.msra.mxu0 0.0
  %3881 = vmatprep.subr.mxu0 0.0
  %3882 = vmatpush1.msra.mxu0 0.0
  %3883 = vmatprep.subr.mxu0 0.0
  %3884 = vmatpush1.msra.mxu0 0.0
  %3885 = vmatprep.subr.mxu0 0.0
  %3886 = vmatpush1.msra.mxu0 0.0
  %3887 = vmatprep.subr.mxu0 0.0
  %3888 = vmatpush1.msra.mxu0 0.0
  %3889 = vmatprep.subr.mxu0 0.0
  %3890 = vmatpush1.msra.mxu0 0.0
  %3891 = vmatprep.subr.mxu0 0.0
  %3892 = vmatpush1.msra.mxu0 0.0
  %3893 = vmatprep.subr.mxu0 0.0
  %3894 = vmatpush1.msra.mxu0 0.0
  %3895 = vmatprep.subr.mxu0 0.0
  %3896 = vmatpush1.msra.mxu0 0.0
  %3897 = vmatprep.subr.mxu0 0.0
  %3898 = vmatpush1.msra.mxu0 0.0
  %3899 = vmatprep.subr.mxu0 0.0
  %3900 = vmatpush1.msra.mxu0 0.0
  %3901 = vmatprep.subr.mxu0 0.0
  %3902 = vmatpush1.msra.mxu0 0.0
  %3903 = vmatprep.subr.mxu0 0.0
  %3904 = vmatpush1.msra.mxu0 0.0
  %3905 = vmatprep.subr.mxu0 0.0
  %3906 = vmatpush1.msra.mxu0 0.0
  %3907 = vmatprep.subr.mxu0 0.0
  %3908 = vmatpush1.msra.mxu0 0.0
  %3909 = vmatprep.mubr.f32.mxu0 0.0
  %3910 = vmatmul.mubr.f32.gmra.mrb[0].mxu0 %v3755
  %v3911 = vpop.f32.mrb[0].mxu0
  %v3912 = vadd.f32 0.0, %v3911
  %v3913 = vpop.f32.mrb[0].mxu0
  %v3914 = vadd.f32 0.0, %v3913
  %3915 = vdwg.mxu0
  %3916 = vmatprep.subr.mxu0 %v3767
  %3917 = vmatpush1.msra.mxu0 %v3765
  %3918 = vmatprep.subr.mxu0 0.0
  %3919 = vmatpush1.msra.mxu0 0.0
  %3920 = vmatprep.subr.mxu0 0.0
  %3921 = vmatpush1.msra.mxu0 0.0
  %3922 = vmatprep.subr.mxu0 0.0
  %3923 = vmatpush1.msra.mxu0 0.0
  %3924 = vmatprep.subr.mxu0 0.0
  %3925 = vmatpush1.msra.mxu0 0.0
  %3926 = vmatprep.subr.mxu0 0.0
  %3927 = vmatpush1.msra.mxu0 0.0
  %3928 = vmatprep.subr.mxu0 0.0
  %3929 = vmatpush1.msra.mxu0 0.0
  %3930 = vmatprep.subr.mxu0 0.0
  %3931 = vmatpush1.msra.mxu0 0.0
  %3932 = vmatprep.subr.mxu0 0.0
  %3933 = vmatpush1.msra.mxu0 0.0
  %3934 = vmatprep.subr.mxu0 0.0
  %3935 = vmatpush1.msra.mxu0 0.0
  %3936 = vmatprep.subr.mxu0 0.0
  %3937 = vmatpush1.msra.mxu0 0.0
  %3938 = vmatprep.subr.mxu0 0.0
  %3939 = vmatpush1.msra.mxu0 0.0
  %3940 = vmatprep.subr.mxu0 0.0
  %3941 = vmatpush1.msra.mxu0 0.0
  %3942 = vmatprep.subr.mxu0 0.0
  %3943 = vmatpush1.msra.mxu0 0.0
  %3944 = vmatprep.subr.mxu0 0.0
  %3945 = vmatpush1.msra.mxu0 0.0
  %3946 = vmatprep.subr.mxu0 0.0
  %3947 = vmatpush1.msra.mxu0 0.0
  %3948 = vmatprep.subr.mxu0 0.0
  %3949 = vmatpush1.msra.mxu0 0.0
  %3950 = vmatprep.subr.mxu0 0.0
  %3951 = vmatpush1.msra.mxu0 0.0
  %3952 = vmatprep.subr.mxu0 0.0
  %3953 = vmatpush1.msra.mxu0 0.0
  %3954 = vmatprep.subr.mxu0 0.0
  %3955 = vmatpush1.msra.mxu0 0.0
  %3956 = vmatprep.subr.mxu0 0.0
  %3957 = vmatpush1.msra.mxu0 0.0
  %3958 = vmatprep.subr.mxu0 0.0
  %3959 = vmatpush1.msra.mxu0 0.0
  %3960 = vmatprep.subr.mxu0 0.0
  %3961 = vmatpush1.msra.mxu0 0.0
  %3962 = vmatprep.subr.mxu0 0.0
  %3963 = vmatpush1.msra.mxu0 0.0
  %3964 = vmatprep.subr.mxu0 0.0
  %3965 = vmatpush1.msra.mxu0 0.0
  %3966 = vmatprep.subr.mxu0 0.0
  %3967 = vmatpush1.msra.mxu0 0.0
  %3968 = vmatprep.subr.mxu0 0.0
  %3969 = vmatpush1.msra.mxu0 0.0
  %3970 = vmatprep.subr.mxu0 0.0
  %3971 = vmatpush1.msra.mxu0 0.0
  %3972 = vmatprep.subr.mxu0 0.0
  %3973 = vmatpush1.msra.mxu0 0.0
  %3974 = vmatprep.subr.mxu0 0.0
  %3975 = vmatpush1.msra.mxu0 0.0
  %3976 = vmatprep.subr.mxu0 0.0
  %3977 = vmatpush1.msra.mxu0 0.0
  %3978 = vmatprep.subr.mxu0 0.0
  %3979 = vmatpush1.msra.mxu0 0.0
  %3980 = vmatprep.mubr.f32.mxu0 0.0
  %3981 = vmatmul.mubr.f32.gmra.mrb[0].mxu0 %v3755
  %v3982 = vpop.f32.mrb[0].mxu0
  %v3983 = vadd.f32 0.0, %v3982
  %v3984 = vpop.f32.mrb[0].mxu0
  %v3985 = vadd.f32 0.0, %v3984
  %3986 = vdwg.mxu0
  %3987 = vmatprep.subr.mxu0 %v3772
  %3988 = vmatpush1.msra.mxu0 %v3769
  %3989 = vmatprep.subr.mxu0 0.0
  %3990 = vmatpush1.msra.mxu0 0.0
  %3991 = vmatprep.subr.mxu0 0.0
  %3992 = vmatpush1.msra.mxu0 0.0
  %3993 = vmatprep.subr.mxu0 0.0
  %3994 = vmatpush1.msra.mxu0 0.0
  %3995 = vmatprep.subr.mxu0 0.0
  %3996 = vmatpush1.msra.mxu0 0.0
  %3997 = vmatprep.subr.mxu0 0.0
  %3998 = vmatpush1.msra.mxu0 0.0
  %3999 = vmatprep.subr.mxu0 0.0
  %4000 = vmatpush1.msra.mxu0 0.0
  %4001 = vmatprep.subr.mxu0 0.0
  %4002 = vmatpush1.msra.mxu0 0.0
  %4003 = vmatprep.subr.mxu0 0.0
  %4004 = vmatpush1.msra.mxu0 0.0
  %4005 = vmatprep.subr.mxu0 0.0
  %4006 = vmatpush1.msra.mxu0 0.0
  %4007 = vmatprep.subr.mxu0 0.0
  %4008 = vmatpush1.msra.mxu0 0.0
  %4009 = vmatprep.subr.mxu0 0.0
  %4010 = vmatpush1.msra.mxu0 0.0
  %4011 = vmatprep.subr.mxu0 0.0
  %4012 = vmatpush1.msra.mxu0 0.0
  %4013 = vmatprep.subr.mxu0 0.0
  %4014 = vmatpush1.msra.mxu0 0.0
  %4015 = vmatprep.subr.mxu0 0.0
  %4016 = vmatpush1.msra.mxu0 0.0
  %4017 = vmatprep.subr.mxu0 0.0
  %4018 = vmatpush1.msra.mxu0 0.0
  %4019 = vmatprep.subr.mxu0 0.0
  %4020 = vmatpush1.msra.mxu0 0.0
  %4021 = vmatprep.subr.mxu0 0.0
  %4022 = vmatpush1.msra.mxu0 0.0
  %4023 = vmatprep.subr.mxu0 0.0
  %4024 = vmatpush1.msra.mxu0 0.0
  %4025 = vmatprep.subr.mxu0 0.0
  %4026 = vmatpush1.msra.mxu0 0.0
  %4027 = vmatprep.subr.mxu0 0.0
  %4028 = vmatpush1.msra.mxu0 0.0
  %4029 = vmatprep.subr.mxu0 0.0
  %4030 = vmatpush1.msra.mxu0 0.0
  %4031 = vmatprep.subr.mxu0 0.0
  %4032 = vmatpush1.msra.mxu0 0.0
  %4033 = vmatprep.subr.mxu0 0.0
  %4034 = vmatpush1.msra.mxu0 0.0
  %4035 = vmatprep.subr.mxu0 0.0
  %4036 = vmatpush1.msra.mxu0 0.0
  %4037 = vmatprep.subr.mxu0 0.0
  %4038 = vmatpush1.msra.mxu0 0.0
  %4039 = vmatprep.subr.mxu0 0.0
  %4040 = vmatpush1.msra.mxu0 0.0
  %4041 = vmatprep.subr.mxu0 0.0
  %4042 = vmatpush1.msra.mxu0 0.0
  %4043 = vmatprep.subr.mxu0 0.0
  %4044 = vmatpush1.msra.mxu0 0.0
  %4045 = vmatprep.subr.mxu0 0.0
  %4046 = vmatpush1.msra.mxu0 0.0
  %4047 = vmatprep.subr.mxu0 0.0
  %4048 = vmatpush1.msra.mxu0 0.0
  %4049 = vmatprep.subr.mxu0 0.0
  %4050 = vmatpush1.msra.mxu0 0.0
  %4051 = vmatprep.mubr.f32.mxu0 0.0
  %4052 = vmatmul.mubr.f32.gmra.mrb[0].mxu0 %v3755
  %v4053 = vpop.f32.mrb[0].mxu0
  %v4054 = vadd.f32 0.0, %v4053
  %v4055 = vpop.f32.mrb[0].mxu0
  %v4056 = vadd.f32 0.0, %v4055
  %4057 = vdwg.mxu0
  %v4058 = vadd.f32 %v3509, %v3841
  %v4059 = vadd.f32 %v3511, %v3843
  %v4060 = vadd.f32 %v3580, %v3912
  %v4061 = vadd.f32 %v3582, %v3914
  %v4062 = vadd.f32 %v3651, %v3983
  %v4063 = vadd.f32 %v3653, %v3985
  %v4064 = vadd.f32 %v3722, %v4054
  %v4065 = vadd.f32 %v3724, %v4056
  %s4066 = scalar_lea.vmem %s3, 24
  %v4067 = vld [vmem:[%s4066] sm:$0xff]
  %4068 = vrot.lane.b32.xlu0 %v3072, 96
  %v4069 = vpop.permute.xlu0 %4068
  %4070 = vrot.lane.b32.xlu0 %v3073, 96
  %v4071 = vpop.permute.xlu0 %4070
  %4072 = vrot.lane.b32.xlu0 %v3074, 96
  %v4073 = vpop.permute.xlu0 %4072
  %4074 = vrot.lane.b32.xlu0 %v3075, 96
  %v4075 = vpop.permute.xlu0 %4074
  %4076 = vrot.lane.b32.xlu0 %v3076, 96
  %v4077 = vpop.permute.xlu0 %4076
  %4078 = vrot.lane.b32.xlu0 %v3077, 96
  %v4079 = vpop.permute.xlu0 %4078
  %4080 = vrot.lane.b32.xlu0 %v3078, 96
  %v4081 = vpop.permute.xlu0 %4080
  %4082 = vrot.lane.b32.xlu0 %v3079, 96
  %v4083 = vpop.permute.xlu0 %4082
  %v4084 = vsel %vm1030, %v4069, %v4071
  %v4085 = vsel %vm1030, %v4071, %v4073
  %v4086 = vsel %vm1030, %v4073, %v4075
  %v4087 = vsel %vm1030, %v4075, %v4077
  %v4088 = vsel %vm1030, %v4077, %v4079
  %v4089 = vsel %vm1030, %v4079, %v4081
  %v4090 = vsel %vm1030, %v4081, %v4083
  %v4093 = vsel %vm1030, %v4083, %v4069
  %v4095 = vsel %vm3117, %v4067, 0
  %v4097 = vsel %vm3121, %v4084, 0
  %v4099 = vsel %vm3121, %v4085, 0
  %v4101 = vsel %vm3121, %v4086, 0
  %v4103 = vsel %vm3121, %v4087, 0
  %v4105 = vsel %vm3121, %v4088, 0
  %v4107 = vsel %vm3121, %v4089, 0
  %v4109 = vsel %vm3121, %v4090, 0
  %v4112 = vsel %vm3121, %v4093, 0
  %4114 = vmatprep.subr.mxu0 %v4099
  %4115 = vmatpush1.msra.mxu0 %v4097
  %4116 = vmatprep.subr.mxu0 0.0
  %4117 = vmatpush1.msra.mxu0 0.0
  %4118 = vmatprep.subr.mxu0 0.0
  %4119 = vmatpush1.msra.mxu0 0.0
  %4120 = vmatprep.subr.mxu0 0.0
  %4121 = vmatpush1.msra.mxu0 0.0
  %4122 = vmatprep.subr.mxu0 0.0
  %4123 = vmatpush1.msra.mxu0 0.0
  %4124 = vmatprep.subr.mxu0 0.0
  %4125 = vmatpush1.msra.mxu0 0.0
  %4126 = vmatprep.subr.mxu0 0.0
  %4127 = vmatpush1.msra.mxu0 0.0
  %4128 = vmatprep.subr.mxu0 0.0
  %4129 = vmatpush1.msra.mxu0 0.0
  %4130 = vmatprep.subr.mxu0 0.0
  %4131 = vmatpush1.msra.mxu0 0.0
  %4132 = vmatprep.subr.mxu0 0.0
  %4133 = vmatpush1.msra.mxu0 0.0
  %4134 = vmatprep.subr.mxu0 0.0
  %4135 = vmatpush1.msra.mxu0 0.0
  %4136 = vmatprep.subr.mxu0 0.0
  %4137 = vmatpush1.msra.mxu0 0.0
  %4138 = vmatprep.subr.mxu0 0.0
  %4139 = vmatpush1.msra.mxu0 0.0
  %4140 = vmatprep.subr.mxu0 0.0
  %4141 = vmatpush1.msra.mxu0 0.0
  %4142 = vmatprep.subr.mxu0 0.0
  %4143 = vmatpush1.msra.mxu0 0.0
  %4144 = vmatprep.subr.mxu0 0.0
  %4145 = vmatpush1.msra.mxu0 0.0
  %4146 = vmatprep.subr.mxu0 0.0
  %4147 = vmatpush1.msra.mxu0 0.0
  %4148 = vmatprep.subr.mxu0 0.0
  %4149 = vmatpush1.msra.mxu0 0.0
  %4150 = vmatprep.subr.mxu0 0.0
  %4151 = vmatpush1.msra.mxu0 0.0
  %4152 = vmatprep.subr.mxu0 0.0
  %4153 = vmatpush1.msra.mxu0 0.0
  %4154 = vmatprep.subr.mxu0 0.0
  %4155 = vmatpush1.msra.mxu0 0.0
  %4156 = vmatprep.subr.mxu0 0.0
  %4157 = vmatpush1.msra.mxu0 0.0
  %4158 = vmatprep.subr.mxu0 0.0
  %4159 = vmatpush1.msra.mxu0 0.0
  %4160 = vmatprep.subr.mxu0 0.0
  %4161 = vmatpush1.msra.mxu0 0.0
  %4162 = vmatprep.subr.mxu0 0.0
  %4163 = vmatpush1.msra.mxu0 0.0
  %4164 = vmatprep.subr.mxu0 0.0
  %4165 = vmatpush1.msra.mxu0 0.0
  %4166 = vmatprep.subr.mxu0 0.0
  %4167 = vmatpush1.msra.mxu0 0.0
  %4168 = vmatprep.subr.mxu0 0.0
  %4169 = vmatpush1.msra.mxu0 0.0
  %4170 = vmatprep.subr.mxu0 0.0
  %4171 = vmatpush1.msra.mxu0 0.0
  %4172 = vmatprep.subr.mxu0 0.0
  %4173 = vmatpush1.msra.mxu0 0.0
  %4174 = vmatprep.subr.mxu0 0.0
  %4175 = vmatpush1.msra.mxu0 0.0
  %4176 = vmatprep.subr.mxu0 0.0
  %4177 = vmatpush1.msra.mxu0 0.0
  %4178 = vmatprep.mubr.f32.mxu0 0.0
  %4179 = vmatmul.mubr.f32.gmra.mrb[0].mxu0 %v4095
  %v4180 = vpop.f32.mrb[0].mxu0
  %v4181 = vadd.f32 0.0, %v4180
  %v4182 = vpop.f32.mrb[0].mxu0
  %v4183 = vadd.f32 0.0, %v4182
  %4184 = vdwg.mxu0
  %4185 = vmatprep.subr.mxu0 %v4103
  %4186 = vmatpush1.msra.mxu0 %v4101
  %4187 = vmatprep.subr.mxu0 0.0
  %4188 = vmatpush1.msra.mxu0 0.0
  %4189 = vmatprep.subr.mxu0 0.0
  %4190 = vmatpush1.msra.mxu0 0.0
  %4191 = vmatprep.subr.mxu0 0.0
  %4192 = vmatpush1.msra.mxu0 0.0
  %4193 = vmatprep.subr.mxu0 0.0
  %4194 = vmatpush1.msra.mxu0 0.0
  %4195 = vmatprep.subr.mxu0 0.0
  %4196 = vmatpush1.msra.mxu0 0.0
  %4197 = vmatprep.subr.mxu0 0.0
  %4198 = vmatpush1.msra.mxu0 0.0
  %4199 = vmatprep.subr.mxu0 0.0
  %4200 = vmatpush1.msra.mxu0 0.0
  %4201 = vmatprep.subr.mxu0 0.0
  %4202 = vmatpush1.msra.mxu0 0.0
  %4203 = vmatprep.subr.mxu0 0.0
  %4204 = vmatpush1.msra.mxu0 0.0
  %4205 = vmatprep.subr.mxu0 0.0
  %4206 = vmatpush1.msra.mxu0 0.0
  %4207 = vmatprep.subr.mxu0 0.0
  %4208 = vmatpush1.msra.mxu0 0.0
  %4209 = vmatprep.subr.mxu0 0.0
  %4210 = vmatpush1.msra.mxu0 0.0
  %4211 = vmatprep.subr.mxu0 0.0
  %4212 = vmatpush1.msra.mxu0 0.0
  %4213 = vmatprep.subr.mxu0 0.0
  %4214 = vmatpush1.msra.mxu0 0.0
  %4215 = vmatprep.subr.mxu0 0.0
  %4216 = vmatpush1.msra.mxu0 0.0
  %4217 = vmatprep.subr.mxu0 0.0
  %4218 = vmatpush1.msra.mxu0 0.0
  %4219 = vmatprep.subr.mxu0 0.0
  %4220 = vmatpush1.msra.mxu0 0.0
  %4221 = vmatprep.subr.mxu0 0.0
  %4222 = vmatpush1.msra.mxu0 0.0
  %4223 = vmatprep.subr.mxu0 0.0
  %4224 = vmatpush1.msra.mxu0 0.0
  %4225 = vmatprep.subr.mxu0 0.0
  %4226 = vmatpush1.msra.mxu0 0.0
  %4227 = vmatprep.subr.mxu0 0.0
  %4228 = vmatpush1.msra.mxu0 0.0
  %4229 = vmatprep.subr.mxu0 0.0
  %4230 = vmatpush1.msra.mxu0 0.0
  %4231 = vmatprep.subr.mxu0 0.0
  %4232 = vmatpush1.msra.mxu0 0.0
  %4233 = vmatprep.subr.mxu0 0.0
  %4234 = vmatpush1.msra.mxu0 0.0
  %4235 = vmatprep.subr.mxu0 0.0
  %4236 = vmatpush1.msra.mxu0 0.0
  %4237 = vmatprep.subr.mxu0 0.0
  %4238 = vmatpush1.msra.mxu0 0.0
  %4239 = vmatprep.subr.mxu0 0.0
  %4240 = vmatpush1.msra.mxu0 0.0
  %4241 = vmatprep.subr.mxu0 0.0
  %4242 = vmatpush1.msra.mxu0 0.0
  %4243 = vmatprep.subr.mxu0 0.0
  %4244 = vmatpush1.msra.mxu0 0.0
  %4245 = vmatprep.subr.mxu0 0.0
  %4246 = vmatpush1.msra.mxu0 0.0
  %4247 = vmatprep.subr.mxu0 0.0
  %4248 = vmatpush1.msra.mxu0 0.0
  %4249 = vmatprep.mubr.f32.mxu0 0.0
  %4250 = vmatmul.mubr.f32.gmra.mrb[0].mxu0 %v4095
  %v4251 = vpop.f32.mrb[0].mxu0
  %v4252 = vadd.f32 0.0, %v4251
  %v4253 = vpop.f32.mrb[0].mxu0
  %v4254 = vadd.f32 0.0, %v4253
  %4255 = vdwg.mxu0
  %4256 = vmatprep.subr.mxu0 %v4107
  %4257 = vmatpush1.msra.mxu0 %v4105
  %4258 = vmatprep.subr.mxu0 0.0
  %4259 = vmatpush1.msra.mxu0 0.0
  %4260 = vmatprep.subr.mxu0 0.0
  %4261 = vmatpush1.msra.mxu0 0.0
  %4262 = vmatprep.subr.mxu0 0.0
  %4263 = vmatpush1.msra.mxu0 0.0
  %4264 = vmatprep.subr.mxu0 0.0
  %4265 = vmatpush1.msra.mxu0 0.0
  %4266 = vmatprep.subr.mxu0 0.0
  %4267 = vmatpush1.msra.mxu0 0.0
  %4268 = vmatprep.subr.mxu0 0.0
  %4269 = vmatpush1.msra.mxu0 0.0
  %4270 = vmatprep.subr.mxu0 0.0
  %4271 = vmatpush1.msra.mxu0 0.0
  %4272 = vmatprep.subr.mxu0 0.0
  %4273 = vmatpush1.msra.mxu0 0.0
  %4274 = vmatprep.subr.mxu0 0.0
  %4275 = vmatpush1.msra.mxu0 0.0
  %4276 = vmatprep.subr.mxu0 0.0
  %4277 = vmatpush1.msra.mxu0 0.0
  %4278 = vmatprep.subr.mxu0 0.0
  %4279 = vmatpush1.msra.mxu0 0.0
  %4280 = vmatprep.subr.mxu0 0.0
  %4281 = vmatpush1.msra.mxu0 0.0
  %4282 = vmatprep.subr.mxu0 0.0
  %4283 = vmatpush1.msra.mxu0 0.0
  %4284 = vmatprep.subr.mxu0 0.0
  %4285 = vmatpush1.msra.mxu0 0.0
  %4286 = vmatprep.subr.mxu0 0.0
  %4287 = vmatpush1.msra.mxu0 0.0
  %4288 = vmatprep.subr.mxu0 0.0
  %4289 = vmatpush1.msra.mxu0 0.0
  %4290 = vmatprep.subr.mxu0 0.0
  %4291 = vmatpush1.msra.mxu0 0.0
  %4292 = vmatprep.subr.mxu0 0.0
  %4293 = vmatpush1.msra.mxu0 0.0
  %4294 = vmatprep.subr.mxu0 0.0
  %4295 = vmatpush1.msra.mxu0 0.0
  %4296 = vmatprep.subr.mxu0 0.0
  %4297 = vmatpush1.msra.mxu0 0.0
  %4298 = vmatprep.subr.mxu0 0.0
  %4299 = vmatpush1.msra.mxu0 0.0
  %4300 = vmatprep.subr.mxu0 0.0
  %4301 = vmatpush1.msra.mxu0 0.0
  %4302 = vmatprep.subr.mxu0 0.0
  %4303 = vmatpush1.msra.mxu0 0.0
  %4304 = vmatprep.subr.mxu0 0.0
  %4305 = vmatpush1.msra.mxu0 0.0
  %4306 = vmatprep.subr.mxu0 0.0
  %4307 = vmatpush1.msra.mxu0 0.0
  %4308 = vmatprep.subr.mxu0 0.0
  %4309 = vmatpush1.msra.mxu0 0.0
  %4310 = vmatprep.subr.mxu0 0.0
  %4311 = vmatpush1.msra.mxu0 0.0
  %4312 = vmatprep.subr.mxu0 0.0
  %4313 = vmatpush1.msra.mxu0 0.0
  %4314 = vmatprep.subr.mxu0 0.0
  %4315 = vmatpush1.msra.mxu0 0.0
  %4316 = vmatprep.subr.mxu0 0.0
  %4317 = vmatpush1.msra.mxu0 0.0
  %4318 = vmatprep.subr.mxu0 0.0
  %4319 = vmatpush1.msra.mxu0 0.0
  %4320 = vmatprep.mubr.f32.mxu0 0.0
  %4321 = vmatmul.mubr.f32.gmra.mrb[0].mxu0 %v4095
  %v4322 = vpop.f32.mrb[0].mxu0
  %v4323 = vadd.f32 0.0, %v4322
  %v4324 = vpop.f32.mrb[0].mxu0
  %v4325 = vadd.f32 0.0, %v4324
  %4326 = vdwg.mxu0
  %4327 = vmatprep.subr.mxu0 %v4112
  %4328 = vmatpush1.msra.mxu0 %v4109
  %4329 = vmatprep.subr.mxu0 0.0
  %4330 = vmatpush1.msra.mxu0 0.0
  %4331 = vmatprep.subr.mxu0 0.0
  %4332 = vmatpush1.msra.mxu0 0.0
  %4333 = vmatprep.subr.mxu0 0.0
  %4334 = vmatpush1.msra.mxu0 0.0
  %4335 = vmatprep.subr.mxu0 0.0
  %4336 = vmatpush1.msra.mxu0 0.0
  %4337 = vmatprep.subr.mxu0 0.0
  %4338 = vmatpush1.msra.mxu0 0.0
  %4339 = vmatprep.subr.mxu0 0.0
  %4340 = vmatpush1.msra.mxu0 0.0
  %4341 = vmatprep.subr.mxu0 0.0
  %4342 = vmatpush1.msra.mxu0 0.0
  %4343 = vmatprep.subr.mxu0 0.0
  %4344 = vmatpush1.msra.mxu0 0.0
  %4345 = vmatprep.subr.mxu0 0.0
  %4346 = vmatpush1.msra.mxu0 0.0
  %4347 = vmatprep.subr.mxu0 0.0
  %4348 = vmatpush1.msra.mxu0 0.0
  %4349 = vmatprep.subr.mxu0 0.0
  %4350 = vmatpush1.msra.mxu0 0.0
  %4351 = vmatprep.subr.mxu0 0.0
  %4352 = vmatpush1.msra.mxu0 0.0
  %4353 = vmatprep.subr.mxu0 0.0
  %4354 = vmatpush1.msra.mxu0 0.0
  %4355 = vmatprep.subr.mxu0 0.0
  %4356 = vmatpush1.msra.mxu0 0.0
  %4357 = vmatprep.subr.mxu0 0.0
  %4358 = vmatpush1.msra.mxu0 0.0
  %4359 = vmatprep.subr.mxu0 0.0
  %4360 = vmatpush1.msra.mxu0 0.0
  %4361 = vmatprep.subr.mxu0 0.0
  %4362 = vmatpush1.msra.mxu0 0.0
  %4363 = vmatprep.subr.mxu0 0.0
  %4364 = vmatpush1.msra.mxu0 0.0
  %4365 = vmatprep.subr.mxu0 0.0
  %4366 = vmatpush1.msra.mxu0 0.0
  %4367 = vmatprep.subr.mxu0 0.0
  %4368 = vmatpush1.msra.mxu0 0.0
  %4369 = vmatprep.subr.mxu0 0.0
  %4370 = vmatpush1.msra.mxu0 0.0
  %4371 = vmatprep.subr.mxu0 0.0
  %4372 = vmatpush1.msra.mxu0 0.0
  %4373 = vmatprep.subr.mxu0 0.0
  %4374 = vmatpush1.msra.mxu0 0.0
  %4375 = vmatprep.subr.mxu0 0.0
  %4376 = vmatpush1.msra.mxu0 0.0
  %4377 = vmatprep.subr.mxu0 0.0
  %4378 = vmatpush1.msra.mxu0 0.0
  %4379 = vmatprep.subr.mxu0 0.0
  %4380 = vmatpush1.msra.mxu0 0.0
  %4381 = vmatprep.subr.mxu0 0.0
  %4382 = vmatpush1.msra.mxu0 0.0
  %4383 = vmatprep.subr.mxu0 0.0
  %4384 = vmatpush1.msra.mxu0 0.0
  %4385 = vmatprep.subr.mxu0 0.0
  %4386 = vmatpush1.msra.mxu0 0.0
  %4387 = vmatprep.subr.mxu0 0.0
  %4388 = vmatpush1.msra.mxu0 0.0
  %4389 = vmatprep.subr.mxu0 0.0
  %4390 = vmatpush1.msra.mxu0 0.0
  %4391 = vmatprep.mubr.f32.mxu0 0.0
  %4392 = vmatmul.mubr.f32.gmra.mrb[0].mxu0 %v4095
  %v4393 = vpop.f32.mrb[0].mxu0
  %v4394 = vadd.f32 0.0, %v4393
  %v4395 = vpop.f32.mrb[0].mxu0
  %v4396 = vadd.f32 0.0, %v4395
  %4397 = vdwg.mxu0
  %v4398 = vadd.f32 %v4058, %v4181
  %v4399 = vadd.f32 %v4059, %v4183
  %v4400 = vadd.f32 %v4060, %v4252
  %v4401 = vadd.f32 %v4061, %v4254
  %v4402 = vadd.f32 %v4062, %v4323
  %v4403 = vadd.f32 %v4063, %v4325
  %v4404 = vadd.f32 %v4064, %v4394
  %v4405 = vadd.f32 %v4065, %v4396
  %s4406 = scalar_lea.vmem %s3, 32
  %v4407 = vld [vmem:[%s4406] sm:$0xff]
  %4408 = vrot.lane.b32.xlu0 %v3072, 95
  %v4409 = vpop.permute.xlu0 %4408
  %4410 = vrot.lane.b32.xlu0 %v3073, 95
  %v4411 = vpop.permute.xlu0 %4410
  %4412 = vrot.lane.b32.xlu0 %v3074, 95
  %v4413 = vpop.permute.xlu0 %4412
  %4414 = vrot.lane.b32.xlu0 %v3075, 95
  %v4415 = vpop.permute.xlu0 %4414
  %4416 = vrot.lane.b32.xlu0 %v3076, 95
  %v4417 = vpop.permute.xlu0 %4416
  %4418 = vrot.lane.b32.xlu0 %v3077, 95
  %v4419 = vpop.permute.xlu0 %4418
  %4420 = vrot.lane.b32.xlu0 %v3078, 95
  %v4421 = vpop.permute.xlu0 %4420
  %4422 = vrot.lane.b32.xlu0 %v3079, 95
  %v4423 = vpop.permute.xlu0 %4422
  %v4424 = vsel %vm1371, %v4409, %v4411
  %v4425 = vsel %vm1371, %v4411, %v4413
  %v4426 = vsel %vm1371, %v4413, %v4415
  %v4427 = vsel %vm1371, %v4415, %v4417
  %v4428 = vsel %vm1371, %v4417, %v4419
  %v4429 = vsel %vm1371, %v4419, %v4421
  %v4430 = vsel %vm1371, %v4421, %v4423
  %v4433 = vsel %vm1371, %v4423, %v4409
  %v4435 = vsel %vm3117, %v4407, 0
  %v4437 = vsel %vm3121, %v4424, 0
  %v4439 = vsel %vm3121, %v4425, 0
  %v4441 = vsel %vm3121, %v4426, 0
  %v4443 = vsel %vm3121, %v4427, 0
  %v4445 = vsel %vm3121, %v4428, 0
  %v4447 = vsel %vm3121, %v4429, 0
  %v4449 = vsel %vm3121, %v4430, 0
  %v4452 = vsel %vm3121, %v4433, 0
  %4454 = vmatprep.subr.mxu0 %v4439
  %4455 = vmatpush1.msra.mxu0 %v4437
  %4456 = vmatprep.subr.mxu0 0.0
  %4457 = vmatpush1.msra.mxu0 0.0
  %4458 = vmatprep.subr.mxu0 0.0
  %4459 = vmatpush1.msra.mxu0 0.0
  %4460 = vmatprep.subr.mxu0 0.0
  %4461 = vmatpush1.msra.mxu0 0.0
  %4462 = vmatprep.subr.mxu0 0.0
  %4463 = vmatpush1.msra.mxu0 0.0
  %4464 = vmatprep.subr.mxu0 0.0
  %4465 = vmatpush1.msra.mxu0 0.0
  %4466 = vmatprep.subr.mxu0 0.0
  %4467 = vmatpush1.msra.mxu0 0.0
  %4468 = vmatprep.subr.mxu0 0.0
  %4469 = vmatpush1.msra.mxu0 0.0
  %4470 = vmatprep.subr.mxu0 0.0
  %4471 = vmatpush1.msra.mxu0 0.0
  %4472 = vmatprep.subr.mxu0 0.0
  %4473 = vmatpush1.msra.mxu0 0.0
  %4474 = vmatprep.subr.mxu0 0.0
  %4475 = vmatpush1.msra.mxu0 0.0
  %4476 = vmatprep.subr.mxu0 0.0
  %4477 = vmatpush1.msra.mxu0 0.0
  %4478 = vmatprep.subr.mxu0 0.0
  %4479 = vmatpush1.msra.mxu0 0.0
  %4480 = vmatprep.subr.mxu0 0.0
  %4481 = vmatpush1.msra.mxu0 0.0
  %4482 = vmatprep.subr.mxu0 0.0
  %4483 = vmatpush1.msra.mxu0 0.0
  %4484 = vmatprep.subr.mxu0 0.0
  %4485 = vmatpush1.msra.mxu0 0.0
  %4486 = vmatprep.subr.mxu0 0.0
  %4487 = vmatpush1.msra.mxu0 0.0
  %4488 = vmatprep.subr.mxu0 0.0
  %4489 = vmatpush1.msra.mxu0 0.0
  %4490 = vmatprep.subr.mxu0 0.0
  %4491 = vmatpush1.msra.mxu0 0.0
  %4492 = vmatprep.subr.mxu0 0.0
  %4493 = vmatpush1.msra.mxu0 0.0
  %4494 = vmatprep.subr.mxu0 0.0
  %4495 = vmatpush1.msra.mxu0 0.0
  %4496 = vmatprep.subr.mxu0 0.0
  %4497 = vmatpush1.msra.mxu0 0.0
  %4498 = vmatprep.subr.mxu0 0.0
  %4499 = vmatpush1.msra.mxu0 0.0
  %4500 = vmatprep.subr.mxu0 0.0
  %4501 = vmatpush1.msra.mxu0 0.0
  %4502 = vmatprep.subr.mxu0 0.0
  %4503 = vmatpush1.msra.mxu0 0.0
  %4504 = vmatprep.subr.mxu0 0.0
  %4505 = vmatpush1.msra.mxu0 0.0
  %4506 = vmatprep.subr.mxu0 0.0
  %4507 = vmatpush1.msra.mxu0 0.0
  %4508 = vmatprep.subr.mxu0 0.0
  %4509 = vmatpush1.msra.mxu0 0.0
  %4510 = vmatprep.subr.mxu0 0.0
  %4511 = vmatpush1.msra.mxu0 0.0
  %4512 = vmatprep.subr.mxu0 0.0
  %4513 = vmatpush1.msra.mxu0 0.0
  %4514 = vmatprep.subr.mxu0 0.0
  %4515 = vmatpush1.msra.mxu0 0.0
  %4516 = vmatprep.subr.mxu0 0.0
  %4517 = vmatpush1.msra.mxu0 0.0
  %4518 = vmatprep.mubr.f32.mxu0 0.0
  %4519 = vmatmul.mubr.f32.gmra.mrb[0].mxu0 %v4435
  %v4520 = vpop.f32.mrb[0].mxu0
  %v4521 = vadd.f32 0.0, %v4520
  %v4522 = vpop.f32.mrb[0].mxu0
  %v4523 = vadd.f32 0.0, %v4522
  %4524 = vdwg.mxu0
  %4525 = vmatprep.subr.mxu0 %v4443
  %4526 = vmatpush1.msra.mxu0 %v4441
  %4527 = vmatprep.subr.mxu0 0.0
  %4528 = vmatpush1.msra.mxu0 0.0
  %4529 = vmatprep.subr.mxu0 0.0
  %4530 = vmatpush1.msra.mxu0 0.0
  %4531 = vmatprep.subr.mxu0 0.0
  %4532 = vmatpush1.msra.mxu0 0.0
  %4533 = vmatprep.subr.mxu0 0.0
  %4534 = vmatpush1.msra.mxu0 0.0
  %4535 = vmatprep.subr.mxu0 0.0
  %4536 = vmatpush1.msra.mxu0 0.0
  %4537 = vmatprep.subr.mxu0 0.0
  %4538 = vmatpush1.msra.mxu0 0.0
  %4539 = vmatprep.subr.mxu0 0.0
  %4540 = vmatpush1.msra.mxu0 0.0
  %4541 = vmatprep.subr.mxu0 0.0
  %4542 = vmatpush1.msra.mxu0 0.0
  %4543 = vmatprep.subr.mxu0 0.0
  %4544 = vmatpush1.msra.mxu0 0.0
  %4545 = vmatprep.subr.mxu0 0.0
  %4546 = vmatpush1.msra.mxu0 0.0
  %4547 = vmatprep.subr.mxu0 0.0
  %4548 = vmatpush1.msra.mxu0 0.0
  %4549 = vmatprep.subr.mxu0 0.0
  %4550 = vmatpush1.msra.mxu0 0.0
  %4551 = vmatprep.subr.mxu0 0.0
  %4552 = vmatpush1.msra.mxu0 0.0
  %4553 = vmatprep.subr.mxu0 0.0
  %4554 = vmatpush1.msra.mxu0 0.0
  %4555 = vmatprep.subr.mxu0 0.0
  %4556 = vmatpush1.msra.mxu0 0.0
  %4557 = vmatprep.subr.mxu0 0.0
  %4558 = vmatpush1.msra.mxu0 0.0
  %4559 = vmatprep.subr.mxu0 0.0
  %4560 = vmatpush1.msra.mxu0 0.0
  %4561 = vmatprep.subr.mxu0 0.0
  %4562 = vmatpush1.msra.mxu0 0.0
  %4563 = vmatprep.subr.mxu0 0.0
  %4564 = vmatpush1.msra.mxu0 0.0
  %4565 = vmatprep.subr.mxu0 0.0
  %4566 = vmatpush1.msra.mxu0 0.0
  %4567 = vmatprep.subr.mxu0 0.0
  %4568 = vmatpush1.msra.mxu0 0.0
  %4569 = vmatprep.subr.mxu0 0.0
  %4570 = vmatpush1.msra.mxu0 0.0
  %4571 = vmatprep.subr.mxu0 0.0
  %4572 = vmatpush1.msra.mxu0 0.0
  %4573 = vmatprep.subr.mxu0 0.0
  %4574 = vmatpush1.msra.mxu0 0.0
  %4575 = vmatprep.subr.mxu0 0.0
  %4576 = vmatpush1.msra.mxu0 0.0
  %4577 = vmatprep.subr.mxu0 0.0
  %4578 = vmatpush1.msra.mxu0 0.0
  %4579 = vmatprep.subr.mxu0 0.0
  %4580 = vmatpush1.msra.mxu0 0.0
  %4581 = vmatprep.subr.mxu0 0.0
  %4582 = vmatpush1.msra.mxu0 0.0
  %4583 = vmatprep.subr.mxu0 0.0
  %4584 = vmatpush1.msra.mxu0 0.0
  %4585 = vmatprep.subr.mxu0 0.0
  %4586 = vmatpush1.msra.mxu0 0.0
  %4587 = vmatprep.subr.mxu0 0.0
  %4588 = vmatpush1.msra.mxu0 0.0
  %4589 = vmatprep.mubr.f32.mxu0 0.0
  %4590 = vmatmul.mubr.f32.gmra.mrb[0].mxu0 %v4435
  %v4591 = vpop.f32.mrb[0].mxu0
  %v4592 = vadd.f32 0.0, %v4591
  %v4593 = vpop.f32.mrb[0].mxu0
  %v4594 = vadd.f32 0.0, %v4593
  %4595 = vdwg.mxu0
  %4596 = vmatprep.subr.mxu0 %v4447
  %4597 = vmatpush1.msra.mxu0 %v4445
  %4598 = vmatprep.subr.mxu0 0.0
  %4599 = vmatpush1.msra.mxu0 0.0
  %4600 = vmatprep.subr.mxu0 0.0
  %4601 = vmatpush1.msra.mxu0 0.0
  %4602 = vmatprep.subr.mxu0 0.0
  %4603 = vmatpush1.msra.mxu0 0.0
  %4604 = vmatprep.subr.mxu0 0.0
  %4605 = vmatpush1.msra.mxu0 0.0
  %4606 = vmatprep.subr.mxu0 0.0
  %4607 = vmatpush1.msra.mxu0 0.0
  %4608 = vmatprep.subr.mxu0 0.0
  %4609 = vmatpush1.msra.mxu0 0.0
  %4610 = vmatprep.subr.mxu0 0.0
  %4611 = vmatpush1.msra.mxu0 0.0
  %4612 = vmatprep.subr.mxu0 0.0
  %4613 = vmatpush1.msra.mxu0 0.0
  %4614 = vmatprep.subr.mxu0 0.0
  %4615 = vmatpush1.msra.mxu0 0.0
  %4616 = vmatprep.subr.mxu0 0.0
  %4617 = vmatpush1.msra.mxu0 0.0
  %4618 = vmatprep.subr.mxu0 0.0
  %4619 = vmatpush1.msra.mxu0 0.0
  %4620 = vmatprep.subr.mxu0 0.0
  %4621 = vmatpush1.msra.mxu0 0.0
  %4622 = vmatprep.subr.mxu0 0.0
  %4623 = vmatpush1.msra.mxu0 0.0
  %4624 = vmatprep.subr.mxu0 0.0
  %4625 = vmatpush1.msra.mxu0 0.0
  %4626 = vmatprep.subr.mxu0 0.0
  %4627 = vmatpush1.msra.mxu0 0.0
  %4628 = vmatprep.subr.mxu0 0.0
  %4629 = vmatpush1.msra.mxu0 0.0
  %4630 = vmatprep.subr.mxu0 0.0
  %4631 = vmatpush1.msra.mxu0 0.0
  %4632 = vmatprep.subr.mxu0 0.0
  %4633 = vmatpush1.msra.mxu0 0.0
  %4634 = vmatprep.subr.mxu0 0.0
  %4635 = vmatpush1.msra.mxu0 0.0
  %4636 = vmatprep.subr.mxu0 0.0
  %4637 = vmatpush1.msra.mxu0 0.0
  %4638 = vmatprep.subr.mxu0 0.0
  %4639 = vmatpush1.msra.mxu0 0.0
  %4640 = vmatprep.subr.mxu0 0.0
  %4641 = vmatpush1.msra.mxu0 0.0
  %4642 = vmatprep.subr.mxu0 0.0
  %4643 = vmatpush1.msra.mxu0 0.0
  %4644 = vmatprep.subr.mxu0 0.0
  %4645 = vmatpush1.msra.mxu0 0.0
  %4646 = vmatprep.subr.mxu0 0.0
  %4647 = vmatpush1.msra.mxu0 0.0
  %4648 = vmatprep.subr.mxu0 0.0
  %4649 = vmatpush1.msra.mxu0 0.0
  %4650 = vmatprep.subr.mxu0 0.0
  %4651 = vmatpush1.msra.mxu0 0.0
  %4652 = vmatprep.subr.mxu0 0.0
  %4653 = vmatpush1.msra.mxu0 0.0
  %4654 = vmatprep.subr.mxu0 0.0
  %4655 = vmatpush1.msra.mxu0 0.0
  %4656 = vmatprep.subr.mxu0 0.0
  %4657 = vmatpush1.msra.mxu0 0.0
  %4658 = vmatprep.subr.mxu0 0.0
  %4659 = vmatpush1.msra.mxu0 0.0
  %4660 = vmatprep.mubr.f32.mxu0 0.0
  %4661 = vmatmul.mubr.f32.gmra.mrb[0].mxu0 %v4435
  %v4662 = vpop.f32.mrb[0].mxu0
  %v4663 = vadd.f32 0.0, %v4662
  %v4664 = vpop.f32.mrb[0].mxu0
  %v4665 = vadd.f32 0.0, %v4664
  %4666 = vdwg.mxu0
  %4667 = vmatprep.subr.mxu0 %v4452
  %4668 = vmatpush1.msra.mxu0 %v4449
  %4669 = vmatprep.subr.mxu0 0.0
  %4670 = vmatpush1.msra.mxu0 0.0
  %4671 = vmatprep.subr.mxu0 0.0
  %4672 = vmatpush1.msra.mxu0 0.0
  %4673 = vmatprep.subr.mxu0 0.0
  %4674 = vmatpush1.msra.mxu0 0.0
  %4675 = vmatprep.subr.mxu0 0.0
  %4676 = vmatpush1.msra.mxu0 0.0
  %4677 = vmatprep.subr.mxu0 0.0
  %4678 = vmatpush1.msra.mxu0 0.0
  %4679 = vmatprep.subr.mxu0 0.0
  %4680 = vmatpush1.msra.mxu0 0.0
  %4681 = vmatprep.subr.mxu0 0.0
  %4682 = vmatpush1.msra.mxu0 0.0
  %4683 = vmatprep.subr.mxu0 0.0
  %4684 = vmatpush1.msra.mxu0 0.0
  %4685 = vmatprep.subr.mxu0 0.0
  %4686 = vmatpush1.msra.mxu0 0.0
  %4687 = vmatprep.subr.mxu0 0.0
  %4688 = vmatpush1.msra.mxu0 0.0
  %4689 = vmatprep.subr.mxu0 0.0
  %4690 = vmatpush1.msra.mxu0 0.0
  %4691 = vmatprep.subr.mxu0 0.0
  %4692 = vmatpush1.msra.mxu0 0.0
  %4693 = vmatprep.subr.mxu0 0.0
  %4694 = vmatpush1.msra.mxu0 0.0
  %4695 = vmatprep.subr.mxu0 0.0
  %4696 = vmatpush1.msra.mxu0 0.0
  %4697 = vmatprep.subr.mxu0 0.0
  %4698 = vmatpush1.msra.mxu0 0.0
  %4699 = vmatprep.subr.mxu0 0.0
  %4700 = vmatpush1.msra.mxu0 0.0
  %4701 = vmatprep.subr.mxu0 0.0
  %4702 = vmatpush1.msra.mxu0 0.0
  %4703 = vmatprep.subr.mxu0 0.0
  %4704 = vmatpush1.msra.mxu0 0.0
  %4705 = vmatprep.subr.mxu0 0.0
  %4706 = vmatpush1.msra.mxu0 0.0
  %4707 = vmatprep.subr.mxu0 0.0
  %4708 = vmatpush1.msra.mxu0 0.0
  %4709 = vmatprep.subr.mxu0 0.0
  %4710 = vmatpush1.msra.mxu0 0.0
  %4711 = vmatprep.subr.mxu0 0.0
  %4712 = vmatpush1.msra.mxu0 0.0
  %4713 = vmatprep.subr.mxu0 0.0
  %4714 = vmatpush1.msra.mxu0 0.0
  %4715 = vmatprep.subr.mxu0 0.0
  %4716 = vmatpush1.msra.mxu0 0.0
  %4717 = vmatprep.subr.mxu0 0.0
  %4718 = vmatpush1.msra.mxu0 0.0
  %4719 = vmatprep.subr.mxu0 0.0
  %4720 = vmatpush1.msra.mxu0 0.0
  %4721 = vmatprep.subr.mxu0 0.0
  %4722 = vmatpush1.msra.mxu0 0.0
  %4723 = vmatprep.subr.mxu0 0.0
  %4724 = vmatpush1.msra.mxu0 0.0
  %4725 = vmatprep.subr.mxu0 0.0
  %4726 = vmatpush1.msra.mxu0 0.0
  %4727 = vmatprep.subr.mxu0 0.0
  %4728 = vmatpush1.msra.mxu0 0.0
  %4729 = vmatprep.subr.mxu0 0.0
  %4730 = vmatpush1.msra.mxu0 0.0
  %4731 = vmatprep.mubr.f32.mxu0 0.0
  %4732 = vmatmul.mubr.f32.gmra.mrb[0].mxu0 %v4435
  %v4733 = vpop.f32.mrb[0].mxu0
  %v4734 = vadd.f32 0.0, %v4733
  %v4735 = vpop.f32.mrb[0].mxu0
  %v4736 = vadd.f32 0.0, %v4735
  %4737 = vdwg.mxu0
  %v4738 = vadd.f32 %v4398, %v4521
  %v4739 = vadd.f32 %v4399, %v4523
  %v4740 = vadd.f32 %v4400, %v4592
  %v4741 = vadd.f32 %v4401, %v4594
  %v4742 = vadd.f32 %v4402, %v4663
  %v4743 = vadd.f32 %v4403, %v4665
  %v4744 = vadd.f32 %v4404, %v4734
  %v4745 = vadd.f32 %v4405, %v4736
  %s4746 = scalar_lea.vmem %s3, 40
  %v4747 = vld [vmem:[%s4746] sm:$0xff]
  %4748 = vrot.lane.b32.xlu0 %v3072, 94
  %v4749 = vpop.permute.xlu0 %4748
  %4750 = vrot.lane.b32.xlu0 %v3073, 94
  %v4751 = vpop.permute.xlu0 %4750
  %4752 = vrot.lane.b32.xlu0 %v3074, 94
  %v4753 = vpop.permute.xlu0 %4752
  %4754 = vrot.lane.b32.xlu0 %v3075, 94
  %v4755 = vpop.permute.xlu0 %4754
  %4756 = vrot.lane.b32.xlu0 %v3076, 94
  %v4757 = vpop.permute.xlu0 %4756
  %4758 = vrot.lane.b32.xlu0 %v3077, 94
  %v4759 = vpop.permute.xlu0 %4758
  %4760 = vrot.lane.b32.xlu0 %v3078, 94
  %v4761 = vpop.permute.xlu0 %4760
  %4762 = vrot.lane.b32.xlu0 %v3079, 94
  %v4763 = vpop.permute.xlu0 %4762
  %v4764 = vsel %vm1712, %v4749, %v4751
  %v4765 = vsel %vm1712, %v4751, %v4753
  %v4766 = vsel %vm1712, %v4753, %v4755
  %v4767 = vsel %vm1712, %v4755, %v4757
  %v4768 = vsel %vm1712, %v4757, %v4759
  %v4769 = vsel %vm1712, %v4759, %v4761
  %v4770 = vsel %vm1712, %v4761, %v4763
  %v4773 = vsel %vm1712, %v4763, %v4749
  %v4775 = vsel %vm3117, %v4747, 0
  %v4777 = vsel %vm3121, %v4764, 0
  %v4779 = vsel %vm3121, %v4765, 0
  %v4781 = vsel %vm3121, %v4766, 0
  %v4783 = vsel %vm3121, %v4767, 0
  %v4785 = vsel %vm3121, %v4768, 0
  %v4787 = vsel %vm3121, %v4769, 0
  %v4789 = vsel %vm3121, %v4770, 0
  %v4792 = vsel %vm3121, %v4773, 0
  %4794 = vmatprep.subr.mxu0 %v4779
  %4795 = vmatpush1.msra.mxu0 %v4777
  %4796 = vmatprep.subr.mxu0 0.0
  %4797 = vmatpush1.msra.mxu0 0.0
  %4798 = vmatprep.subr.mxu0 0.0
  %4799 = vmatpush1.msra.mxu0 0.0
  %4800 = vmatprep.subr.mxu0 0.0
  %4801 = vmatpush1.msra.mxu0 0.0
  %4802 = vmatprep.subr.mxu0 0.0
  %4803 = vmatpush1.msra.mxu0 0.0
  %4804 = vmatprep.subr.mxu0 0.0
  %4805 = vmatpush1.msra.mxu0 0.0
  %4806 = vmatprep.subr.mxu0 0.0
  %4807 = vmatpush1.msra.mxu0 0.0
  %4808 = vmatprep.subr.mxu0 0.0
  %4809 = vmatpush1.msra.mxu0 0.0
  %4810 = vmatprep.subr.mxu0 0.0
  %4811 = vmatpush1.msra.mxu0 0.0
  %4812 = vmatprep.subr.mxu0 0.0
  %4813 = vmatpush1.msra.mxu0 0.0
  %4814 = vmatprep.subr.mxu0 0.0
  %4815 = vmatpush1.msra.mxu0 0.0
  %4816 = vmatprep.subr.mxu0 0.0
  %4817 = vmatpush1.msra.mxu0 0.0
  %4818 = vmatprep.subr.mxu0 0.0
  %4819 = vmatpush1.msra.mxu0 0.0
  %4820 = vmatprep.subr.mxu0 0.0
  %4821 = vmatpush1.msra.mxu0 0.0
  %4822 = vmatprep.subr.mxu0 0.0
  %4823 = vmatpush1.msra.mxu0 0.0
  %4824 = vmatprep.subr.mxu0 0.0
  %4825 = vmatpush1.msra.mxu0 0.0
  %4826 = vmatprep.subr.mxu0 0.0
  %4827 = vmatpush1.msra.mxu0 0.0
  %4828 = vmatprep.subr.mxu0 0.0
  %4829 = vmatpush1.msra.mxu0 0.0
  %4830 = vmatprep.subr.mxu0 0.0
  %4831 = vmatpush1.msra.mxu0 0.0
  %4832 = vmatprep.subr.mxu0 0.0
  %4833 = vmatpush1.msra.mxu0 0.0
  %4834 = vmatprep.subr.mxu0 0.0
  %4835 = vmatpush1.msra.mxu0 0.0
  %4836 = vmatprep.subr.mxu0 0.0
  %4837 = vmatpush1.msra.mxu0 0.0
  %4838 = vmatprep.subr.mxu0 0.0
  %4839 = vmatpush1.msra.mxu0 0.0
  %4840 = vmatprep.subr.mxu0 0.0
  %4841 = vmatpush1.msra.mxu0 0.0
  %4842 = vmatprep.subr.mxu0 0.0
  %4843 = vmatpush1.msra.mxu0 0.0
  %4844 = vmatprep.subr.mxu0 0.0
  %4845 = vmatpush1.msra.mxu0 0.0
  %4846 = vmatprep.subr.mxu0 0.0
  %4847 = vmatpush1.msra.mxu0 0.0
  %4848 = vmatprep.subr.mxu0 0.0
  %4849 = vmatpush1.msra.mxu0 0.0
  %4850 = vmatprep.subr.mxu0 0.0
  %4851 = vmatpush1.msra.mxu0 0.0
  %4852 = vmatprep.subr.mxu0 0.0
  %4853 = vmatpush1.msra.mxu0 0.0
  %4854 = vmatprep.subr.mxu0 0.0
  %4855 = vmatpush1.msra.mxu0 0.0
  %4856 = vmatprep.subr.mxu0 0.0
  %4857 = vmatpush1.msra.mxu0 0.0
  %4858 = vmatprep.mubr.f32.mxu0 0.0
  %4859 = vmatmul.mubr.f32.gmra.mrb[0].mxu0 %v4775
  %v4860 = vpop.f32.mrb[0].mxu0
  %v4861 = vadd.f32 0.0, %v4860
  %v4862 = vpop.f32.mrb[0].mxu0
  %v4863 = vadd.f32 0.0, %v4862
  %4864 = vdwg.mxu0
  %4865 = vmatprep.subr.mxu0 %v4783
  %4866 = vmatpush1.msra.mxu0 %v4781
  %4867 = vmatprep.subr.mxu0 0.0
  %4868 = vmatpush1.msra.mxu0 0.0
  %4869 = vmatprep.subr.mxu0 0.0
  %4870 = vmatpush1.msra.mxu0 0.0
  %4871 = vmatprep.subr.mxu0 0.0
  %4872 = vmatpush1.msra.mxu0 0.0
  %4873 = vmatprep.subr.mxu0 0.0
  %4874 = vmatpush1.msra.mxu0 0.0
  %4875 = vmatprep.subr.mxu0 0.0
  %4876 = vmatpush1.msra.mxu0 0.0
  %4877 = vmatprep.subr.mxu0 0.0
  %4878 = vmatpush1.msra.mxu0 0.0
  %4879 = vmatprep.subr.mxu0 0.0
  %4880 = vmatpush1.msra.mxu0 0.0
  %4881 = vmatprep.subr.mxu0 0.0
  %4882 = vmatpush1.msra.mxu0 0.0
  %4883 = vmatprep.subr.mxu0 0.0
  %4884 = vmatpush1.msra.mxu0 0.0
  %4885 = vmatprep.subr.mxu0 0.0
  %4886 = vmatpush1.msra.mxu0 0.0
  %4887 = vmatprep.subr.mxu0 0.0
  %4888 = vmatpush1.msra.mxu0 0.0
  %4889 = vmatprep.subr.mxu0 0.0
  %4890 = vmatpush1.msra.mxu0 0.0
  %4891 = vmatprep.subr.mxu0 0.0
  %4892 = vmatpush1.msra.mxu0 0.0
  %4893 = vmatprep.subr.mxu0 0.0
  %4894 = vmatpush1.msra.mxu0 0.0
  %4895 = vmatprep.subr.mxu0 0.0
  %4896 = vmatpush1.msra.mxu0 0.0
  %4897 = vmatprep.subr.mxu0 0.0
  %4898 = vmatpush1.msra.mxu0 0.0
  %4899 = vmatprep.subr.mxu0 0.0
  %4900 = vmatpush1.msra.mxu0 0.0
  %4901 = vmatprep.subr.mxu0 0.0
  %4902 = vmatpush1.msra.mxu0 0.0
  %4903 = vmatprep.subr.mxu0 0.0
  %4904 = vmatpush1.msra.mxu0 0.0
  %4905 = vmatprep.subr.mxu0 0.0
  %4906 = vmatpush1.msra.mxu0 0.0
  %4907 = vmatprep.subr.mxu0 0.0
  %4908 = vmatpush1.msra.mxu0 0.0
  %4909 = vmatprep.subr.mxu0 0.0
  %4910 = vmatpush1.msra.mxu0 0.0
  %4911 = vmatprep.subr.mxu0 0.0
  %4912 = vmatpush1.msra.mxu0 0.0
  %4913 = vmatprep.subr.mxu0 0.0
  %4914 = vmatpush1.msra.mxu0 0.0
  %4915 = vmatprep.subr.mxu0 0.0
  %4916 = vmatpush1.msra.mxu0 0.0
  %4917 = vmatprep.subr.mxu0 0.0
  %4918 = vmatpush1.msra.mxu0 0.0
  %4919 = vmatprep.subr.mxu0 0.0
  %4920 = vmatpush1.msra.mxu0 0.0
  %4921 = vmatprep.subr.mxu0 0.0
  %4922 = vmatpush1.msra.mxu0 0.0
  %4923 = vmatprep.subr.mxu0 0.0
  %4924 = vmatpush1.msra.mxu0 0.0
  %4925 = vmatprep.subr.mxu0 0.0
  %4926 = vmatpush1.msra.mxu0 0.0
  %4927 = vmatprep.subr.mxu0 0.0
  %4928 = vmatpush1.msra.mxu0 0.0
  %4929 = vmatprep.mubr.f32.mxu0 0.0
  %4930 = vmatmul.mubr.f32.gmra.mrb[0].mxu0 %v4775
  %v4931 = vpop.f32.mrb[0].mxu0
  %v4932 = vadd.f32 0.0, %v4931
  %v4933 = vpop.f32.mrb[0].mxu0
  %v4934 = vadd.f32 0.0, %v4933
  %4935 = vdwg.mxu0
  %4936 = vmatprep.subr.mxu0 %v4787
  %4937 = vmatpush1.msra.mxu0 %v4785
  %4938 = vmatprep.subr.mxu0 0.0
  %4939 = vmatpush1.msra.mxu0 0.0
  %4940 = vmatprep.subr.mxu0 0.0
  %4941 = vmatpush1.msra.mxu0 0.0
  %4942 = vmatprep.subr.mxu0 0.0
  %4943 = vmatpush1.msra.mxu0 0.0
  %4944 = vmatprep.subr.mxu0 0.0
  %4945 = vmatpush1.msra.mxu0 0.0
  %4946 = vmatprep.subr.mxu0 0.0
  %4947 = vmatpush1.msra.mxu0 0.0
  %4948 = vmatprep.subr.mxu0 0.0
  %4949 = vmatpush1.msra.mxu0 0.0
  %4950 = vmatprep.subr.mxu0 0.0
  %4951 = vmatpush1.msra.mxu0 0.0
  %4952 = vmatprep.subr.mxu0 0.0
  %4953 = vmatpush1.msra.mxu0 0.0
  %4954 = vmatprep.subr.mxu0 0.0
  %4955 = vmatpush1.msra.mxu0 0.0
  %4956 = vmatprep.subr.mxu0 0.0
  %4957 = vmatpush1.msra.mxu0 0.0
  %4958 = vmatprep.subr.mxu0 0.0
  %4959 = vmatpush1.msra.mxu0 0.0
  %4960 = vmatprep.subr.mxu0 0.0
  %4961 = vmatpush1.msra.mxu0 0.0
  %4962 = vmatprep.subr.mxu0 0.0
  %4963 = vmatpush1.msra.mxu0 0.0
  %4964 = vmatprep.subr.mxu0 0.0
  %4965 = vmatpush1.msra.mxu0 0.0
  %4966 = vmatprep.subr.mxu0 0.0
  %4967 = vmatpush1.msra.mxu0 0.0
  %4968 = vmatprep.subr.mxu0 0.0
  %4969 = vmatpush1.msra.mxu0 0.0
  %4970 = vmatprep.subr.mxu0 0.0
  %4971 = vmatpush1.msra.mxu0 0.0
  %4972 = vmatprep.subr.mxu0 0.0
  %4973 = vmatpush1.msra.mxu0 0.0
  %4974 = vmatprep.subr.mxu0 0.0
  %4975 = vmatpush1.msra.mxu0 0.0
  %4976 = vmatprep.subr.mxu0 0.0
  %4977 = vmatpush1.msra.mxu0 0.0
  %4978 = vmatprep.subr.mxu0 0.0
  %4979 = vmatpush1.msra.mxu0 0.0
  %4980 = vmatprep.subr.mxu0 0.0
  %4981 = vmatpush1.msra.mxu0 0.0
  %4982 = vmatprep.subr.mxu0 0.0
  %4983 = vmatpush1.msra.mxu0 0.0
  %4984 = vmatprep.subr.mxu0 0.0
  %4985 = vmatpush1.msra.mxu0 0.0
  %4986 = vmatprep.subr.mxu0 0.0
  %4987 = vmatpush1.msra.mxu0 0.0
  %4988 = vmatprep.subr.mxu0 0.0
  %4989 = vmatpush1.msra.mxu0 0.0
  %4990 = vmatprep.subr.mxu0 0.0
  %4991 = vmatpush1.msra.mxu0 0.0
  %4992 = vmatprep.subr.mxu0 0.0
  %4993 = vmatpush1.msra.mxu0 0.0
  %4994 = vmatprep.subr.mxu0 0.0
  %4995 = vmatpush1.msra.mxu0 0.0
  %4996 = vmatprep.subr.mxu0 0.0
  %4997 = vmatpush1.msra.mxu0 0.0
  %4998 = vmatprep.subr.mxu0 0.0
  %4999 = vmatpush1.msra.mxu0 0.0
  %5000 = vmatprep.mubr.f32.mxu0 0.0
  %5001 = vmatmul.mubr.f32.gmra.mrb[0].mxu0 %v4775
  %v5002 = vpop.f32.mrb[0].mxu0
  %v5003 = vadd.f32 0.0, %v5002
  %v5004 = vpop.f32.mrb[0].mxu0
  %v5005 = vadd.f32 0.0, %v5004
  %5006 = vdwg.mxu0
  %5007 = vmatprep.subr.mxu0 %v4792
  %5008 = vmatpush1.msra.mxu0 %v4789
  %5009 = vmatprep.subr.mxu0 0.0
  %5010 = vmatpush1.msra.mxu0 0.0
  %5011 = vmatprep.subr.mxu0 0.0
  %5012 = vmatpush1.msra.mxu0 0.0
  %5013 = vmatprep.subr.mxu0 0.0
  %5014 = vmatpush1.msra.mxu0 0.0
  %5015 = vmatprep.subr.mxu0 0.0
  %5016 = vmatpush1.msra.mxu0 0.0
  %5017 = vmatprep.subr.mxu0 0.0
  %5018 = vmatpush1.msra.mxu0 0.0
  %5019 = vmatprep.subr.mxu0 0.0
  %5020 = vmatpush1.msra.mxu0 0.0
  %5021 = vmatprep.subr.mxu0 0.0
  %5022 = vmatpush1.msra.mxu0 0.0
  %5023 = vmatprep.subr.mxu0 0.0
  %5024 = vmatpush1.msra.mxu0 0.0
  %5025 = vmatprep.subr.mxu0 0.0
  %5026 = vmatpush1.msra.mxu0 0.0
  %5027 = vmatprep.subr.mxu0 0.0
  %5028 = vmatpush1.msra.mxu0 0.0
  %5029 = vmatprep.subr.mxu0 0.0
  %5030 = vmatpush1.msra.mxu0 0.0
  %5031 = vmatprep.subr.mxu0 0.0
  %5032 = vmatpush1.msra.mxu0 0.0
  %5033 = vmatprep.subr.mxu0 0.0
  %5034 = vmatpush1.msra.mxu0 0.0
  %5035 = vmatprep.subr.mxu0 0.0
  %5036 = vmatpush1.msra.mxu0 0.0
  %5037 = vmatprep.subr.mxu0 0.0
  %5038 = vmatpush1.msra.mxu0 0.0
  %5039 = vmatprep.subr.mxu0 0.0
  %5040 = vmatpush1.msra.mxu0 0.0
  %5041 = vmatprep.subr.mxu0 0.0
  %5042 = vmatpush1.msra.mxu0 0.0
  %5043 = vmatprep.subr.mxu0 0.0
  %5044 = vmatpush1.msra.mxu0 0.0
  %5045 = vmatprep.subr.mxu0 0.0
  %5046 = vmatpush1.msra.mxu0 0.0
  %5047 = vmatprep.subr.mxu0 0.0
  %5048 = vmatpush1.msra.mxu0 0.0
  %5049 = vmatprep.subr.mxu0 0.0
  %5050 = vmatpush1.msra.mxu0 0.0
  %5051 = vmatprep.subr.mxu0 0.0
  %5052 = vmatpush1.msra.mxu0 0.0
  %5053 = vmatprep.subr.mxu0 0.0
  %5054 = vmatpush1.msra.mxu0 0.0
  %5055 = vmatprep.subr.mxu0 0.0
  %5056 = vmatpush1.msra.mxu0 0.0
  %5057 = vmatprep.subr.mxu0 0.0
  %5058 = vmatpush1.msra.mxu0 0.0
  %5059 = vmatprep.subr.mxu0 0.0
  %5060 = vmatpush1.msra.mxu0 0.0
  %5061 = vmatprep.subr.mxu0 0.0
  %5062 = vmatpush1.msra.mxu0 0.0
  %5063 = vmatprep.subr.mxu0 0.0
  %5064 = vmatpush1.msra.mxu0 0.0
  %5065 = vmatprep.subr.mxu0 0.0
  %5066 = vmatpush1.msra.mxu0 0.0
  %5067 = vmatprep.subr.mxu0 0.0
  %5068 = vmatpush1.msra.mxu0 0.0
  %5069 = vmatprep.subr.mxu0 0.0
  %5070 = vmatpush1.msra.mxu0 0.0
  %5071 = vmatprep.mubr.f32.mxu0 0.0
  %5072 = vmatmul.mubr.f32.gmra.mrb[0].mxu0 %v4775
  %v5073 = vpop.f32.mrb[0].mxu0
  %v5074 = vadd.f32 0.0, %v5073
  %v5075 = vpop.f32.mrb[0].mxu0
  %v5076 = vadd.f32 0.0, %v5075
  %5077 = vdwg.mxu0
  %v5078 = vadd.f32 %v4738, %v4861
  %v5079 = vadd.f32 %v4739, %v4863
  %v5080 = vadd.f32 %v4740, %v4932
  %v5081 = vadd.f32 %v4741, %v4934
  %v5082 = vadd.f32 %v4742, %v5003
  %v5083 = vadd.f32 %v4743, %v5005
  %v5084 = vadd.f32 %v4744, %v5074
  %v5085 = vadd.f32 %v4745, %v5076
  %s5086 = scalar_lea.vmem %s3, 48
  %v5087 = vld [vmem:[%s5086] sm:$0xff]
  %5088 = vrot.lane.b32.xlu0 %v3072, 64
  %v5089 = vpop.permute.xlu0 %5088
  %5090 = vrot.lane.b32.xlu0 %v3073, 64
  %v5091 = vpop.permute.xlu0 %5090
  %5092 = vrot.lane.b32.xlu0 %v3074, 64
  %v5093 = vpop.permute.xlu0 %5092
  %5094 = vrot.lane.b32.xlu0 %v3075, 64
  %v5095 = vpop.permute.xlu0 %5094
  %5096 = vrot.lane.b32.xlu0 %v3076, 64
  %v5097 = vpop.permute.xlu0 %5096
  %5098 = vrot.lane.b32.xlu0 %v3077, 64
  %v5099 = vpop.permute.xlu0 %5098
  %5100 = vrot.lane.b32.xlu0 %v3078, 64
  %v5101 = vpop.permute.xlu0 %5100
  %5102 = vrot.lane.b32.xlu0 %v3079, 64
  %v5103 = vpop.permute.xlu0 %5102
  %v5104 = vsel %vm2053, %v5089, %v5091
  %v5105 = vsel %vm2053, %v5091, %v5093
  %v5106 = vsel %vm2053, %v5093, %v5095
  %v5107 = vsel %vm2053, %v5095, %v5097
  %v5108 = vsel %vm2053, %v5097, %v5099
  %v5109 = vsel %vm2053, %v5099, %v5101
  %v5110 = vsel %vm2053, %v5101, %v5103
  %v5113 = vsel %vm2053, %v5103, %v5089
  %v5115 = vsel %vm3117, %v5087, 0
  %v5117 = vsel %vm3121, %v5104, 0
  %v5119 = vsel %vm3121, %v5105, 0
  %v5121 = vsel %vm3121, %v5106, 0
  %v5123 = vsel %vm3121, %v5107, 0
  %v5125 = vsel %vm3121, %v5108, 0
  %v5127 = vsel %vm3121, %v5109, 0
  %v5129 = vsel %vm3121, %v5110, 0
  %v5132 = vsel %vm3121, %v5113, 0
  %5134 = vmatprep.subr.mxu0 %v5119
  %5135 = vmatpush1.msra.mxu0 %v5117
  %5136 = vmatprep.subr.mxu0 0.0
  %5137 = vmatpush1.msra.mxu0 0.0
  %5138 = vmatprep.subr.mxu0 0.0
  %5139 = vmatpush1.msra.mxu0 0.0
  %5140 = vmatprep.subr.mxu0 0.0
  %5141 = vmatpush1.msra.mxu0 0.0
  %5142 = vmatprep.subr.mxu0 0.0
  %5143 = vmatpush1.msra.mxu0 0.0
  %5144 = vmatprep.subr.mxu0 0.0
  %5145 = vmatpush1.msra.mxu0 0.0
  %5146 = vmatprep.subr.mxu0 0.0
  %5147 = vmatpush1.msra.mxu0 0.0
  %5148 = vmatprep.subr.mxu0 0.0
  %5149 = vmatpush1.msra.mxu0 0.0
  %5150 = vmatprep.subr.mxu0 0.0
  %5151 = vmatpush1.msra.mxu0 0.0
  %5152 = vmatprep.subr.mxu0 0.0
  %5153 = vmatpush1.msra.mxu0 0.0
  %5154 = vmatprep.subr.mxu0 0.0
  %5155 = vmatpush1.msra.mxu0 0.0
  %5156 = vmatprep.subr.mxu0 0.0
  %5157 = vmatpush1.msra.mxu0 0.0
  %5158 = vmatprep.subr.mxu0 0.0
  %5159 = vmatpush1.msra.mxu0 0.0
  %5160 = vmatprep.subr.mxu0 0.0
  %5161 = vmatpush1.msra.mxu0 0.0
  %5162 = vmatprep.subr.mxu0 0.0
  %5163 = vmatpush1.msra.mxu0 0.0
  %5164 = vmatprep.subr.mxu0 0.0
  %5165 = vmatpush1.msra.mxu0 0.0
  %5166 = vmatprep.subr.mxu0 0.0
  %5167 = vmatpush1.msra.mxu0 0.0
  %5168 = vmatprep.subr.mxu0 0.0
  %5169 = vmatpush1.msra.mxu0 0.0
  %5170 = vmatprep.subr.mxu0 0.0
  %5171 = vmatpush1.msra.mxu0 0.0
  %5172 = vmatprep.subr.mxu0 0.0
  %5173 = vmatpush1.msra.mxu0 0.0
  %5174 = vmatprep.subr.mxu0 0.0
  %5175 = vmatpush1.msra.mxu0 0.0
  %5176 = vmatprep.subr.mxu0 0.0
  %5177 = vmatpush1.msra.mxu0 0.0
  %5178 = vmatprep.subr.mxu0 0.0
  %5179 = vmatpush1.msra.mxu0 0.0
  %5180 = vmatprep.subr.mxu0 0.0
  %5181 = vmatpush1.msra.mxu0 0.0
  %5182 = vmatprep.subr.mxu0 0.0
  %5183 = vmatpush1.msra.mxu0 0.0
  %5184 = vmatprep.subr.mxu0 0.0
  %5185 = vmatpush1.msra.mxu0 0.0
  %5186 = vmatprep.subr.mxu0 0.0
  %5187 = vmatpush1.msra.mxu0 0.0
  %5188 = vmatprep.subr.mxu0 0.0
  %5189 = vmatpush1.msra.mxu0 0.0
  %5190 = vmatprep.subr.mxu0 0.0
  %5191 = vmatpush1.msra.mxu0 0.0
  %5192 = vmatprep.subr.mxu0 0.0
  %5193 = vmatpush1.msra.mxu0 0.0
  %5194 = vmatprep.subr.mxu0 0.0
  %5195 = vmatpush1.msra.mxu0 0.0
  %5196 = vmatprep.subr.mxu0 0.0
  %5197 = vmatpush1.msra.mxu0 0.0
  %5198 = vmatprep.mubr.f32.mxu0 0.0
  %5199 = vmatmul.mubr.f32.gmra.mrb[0].mxu0 %v5115
  %v5200 = vpop.f32.mrb[0].mxu0
  %v5201 = vadd.f32 0.0, %v5200
  %v5202 = vpop.f32.mrb[0].mxu0
  %v5203 = vadd.f32 0.0, %v5202
  %5204 = vdwg.mxu0
  %5205 = vmatprep.subr.mxu0 %v5123
  %5206 = vmatpush1.msra.mxu0 %v5121
  %5207 = vmatprep.subr.mxu0 0.0
  %5208 = vmatpush1.msra.mxu0 0.0
  %5209 = vmatprep.subr.mxu0 0.0
  %5210 = vmatpush1.msra.mxu0 0.0
  %5211 = vmatprep.subr.mxu0 0.0
  %5212 = vmatpush1.msra.mxu0 0.0
  %5213 = vmatprep.subr.mxu0 0.0
  %5214 = vmatpush1.msra.mxu0 0.0
  %5215 = vmatprep.subr.mxu0 0.0
  %5216 = vmatpush1.msra.mxu0 0.0
  %5217 = vmatprep.subr.mxu0 0.0
  %5218 = vmatpush1.msra.mxu0 0.0
  %5219 = vmatprep.subr.mxu0 0.0
  %5220 = vmatpush1.msra.mxu0 0.0
  %5221 = vmatprep.subr.mxu0 0.0
  %5222 = vmatpush1.msra.mxu0 0.0
  %5223 = vmatprep.subr.mxu0 0.0
  %5224 = vmatpush1.msra.mxu0 0.0
  %5225 = vmatprep.subr.mxu0 0.0
  %5226 = vmatpush1.msra.mxu0 0.0
  %5227 = vmatprep.subr.mxu0 0.0
  %5228 = vmatpush1.msra.mxu0 0.0
  %5229 = vmatprep.subr.mxu0 0.0
  %5230 = vmatpush1.msra.mxu0 0.0
  %5231 = vmatprep.subr.mxu0 0.0
  %5232 = vmatpush1.msra.mxu0 0.0
  %5233 = vmatprep.subr.mxu0 0.0
  %5234 = vmatpush1.msra.mxu0 0.0
  %5235 = vmatprep.subr.mxu0 0.0
  %5236 = vmatpush1.msra.mxu0 0.0
  %5237 = vmatprep.subr.mxu0 0.0
  %5238 = vmatpush1.msra.mxu0 0.0
  %5239 = vmatprep.subr.mxu0 0.0
  %5240 = vmatpush1.msra.mxu0 0.0
  %5241 = vmatprep.subr.mxu0 0.0
  %5242 = vmatpush1.msra.mxu0 0.0
  %5243 = vmatprep.subr.mxu0 0.0
  %5244 = vmatpush1.msra.mxu0 0.0
  %5245 = vmatprep.subr.mxu0 0.0
  %5246 = vmatpush1.msra.mxu0 0.0
  %5247 = vmatprep.subr.mxu0 0.0
  %5248 = vmatpush1.msra.mxu0 0.0
  %5249 = vmatprep.subr.mxu0 0.0
  %5250 = vmatpush1.msra.mxu0 0.0
  %5251 = vmatprep.subr.mxu0 0.0
  %5252 = vmatpush1.msra.mxu0 0.0
  %5253 = vmatprep.subr.mxu0 0.0
  %5254 = vmatpush1.msra.mxu0 0.0
  %5255 = vmatprep.subr.mxu0 0.0
  %5256 = vmatpush1.msra.mxu0 0.0
  %5257 = vmatprep.subr.mxu0 0.0
  %5258 = vmatpush1.msra.mxu0 0.0
  %5259 = vmatprep.subr.mxu0 0.0
  %5260 = vmatpush1.msra.mxu0 0.0
  %5261 = vmatprep.subr.mxu0 0.0
  %5262 = vmatpush1.msra.mxu0 0.0
  %5263 = vmatprep.subr.mxu0 0.0
  %5264 = vmatpush1.msra.mxu0 0.0
  %5265 = vmatprep.subr.mxu0 0.0
  %5266 = vmatpush1.msra.mxu0 0.0
  %5267 = vmatprep.subr.mxu0 0.0
  %5268 = vmatpush1.msra.mxu0 0.0
  %5269 = vmatprep.mubr.f32.mxu0 0.0
  %5270 = vmatmul.mubr.f32.gmra.mrb[0].mxu0 %v5115
  %v5271 = vpop.f32.mrb[0].mxu0
  %v5272 = vadd.f32 0.0, %v5271
  %v5273 = vpop.f32.mrb[0].mxu0
  %v5274 = vadd.f32 0.0, %v5273
  %5275 = vdwg.mxu0
  %5276 = vmatprep.subr.mxu0 %v5127
  %5277 = vmatpush1.msra.mxu0 %v5125
  %5278 = vmatprep.subr.mxu0 0.0
  %5279 = vmatpush1.msra.mxu0 0.0
  %5280 = vmatprep.subr.mxu0 0.0
  %5281 = vmatpush1.msra.mxu0 0.0
  %5282 = vmatprep.subr.mxu0 0.0
  %5283 = vmatpush1.msra.mxu0 0.0
  %5284 = vmatprep.subr.mxu0 0.0
  %5285 = vmatpush1.msra.mxu0 0.0
  %5286 = vmatprep.subr.mxu0 0.0
  %5287 = vmatpush1.msra.mxu0 0.0
  %5288 = vmatprep.subr.mxu0 0.0
  %5289 = vmatpush1.msra.mxu0 0.0
  %5290 = vmatprep.subr.mxu0 0.0
  %5291 = vmatpush1.msra.mxu0 0.0
  %5292 = vmatprep.subr.mxu0 0.0
  %5293 = vmatpush1.msra.mxu0 0.0
  %5294 = vmatprep.subr.mxu0 0.0
  %5295 = vmatpush1.msra.mxu0 0.0
  %5296 = vmatprep.subr.mxu0 0.0
  %5297 = vmatpush1.msra.mxu0 0.0
  %5298 = vmatprep.subr.mxu0 0.0
  %5299 = vmatpush1.msra.mxu0 0.0
  %5300 = vmatprep.subr.mxu0 0.0
  %5301 = vmatpush1.msra.mxu0 0.0
  %5302 = vmatprep.subr.mxu0 0.0
  %5303 = vmatpush1.msra.mxu0 0.0
  %5304 = vmatprep.subr.mxu0 0.0
  %5305 = vmatpush1.msra.mxu0 0.0
  %5306 = vmatprep.subr.mxu0 0.0
  %5307 = vmatpush1.msra.mxu0 0.0
  %5308 = vmatprep.subr.mxu0 0.0
  %5309 = vmatpush1.msra.mxu0 0.0
  %5310 = vmatprep.subr.mxu0 0.0
  %5311 = vmatpush1.msra.mxu0 0.0
  %5312 = vmatprep.subr.mxu0 0.0
  %5313 = vmatpush1.msra.mxu0 0.0
  %5314 = vmatprep.subr.mxu0 0.0
  %5315 = vmatpush1.msra.mxu0 0.0
  %5316 = vmatprep.subr.mxu0 0.0
  %5317 = vmatpush1.msra.mxu0 0.0
  %5318 = vmatprep.subr.mxu0 0.0
  %5319 = vmatpush1.msra.mxu0 0.0
  %5320 = vmatprep.subr.mxu0 0.0
  %5321 = vmatpush1.msra.mxu0 0.0
  %5322 = vmatprep.subr.mxu0 0.0
  %5323 = vmatpush1.msra.mxu0 0.0
  %5324 = vmatprep.subr.mxu0 0.0
  %5325 = vmatpush1.msra.mxu0 0.0
  %5326 = vmatprep.subr.mxu0 0.0
  %5327 = vmatpush1.msra.mxu0 0.0
  %5328 = vmatprep.subr.mxu0 0.0
  %5329 = vmatpush1.msra.mxu0 0.0
  %5330 = vmatprep.subr.mxu0 0.0
  %5331 = vmatpush1.msra.mxu0 0.0
  %5332 = vmatprep.subr.mxu0 0.0
  %5333 = vmatpush1.msra.mxu0 0.0
  %5334 = vmatprep.subr.mxu0 0.0
  %5335 = vmatpush1.msra.mxu0 0.0
  %5336 = vmatprep.subr.mxu0 0.0
  %5337 = vmatpush1.msra.mxu0 0.0
  %5338 = vmatprep.subr.mxu0 0.0
  %5339 = vmatpush1.msra.mxu0 0.0
  %5340 = vmatprep.mubr.f32.mxu0 0.0
  %5341 = vmatmul.mubr.f32.gmra.mrb[0].mxu0 %v5115
  %v5342 = vpop.f32.mrb[0].mxu0
  %v5343 = vadd.f32 0.0, %v5342
  %v5344 = vpop.f32.mrb[0].mxu0
  %v5345 = vadd.f32 0.0, %v5344
  %5346 = vdwg.mxu0
  %5347 = vmatprep.subr.mxu0 %v5132
  %5348 = vmatpush1.msra.mxu0 %v5129
  %5349 = vmatprep.subr.mxu0 0.0
  %5350 = vmatpush1.msra.mxu0 0.0
  %5351 = vmatprep.subr.mxu0 0.0
  %5352 = vmatpush1.msra.mxu0 0.0
  %5353 = vmatprep.subr.mxu0 0.0
  %5354 = vmatpush1.msra.mxu0 0.0
  %5355 = vmatprep.subr.mxu0 0.0
  %5356 = vmatpush1.msra.mxu0 0.0
  %5357 = vmatprep.subr.mxu0 0.0
  %5358 = vmatpush1.msra.mxu0 0.0
  %5359 = vmatprep.subr.mxu0 0.0
  %5360 = vmatpush1.msra.mxu0 0.0
  %5361 = vmatprep.subr.mxu0 0.0
  %5362 = vmatpush1.msra.mxu0 0.0
  %5363 = vmatprep.subr.mxu0 0.0
  %5364 = vmatpush1.msra.mxu0 0.0
  %5365 = vmatprep.subr.mxu0 0.0
  %5366 = vmatpush1.msra.mxu0 0.0
  %5367 = vmatprep.subr.mxu0 0.0
  %5368 = vmatpush1.msra.mxu0 0.0
  %5369 = vmatprep.subr.mxu0 0.0
  %5370 = vmatpush1.msra.mxu0 0.0
  %5371 = vmatprep.subr.mxu0 0.0
  %5372 = vmatpush1.msra.mxu0 0.0
  %5373 = vmatprep.subr.mxu0 0.0
  %5374 = vmatpush1.msra.mxu0 0.0
  %5375 = vmatprep.subr.mxu0 0.0
  %5376 = vmatpush1.msra.mxu0 0.0
  %5377 = vmatprep.subr.mxu0 0.0
  %5378 = vmatpush1.msra.mxu0 0.0
  %5379 = vmatprep.subr.mxu0 0.0
  %5380 = vmatpush1.msra.mxu0 0.0
  %5381 = vmatprep.subr.mxu0 0.0
  %5382 = vmatpush1.msra.mxu0 0.0
  %5383 = vmatprep.subr.mxu0 0.0
  %5384 = vmatpush1.msra.mxu0 0.0
  %5385 = vmatprep.subr.mxu0 0.0
  %5386 = vmatpush1.msra.mxu0 0.0
  %5387 = vmatprep.subr.mxu0 0.0
  %5388 = vmatpush1.msra.mxu0 0.0
  %5389 = vmatprep.subr.mxu0 0.0
  %5390 = vmatpush1.msra.mxu0 0.0
  %5391 = vmatprep.subr.mxu0 0.0
  %5392 = vmatpush1.msra.mxu0 0.0
  %5393 = vmatprep.subr.mxu0 0.0
  %5394 = vmatpush1.msra.mxu0 0.0
  %5395 = vmatprep.subr.mxu0 0.0
  %5396 = vmatpush1.msra.mxu0 0.0
  %5397 = vmatprep.subr.mxu0 0.0
  %5398 = vmatpush1.msra.mxu0 0.0
  %5399 = vmatprep.subr.mxu0 0.0
  %5400 = vmatpush1.msra.mxu0 0.0
  %5401 = vmatprep.subr.mxu0 0.0
  %5402 = vmatpush1.msra.mxu0 0.0
  %5403 = vmatprep.subr.mxu0 0.0
  %5404 = vmatpush1.msra.mxu0 0.0
  %5405 = vmatprep.subr.mxu0 0.0
  %5406 = vmatpush1.msra.mxu0 0.0
  %5407 = vmatprep.subr.mxu0 0.0
  %5408 = vmatpush1.msra.mxu0 0.0
  %5409 = vmatprep.subr.mxu0 0.0
  %5410 = vmatpush1.msra.mxu0 0.0
  %5411 = vmatprep.mubr.f32.mxu0 0.0
  %5412 = vmatmul.mubr.f32.gmra.mrb[0].mxu0 %v5115
  %v5413 = vpop.f32.mrb[0].mxu0
  %v5414 = vadd.f32 0.0, %v5413
  %v5415 = vpop.f32.mrb[0].mxu0
  %v5416 = vadd.f32 0.0, %v5415
  %5417 = vdwg.mxu0
  %v5418 = vadd.f32 %v5078, %v5201
  %v5419 = vadd.f32 %v5079, %v5203
  %v5420 = vadd.f32 %v5080, %v5272
  %v5421 = vadd.f32 %v5081, %v5274
  %v5422 = vadd.f32 %v5082, %v5343
  %v5423 = vadd.f32 %v5083, %v5345
  %v5424 = vadd.f32 %v5084, %v5414
  %v5425 = vadd.f32 %v5085, %v5416
  %s5426 = scalar_lea.vmem %s3, 56
  %v5427 = vld [vmem:[%s5426] sm:$0xff]
  %5428 = vrot.lane.b32.xlu0 %v3072, 63
  %v5429 = vpop.permute.xlu0 %5428
  %5430 = vrot.lane.b32.xlu0 %v3073, 63
  %v5431 = vpop.permute.xlu0 %5430
  %5432 = vrot.lane.b32.xlu0 %v3074, 63
  %v5433 = vpop.permute.xlu0 %5432
  %5434 = vrot.lane.b32.xlu0 %v3075, 63
  %v5435 = vpop.permute.xlu0 %5434
  %5436 = vrot.lane.b32.xlu0 %v3076, 63
  %v5437 = vpop.permute.xlu0 %5436
  %5438 = vrot.lane.b32.xlu0 %v3077, 63
  %v5439 = vpop.permute.xlu0 %5438
  %5440 = vrot.lane.b32.xlu0 %v3078, 63
  %v5441 = vpop.permute.xlu0 %5440
  %5442 = vrot.lane.b32.xlu0 %v3079, 63
  %v5443 = vpop.permute.xlu0 %5442
  %v5444 = vsel %vm2394, %v5429, %v5431
  %v5445 = vsel %vm2394, %v5431, %v5433
  %v5446 = vsel %vm2394, %v5433, %v5435
  %v5447 = vsel %vm2394, %v5435, %v5437
  %v5448 = vsel %vm2394, %v5437, %v5439
  %v5449 = vsel %vm2394, %v5439, %v5441
  %v5450 = vsel %vm2394, %v5441, %v5443
  %v5453 = vsel %vm2394, %v5443, %v5429
  %v5455 = vsel %vm3117, %v5427, 0
  %v5457 = vsel %vm3121, %v5444, 0
  %v5459 = vsel %vm3121, %v5445, 0
  %v5461 = vsel %vm3121, %v5446, 0
  %v5463 = vsel %vm3121, %v5447, 0
  %v5465 = vsel %vm3121, %v5448, 0
  %v5467 = vsel %vm3121, %v5449, 0
  %v5469 = vsel %vm3121, %v5450, 0
  %v5472 = vsel %vm3121, %v5453, 0
  %5474 = vmatprep.subr.mxu0 %v5459
  %5475 = vmatpush1.msra.mxu0 %v5457
  %5476 = vmatprep.subr.mxu0 0.0
  %5477 = vmatpush1.msra.mxu0 0.0
  %5478 = vmatprep.subr.mxu0 0.0
  %5479 = vmatpush1.msra.mxu0 0.0
  %5480 = vmatprep.subr.mxu0 0.0
  %5481 = vmatpush1.msra.mxu0 0.0
  %5482 = vmatprep.subr.mxu0 0.0
  %5483 = vmatpush1.msra.mxu0 0.0
  %5484 = vmatprep.subr.mxu0 0.0
  %5485 = vmatpush1.msra.mxu0 0.0
  %5486 = vmatprep.subr.mxu0 0.0
  %5487 = vmatpush1.msra.mxu0 0.0
  %5488 = vmatprep.subr.mxu0 0.0
  %5489 = vmatpush1.msra.mxu0 0.0
  %5490 = vmatprep.subr.mxu0 0.0
  %5491 = vmatpush1.msra.mxu0 0.0
  %5492 = vmatprep.subr.mxu0 0.0
  %5493 = vmatpush1.msra.mxu0 0.0
  %5494 = vmatprep.subr.mxu0 0.0
  %5495 = vmatpush1.msra.mxu0 0.0
  %5496 = vmatprep.subr.mxu0 0.0
  %5497 = vmatpush1.msra.mxu0 0.0
  %5498 = vmatprep.subr.mxu0 0.0
  %5499 = vmatpush1.msra.mxu0 0.0
  %5500 = vmatprep.subr.mxu0 0.0
  %5501 = vmatpush1.msra.mxu0 0.0
  %5502 = vmatprep.subr.mxu0 0.0
  %5503 = vmatpush1.msra.mxu0 0.0
  %5504 = vmatprep.subr.mxu0 0.0
  %5505 = vmatpush1.msra.mxu0 0.0
  %5506 = vmatprep.subr.mxu0 0.0
  %5507 = vmatpush1.msra.mxu0 0.0
  %5508 = vmatprep.subr.mxu0 0.0
  %5509 = vmatpush1.msra.mxu0 0.0
  %5510 = vmatprep.subr.mxu0 0.0
  %5511 = vmatpush1.msra.mxu0 0.0
  %5512 = vmatprep.subr.mxu0 0.0
  %5513 = vmatpush1.msra.mxu0 0.0
  %5514 = vmatprep.subr.mxu0 0.0
  %5515 = vmatpush1.msra.mxu0 0.0
  %5516 = vmatprep.subr.mxu0 0.0
  %5517 = vmatpush1.msra.mxu0 0.0
  %5518 = vmatprep.subr.mxu0 0.0
  %5519 = vmatpush1.msra.mxu0 0.0
  %5520 = vmatprep.subr.mxu0 0.0
  %5521 = vmatpush1.msra.mxu0 0.0
  %5522 = vmatprep.subr.mxu0 0.0
  %5523 = vmatpush1.msra.mxu0 0.0
  %5524 = vmatprep.subr.mxu0 0.0
  %5525 = vmatpush1.msra.mxu0 0.0
  %5526 = vmatprep.subr.mxu0 0.0
  %5527 = vmatpush1.msra.mxu0 0.0
  %5528 = vmatprep.subr.mxu0 0.0
  %5529 = vmatpush1.msra.mxu0 0.0
  %5530 = vmatprep.subr.mxu0 0.0
  %5531 = vmatpush1.msra.mxu0 0.0
  %5532 = vmatprep.subr.mxu0 0.0
  %5533 = vmatpush1.msra.mxu0 0.0
  %5534 = vmatprep.subr.mxu0 0.0
  %5535 = vmatpush1.msra.mxu0 0.0
  %5536 = vmatprep.subr.mxu0 0.0
  %5537 = vmatpush1.msra.mxu0 0.0
  %5538 = vmatprep.mubr.f32.mxu0 0.0
  %5539 = vmatmul.mubr.f32.gmra.mrb[0].mxu0 %v5455
  %v5540 = vpop.f32.mrb[0].mxu0
  %v5541 = vadd.f32 0.0, %v5540
  %v5542 = vpop.f32.mrb[0].mxu0
  %v5543 = vadd.f32 0.0, %v5542
  %5544 = vdwg.mxu0
  %5545 = vmatprep.subr.mxu0 %v5463
  %5546 = vmatpush1.msra.mxu0 %v5461
  %5547 = vmatprep.subr.mxu0 0.0
  %5548 = vmatpush1.msra.mxu0 0.0
  %5549 = vmatprep.subr.mxu0 0.0
  %5550 = vmatpush1.msra.mxu0 0.0
  %5551 = vmatprep.subr.mxu0 0.0
  %5552 = vmatpush1.msra.mxu0 0.0
  %5553 = vmatprep.subr.mxu0 0.0
  %5554 = vmatpush1.msra.mxu0 0.0
  %5555 = vmatprep.subr.mxu0 0.0
  %5556 = vmatpush1.msra.mxu0 0.0
  %5557 = vmatprep.subr.mxu0 0.0
  %5558 = vmatpush1.msra.mxu0 0.0
  %5559 = vmatprep.subr.mxu0 0.0
  %5560 = vmatpush1.msra.mxu0 0.0
  %5561 = vmatprep.subr.mxu0 0.0
  %5562 = vmatpush1.msra.mxu0 0.0
  %5563 = vmatprep.subr.mxu0 0.0
  %5564 = vmatpush1.msra.mxu0 0.0
  %5565 = vmatprep.subr.mxu0 0.0
  %5566 = vmatpush1.msra.mxu0 0.0
  %5567 = vmatprep.subr.mxu0 0.0
  %5568 = vmatpush1.msra.mxu0 0.0
  %5569 = vmatprep.subr.mxu0 0.0
  %5570 = vmatpush1.msra.mxu0 0.0
  %5571 = vmatprep.subr.mxu0 0.0
  %5572 = vmatpush1.msra.mxu0 0.0
  %5573 = vmatprep.subr.mxu0 0.0
  %5574 = vmatpush1.msra.mxu0 0.0
  %5575 = vmatprep.subr.mxu0 0.0
  %5576 = vmatpush1.msra.mxu0 0.0
  %5577 = vmatprep.subr.mxu0 0.0
  %5578 = vmatpush1.msra.mxu0 0.0
  %5579 = vmatprep.subr.mxu0 0.0
  %5580 = vmatpush1.msra.mxu0 0.0
  %5581 = vmatprep.subr.mxu0 0.0
  %5582 = vmatpush1.msra.mxu0 0.0
  %5583 = vmatprep.subr.mxu0 0.0
  %5584 = vmatpush1.msra.mxu0 0.0
  %5585 = vmatprep.subr.mxu0 0.0
  %5586 = vmatpush1.msra.mxu0 0.0
  %5587 = vmatprep.subr.mxu0 0.0
  %5588 = vmatpush1.msra.mxu0 0.0
  %5589 = vmatprep.subr.mxu0 0.0
  %5590 = vmatpush1.msra.mxu0 0.0
  %5591 = vmatprep.subr.mxu0 0.0
  %5592 = vmatpush1.msra.mxu0 0.0
  %5593 = vmatprep.subr.mxu0 0.0
  %5594 = vmatpush1.msra.mxu0 0.0
  %5595 = vmatprep.subr.mxu0 0.0
  %5596 = vmatpush1.msra.mxu0 0.0
  %5597 = vmatprep.subr.mxu0 0.0
  %5598 = vmatpush1.msra.mxu0 0.0
  %5599 = vmatprep.subr.mxu0 0.0
  %5600 = vmatpush1.msra.mxu0 0.0
  %5601 = vmatprep.subr.mxu0 0.0
  %5602 = vmatpush1.msra.mxu0 0.0
  %5603 = vmatprep.subr.mxu0 0.0
  %5604 = vmatpush1.msra.mxu0 0.0
  %5605 = vmatprep.subr.mxu0 0.0
  %5606 = vmatpush1.msra.mxu0 0.0
  %5607 = vmatprep.subr.mxu0 0.0
  %5608 = vmatpush1.msra.mxu0 0.0
  %5609 = vmatprep.mubr.f32.mxu0 0.0
  %5610 = vmatmul.mubr.f32.gmra.mrb[0].mxu0 %v5455
  %v5611 = vpop.f32.mrb[0].mxu0
  %v5612 = vadd.f32 0.0, %v5611
  %v5613 = vpop.f32.mrb[0].mxu0
  %v5614 = vadd.f32 0.0, %v5613
  %5615 = vdwg.mxu0
  %5616 = vmatprep.subr.mxu0 %v5467
  %5617 = vmatpush1.msra.mxu0 %v5465
  %5618 = vmatprep.subr.mxu0 0.0
  %5619 = vmatpush1.msra.mxu0 0.0
  %5620 = vmatprep.subr.mxu0 0.0
  %5621 = vmatpush1.msra.mxu0 0.0
  %5622 = vmatprep.subr.mxu0 0.0
  %5623 = vmatpush1.msra.mxu0 0.0
  %5624 = vmatprep.subr.mxu0 0.0
  %5625 = vmatpush1.msra.mxu0 0.0
  %5626 = vmatprep.subr.mxu0 0.0
  %5627 = vmatpush1.msra.mxu0 0.0
  %5628 = vmatprep.subr.mxu0 0.0
  %5629 = vmatpush1.msra.mxu0 0.0
  %5630 = vmatprep.subr.mxu0 0.0
  %5631 = vmatpush1.msra.mxu0 0.0
  %5632 = vmatprep.subr.mxu0 0.0
  %5633 = vmatpush1.msra.mxu0 0.0
  %5634 = vmatprep.subr.mxu0 0.0
  %5635 = vmatpush1.msra.mxu0 0.0
  %5636 = vmatprep.subr.mxu0 0.0
  %5637 = vmatpush1.msra.mxu0 0.0
  %5638 = vmatprep.subr.mxu0 0.0
  %5639 = vmatpush1.msra.mxu0 0.0
  %5640 = vmatprep.subr.mxu0 0.0
  %5641 = vmatpush1.msra.mxu0 0.0
  %5642 = vmatprep.subr.mxu0 0.0
  %5643 = vmatpush1.msra.mxu0 0.0
  %5644 = vmatprep.subr.mxu0 0.0
  %5645 = vmatpush1.msra.mxu0 0.0
  %5646 = vmatprep.subr.mxu0 0.0
  %5647 = vmatpush1.msra.mxu0 0.0
  %5648 = vmatprep.subr.mxu0 0.0
  %5649 = vmatpush1.msra.mxu0 0.0
  %5650 = vmatprep.subr.mxu0 0.0
  %5651 = vmatpush1.msra.mxu0 0.0
  %5652 = vmatprep.subr.mxu0 0.0
  %5653 = vmatpush1.msra.mxu0 0.0
  %5654 = vmatprep.subr.mxu0 0.0
  %5655 = vmatpush1.msra.mxu0 0.0
  %5656 = vmatprep.subr.mxu0 0.0
  %5657 = vmatpush1.msra.mxu0 0.0
  %5658 = vmatprep.subr.mxu0 0.0
  %5659 = vmatpush1.msra.mxu0 0.0
  %5660 = vmatprep.subr.mxu0 0.0
  %5661 = vmatpush1.msra.mxu0 0.0
  %5662 = vmatprep.subr.mxu0 0.0
  %5663 = vmatpush1.msra.mxu0 0.0
  %5664 = vmatprep.subr.mxu0 0.0
  %5665 = vmatpush1.msra.mxu0 0.0
  %5666 = vmatprep.subr.mxu0 0.0
  %5667 = vmatpush1.msra.mxu0 0.0
  %5668 = vmatprep.subr.mxu0 0.0
  %5669 = vmatpush1.msra.mxu0 0.0
  %5670 = vmatprep.subr.mxu0 0.0
  %5671 = vmatpush1.msra.mxu0 0.0
  %5672 = vmatprep.subr.mxu0 0.0
  %5673 = vmatpush1.msra.mxu0 0.0
  %5674 = vmatprep.subr.mxu0 0.0
  %5675 = vmatpush1.msra.mxu0 0.0
  %5676 = vmatprep.subr.mxu0 0.0
  %5677 = vmatpush1.msra.mxu0 0.0
  %5678 = vmatprep.subr.mxu0 0.0
  %5679 = vmatpush1.msra.mxu0 0.0
  %5680 = vmatprep.mubr.f32.mxu0 0.0
  %5681 = vmatmul.mubr.f32.gmra.mrb[0].mxu0 %v5455
  %v5682 = vpop.f32.mrb[0].mxu0
  %v5683 = vadd.f32 0.0, %v5682
  %v5684 = vpop.f32.mrb[0].mxu0
  %v5685 = vadd.f32 0.0, %v5684
  %5686 = vdwg.mxu0
  %5687 = vmatprep.subr.mxu0 %v5472
  %5688 = vmatpush1.msra.mxu0 %v5469
  %5689 = vmatprep.subr.mxu0 0.0
  %5690 = vmatpush1.msra.mxu0 0.0
  %5691 = vmatprep.subr.mxu0 0.0
  %5692 = vmatpush1.msra.mxu0 0.0
  %5693 = vmatprep.subr.mxu0 0.0
  %5694 = vmatpush1.msra.mxu0 0.0
  %5695 = vmatprep.subr.mxu0 0.0
  %5696 = vmatpush1.msra.mxu0 0.0
  %5697 = vmatprep.subr.mxu0 0.0
  %5698 = vmatpush1.msra.mxu0 0.0
  %5699 = vmatprep.subr.mxu0 0.0
  %5700 = vmatpush1.msra.mxu0 0.0
  %5701 = vmatprep.subr.mxu0 0.0
  %5702 = vmatpush1.msra.mxu0 0.0
  %5703 = vmatprep.subr.mxu0 0.0
  %5704 = vmatpush1.msra.mxu0 0.0
  %5705 = vmatprep.subr.mxu0 0.0
  %5706 = vmatpush1.msra.mxu0 0.0
  %5707 = vmatprep.subr.mxu0 0.0
  %5708 = vmatpush1.msra.mxu0 0.0
  %5709 = vmatprep.subr.mxu0 0.0
  %5710 = vmatpush1.msra.mxu0 0.0
  %5711 = vmatprep.subr.mxu0 0.0
  %5712 = vmatpush1.msra.mxu0 0.0
  %5713 = vmatprep.subr.mxu0 0.0
  %5714 = vmatpush1.msra.mxu0 0.0
  %5715 = vmatprep.subr.mxu0 0.0
  %5716 = vmatpush1.msra.mxu0 0.0
  %5717 = vmatprep.subr.mxu0 0.0
  %5718 = vmatpush1.msra.mxu0 0.0
  %5719 = vmatprep.subr.mxu0 0.0
  %5720 = vmatpush1.msra.mxu0 0.0
  %5721 = vmatprep.subr.mxu0 0.0
  %5722 = vmatpush1.msra.mxu0 0.0
  %5723 = vmatprep.subr.mxu0 0.0
  %5724 = vmatpush1.msra.mxu0 0.0
  %5725 = vmatprep.subr.mxu0 0.0
  %5726 = vmatpush1.msra.mxu0 0.0
  %5727 = vmatprep.subr.mxu0 0.0
  %5728 = vmatpush1.msra.mxu0 0.0
  %5729 = vmatprep.subr.mxu0 0.0
  %5730 = vmatpush1.msra.mxu0 0.0
  %5731 = vmatprep.subr.mxu0 0.0
  %5732 = vmatpush1.msra.mxu0 0.0
  %5733 = vmatprep.subr.mxu0 0.0
  %5734 = vmatpush1.msra.mxu0 0.0
  %5735 = vmatprep.subr.mxu0 0.0
  %5736 = vmatpush1.msra.mxu0 0.0
  %5737 = vmatprep.subr.mxu0 0.0
  %5738 = vmatpush1.msra.mxu0 0.0
  %5739 = vmatprep.subr.mxu0 0.0
  %5740 = vmatpush1.msra.mxu0 0.0
  %5741 = vmatprep.subr.mxu0 0.0
  %5742 = vmatpush1.msra.mxu0 0.0
  %5743 = vmatprep.subr.mxu0 0.0
  %5744 = vmatpush1.msra.mxu0 0.0
  %5745 = vmatprep.subr.mxu0 0.0
  %5746 = vmatpush1.msra.mxu0 0.0
  %5747 = vmatprep.subr.mxu0 0.0
  %5748 = vmatpush1.msra.mxu0 0.0
  %5749 = vmatprep.subr.mxu0 0.0
  %5750 = vmatpush1.msra.mxu0 0.0
  %5751 = vmatprep.mubr.f32.mxu0 0.0
  %5752 = vmatmul.mubr.f32.gmra.mrb[0].mxu0 %v5455
  %v5753 = vpop.f32.mrb[0].mxu0
  %v5754 = vadd.f32 0.0, %v5753
  %v5755 = vpop.f32.mrb[0].mxu0
  %v5756 = vadd.f32 0.0, %v5755
  %5757 = vdwg.mxu0
  %v5758 = vadd.f32 %v5418, %v5541
  %v5759 = vadd.f32 %v5419, %v5543
  %v5760 = vadd.f32 %v5420, %v5612
  %v5761 = vadd.f32 %v5421, %v5614
  %v5762 = vadd.f32 %v5422, %v5683
  %v5763 = vadd.f32 %v5423, %v5685
  %v5764 = vadd.f32 %v5424, %v5754
  %v5765 = vadd.f32 %v5425, %v5756
  %s5766 = scalar_lea.vmem %s3, 64
  %v5767 = vld [vmem:[%s5766] sm:$0xff]
  %5768 = vrot.lane.b32.xlu0 %v3072, 62
  %v5769 = vpop.permute.xlu0 %5768
  %5770 = vrot.lane.b32.xlu0 %v3073, 62
  %v5771 = vpop.permute.xlu0 %5770
  %5772 = vrot.lane.b32.xlu0 %v3074, 62
  %v5773 = vpop.permute.xlu0 %5772
  %5774 = vrot.lane.b32.xlu0 %v3075, 62
  %v5775 = vpop.permute.xlu0 %5774
  %5776 = vrot.lane.b32.xlu0 %v3076, 62
  %v5777 = vpop.permute.xlu0 %5776
  %5778 = vrot.lane.b32.xlu0 %v3077, 62
  %v5779 = vpop.permute.xlu0 %5778
  %5780 = vrot.lane.b32.xlu0 %v3078, 62
  %v5781 = vpop.permute.xlu0 %5780
  %5782 = vrot.lane.b32.xlu0 %v3079, 62
  %v5783 = vpop.permute.xlu0 %5782
  %v5784 = vsel %vm2735, %v5769, %v5771
  %v5785 = vsel %vm2735, %v5771, %v5773
  %v5786 = vsel %vm2735, %v5773, %v5775
  %v5787 = vsel %vm2735, %v5775, %v5777
  %v5788 = vsel %vm2735, %v5777, %v5779
  %v5789 = vsel %vm2735, %v5779, %v5781
  %v5790 = vsel %vm2735, %v5781, %v5783
  %v5793 = vsel %vm2735, %v5783, %v5769
  %v5795 = vsel %vm3117, %v5767, 0
  %v5797 = vsel %vm3121, %v5784, 0
  %v5799 = vsel %vm3121, %v5785, 0
  %v5801 = vsel %vm3121, %v5786, 0
  %v5803 = vsel %vm3121, %v5787, 0
  %v5805 = vsel %vm3121, %v5788, 0
  %v5807 = vsel %vm3121, %v5789, 0
  %v5809 = vsel %vm3121, %v5790, 0
  %v5812 = vsel %vm3121, %v5793, 0
  %5814 = vmatprep.subr.mxu0 %v5799
  %5815 = vmatpush1.msra.mxu0 %v5797
  %5816 = vmatprep.subr.mxu0 0.0
  %5817 = vmatpush1.msra.mxu0 0.0
  %5818 = vmatprep.subr.mxu0 0.0
  %5819 = vmatpush1.msra.mxu0 0.0
  %5820 = vmatprep.subr.mxu0 0.0
  %5821 = vmatpush1.msra.mxu0 0.0
  %5822 = vmatprep.subr.mxu0 0.0
  %5823 = vmatpush1.msra.mxu0 0.0
  %5824 = vmatprep.subr.mxu0 0.0
  %5825 = vmatpush1.msra.mxu0 0.0
  %5826 = vmatprep.subr.mxu0 0.0
  %5827 = vmatpush1.msra.mxu0 0.0
  %5828 = vmatprep.subr.mxu0 0.0
  %5829 = vmatpush1.msra.mxu0 0.0
  %5830 = vmatprep.subr.mxu0 0.0
  %5831 = vmatpush1.msra.mxu0 0.0
  %5832 = vmatprep.subr.mxu0 0.0
  %5833 = vmatpush1.msra.mxu0 0.0
  %5834 = vmatprep.subr.mxu0 0.0
  %5835 = vmatpush1.msra.mxu0 0.0
  %5836 = vmatprep.subr.mxu0 0.0
  %5837 = vmatpush1.msra.mxu0 0.0
  %5838 = vmatprep.subr.mxu0 0.0
  %5839 = vmatpush1.msra.mxu0 0.0
  %5840 = vmatprep.subr.mxu0 0.0
  %5841 = vmatpush1.msra.mxu0 0.0
  %5842 = vmatprep.subr.mxu0 0.0
  %5843 = vmatpush1.msra.mxu0 0.0
  %5844 = vmatprep.subr.mxu0 0.0
  %5845 = vmatpush1.msra.mxu0 0.0
  %5846 = vmatprep.subr.mxu0 0.0
  %5847 = vmatpush1.msra.mxu0 0.0
  %5848 = vmatprep.subr.mxu0 0.0
  %5849 = vmatpush1.msra.mxu0 0.0
  %5850 = vmatprep.subr.mxu0 0.0
  %5851 = vmatpush1.msra.mxu0 0.0
  %5852 = vmatprep.subr.mxu0 0.0
  %5853 = vmatpush1.msra.mxu0 0.0
  %5854 = vmatprep.subr.mxu0 0.0
  %5855 = vmatpush1.msra.mxu0 0.0
  %5856 = vmatprep.subr.mxu0 0.0
  %5857 = vmatpush1.msra.mxu0 0.0
  %5858 = vmatprep.subr.mxu0 0.0
  %5859 = vmatpush1.msra.mxu0 0.0
  %5860 = vmatprep.subr.mxu0 0.0
  %5861 = vmatpush1.msra.mxu0 0.0
  %5862 = vmatprep.subr.mxu0 0.0
  %5863 = vmatpush1.msra.mxu0 0.0
  %5864 = vmatprep.subr.mxu0 0.0
  %5865 = vmatpush1.msra.mxu0 0.0
  %5866 = vmatprep.subr.mxu0 0.0
  %5867 = vmatpush1.msra.mxu0 0.0
  %5868 = vmatprep.subr.mxu0 0.0
  %5869 = vmatpush1.msra.mxu0 0.0
  %5870 = vmatprep.subr.mxu0 0.0
  %5871 = vmatpush1.msra.mxu0 0.0
  %5872 = vmatprep.subr.mxu0 0.0
  %5873 = vmatpush1.msra.mxu0 0.0
  %5874 = vmatprep.subr.mxu0 0.0
  %5875 = vmatpush1.msra.mxu0 0.0
  %5876 = vmatprep.subr.mxu0 0.0
  %5877 = vmatpush1.msra.mxu0 0.0
  %5878 = vmatprep.mubr.f32.mxu0 0.0
  %5879 = vmatmul.mubr.f32.gmra.mrb[0].mxu0 %v5795
  %v5880 = vpop.f32.mrb[0].mxu0
  %v5881 = vadd.f32 0.0, %v5880
  %v5882 = vpop.f32.mrb[0].mxu0
  %v5883 = vadd.f32 0.0, %v5882
  %5884 = vdwg.mxu0
  %5885 = vmatprep.subr.mxu0 %v5803
  %5886 = vmatpush1.msra.mxu0 %v5801
  %5887 = vmatprep.subr.mxu0 0.0
  %5888 = vmatpush1.msra.mxu0 0.0
  %5889 = vmatprep.subr.mxu0 0.0
  %5890 = vmatpush1.msra.mxu0 0.0
  %5891 = vmatprep.subr.mxu0 0.0
  %5892 = vmatpush1.msra.mxu0 0.0
  %5893 = vmatprep.subr.mxu0 0.0
  %5894 = vmatpush1.msra.mxu0 0.0
  %5895 = vmatprep.subr.mxu0 0.0
  %5896 = vmatpush1.msra.mxu0 0.0
  %5897 = vmatprep.subr.mxu0 0.0
  %5898 = vmatpush1.msra.mxu0 0.0
  %5899 = vmatprep.subr.mxu0 0.0
  %5900 = vmatpush1.msra.mxu0 0.0
  %5901 = vmatprep.subr.mxu0 0.0
  %5902 = vmatpush1.msra.mxu0 0.0
  %5903 = vmatprep.subr.mxu0 0.0
  %5904 = vmatpush1.msra.mxu0 0.0
  %5905 = vmatprep.subr.mxu0 0.0
  %5906 = vmatpush1.msra.mxu0 0.0
  %5907 = vmatprep.subr.mxu0 0.0
  %5908 = vmatpush1.msra.mxu0 0.0
  %5909 = vmatprep.subr.mxu0 0.0
  %5910 = vmatpush1.msra.mxu0 0.0
  %5911 = vmatprep.subr.mxu0 0.0
  %5912 = vmatpush1.msra.mxu0 0.0
  %5913 = vmatprep.subr.mxu0 0.0
  %5914 = vmatpush1.msra.mxu0 0.0
  %5915 = vmatprep.subr.mxu0 0.0
  %5916 = vmatpush1.msra.mxu0 0.0
  %5917 = vmatprep.subr.mxu0 0.0
  %5918 = vmatpush1.msra.mxu0 0.0
  %5919 = vmatprep.subr.mxu0 0.0
  %5920 = vmatpush1.msra.mxu0 0.0
  %5921 = vmatprep.subr.mxu0 0.0
  %5922 = vmatpush1.msra.mxu0 0.0
  %5923 = vmatprep.subr.mxu0 0.0
  %5924 = vmatpush1.msra.mxu0 0.0
  %5925 = vmatprep.subr.mxu0 0.0
  %5926 = vmatpush1.msra.mxu0 0.0
  %5927 = vmatprep.subr.mxu0 0.0
  %5928 = vmatpush1.msra.mxu0 0.0
  %5929 = vmatprep.subr.mxu0 0.0
  %5930 = vmatpush1.msra.mxu0 0.0
  %5931 = vmatprep.subr.mxu0 0.0
  %5932 = vmatpush1.msra.mxu0 0.0
  %5933 = vmatprep.subr.mxu0 0.0
  %5934 = vmatpush1.msra.mxu0 0.0
  %5935 = vmatprep.subr.mxu0 0.0
  %5936 = vmatpush1.msra.mxu0 0.0
  %5937 = vmatprep.subr.mxu0 0.0
  %5938 = vmatpush1.msra.mxu0 0.0
  %5939 = vmatprep.subr.mxu0 0.0
  %5940 = vmatpush1.msra.mxu0 0.0
  %5941 = vmatprep.subr.mxu0 0.0
  %5942 = vmatpush1.msra.mxu0 0.0
  %5943 = vmatprep.subr.mxu0 0.0
  %5944 = vmatpush1.msra.mxu0 0.0
  %5945 = vmatprep.subr.mxu0 0.0
  %5946 = vmatpush1.msra.mxu0 0.0
  %5947 = vmatprep.subr.mxu0 0.0
  %5948 = vmatpush1.msra.mxu0 0.0
  %5949 = vmatprep.mubr.f32.mxu0 0.0
  %5950 = vmatmul.mubr.f32.gmra.mrb[0].mxu0 %v5795
  %v5951 = vpop.f32.mrb[0].mxu0
  %v5952 = vadd.f32 0.0, %v5951
  %v5953 = vpop.f32.mrb[0].mxu0
  %v5954 = vadd.f32 0.0, %v5953
  %5955 = vdwg.mxu0
  %5956 = vmatprep.subr.mxu0 %v5807
  %5957 = vmatpush1.msra.mxu0 %v5805
  %5958 = vmatprep.subr.mxu0 0.0
  %5959 = vmatpush1.msra.mxu0 0.0
  %5960 = vmatprep.subr.mxu0 0.0
  %5961 = vmatpush1.msra.mxu0 0.0
  %5962 = vmatprep.subr.mxu0 0.0
  %5963 = vmatpush1.msra.mxu0 0.0
  %5964 = vmatprep.subr.mxu0 0.0
  %5965 = vmatpush1.msra.mxu0 0.0
  %5966 = vmatprep.subr.mxu0 0.0
  %5967 = vmatpush1.msra.mxu0 0.0
  %5968 = vmatprep.subr.mxu0 0.0
  %5969 = vmatpush1.msra.mxu0 0.0
  %5970 = vmatprep.subr.mxu0 0.0
  %5971 = vmatpush1.msra.mxu0 0.0
  %5972 = vmatprep.subr.mxu0 0.0
  %5973 = vmatpush1.msra.mxu0 0.0
  %5974 = vmatprep.subr.mxu0 0.0
  %5975 = vmatpush1.msra.mxu0 0.0
  %5976 = vmatprep.subr.mxu0 0.0
  %5977 = vmatpush1.msra.mxu0 0.0
  %5978 = vmatprep.subr.mxu0 0.0
  %5979 = vmatpush1.msra.mxu0 0.0
  %5980 = vmatprep.subr.mxu0 0.0
  %5981 = vmatpush1.msra.mxu0 0.0
  %5982 = vmatprep.subr.mxu0 0.0
  %5983 = vmatpush1.msra.mxu0 0.0
  %5984 = vmatprep.subr.mxu0 0.0
  %5985 = vmatpush1.msra.mxu0 0.0
  %5986 = vmatprep.subr.mxu0 0.0
  %5987 = vmatpush1.msra.mxu0 0.0
  %5988 = vmatprep.subr.mxu0 0.0
  %5989 = vmatpush1.msra.mxu0 0.0
  %5990 = vmatprep.subr.mxu0 0.0
  %5991 = vmatpush1.msra.mxu0 0.0
  %5992 = vmatprep.subr.mxu0 0.0
  %5993 = vmatpush1.msra.mxu0 0.0
  %5994 = vmatprep.subr.mxu0 0.0
  %5995 = vmatpush1.msra.mxu0 0.0
  %5996 = vmatprep.subr.mxu0 0.0
  %5997 = vmatpush1.msra.mxu0 0.0
  %5998 = vmatprep.subr.mxu0 0.0
  %5999 = vmatpush1.msra.mxu0 0.0
  %6000 = vmatprep.subr.mxu0 0.0
  %6001 = vmatpush1.msra.mxu0 0.0
  %6002 = vmatprep.subr.mxu0 0.0
  %6003 = vmatpush1.msra.mxu0 0.0
  %6004 = vmatprep.subr.mxu0 0.0
  %6005 = vmatpush1.msra.mxu0 0.0
  %6006 = vmatprep.subr.mxu0 0.0
  %6007 = vmatpush1.msra.mxu0 0.0
  %6008 = vmatprep.subr.mxu0 0.0
  %6009 = vmatpush1.msra.mxu0 0.0
  %6010 = vmatprep.subr.mxu0 0.0
  %6011 = vmatpush1.msra.mxu0 0.0
  %6012 = vmatprep.subr.mxu0 0.0
  %6013 = vmatpush1.msra.mxu0 0.0
  %6014 = vmatprep.subr.mxu0 0.0
  %6015 = vmatpush1.msra.mxu0 0.0
  %6016 = vmatprep.subr.mxu0 0.0
  %6017 = vmatpush1.msra.mxu0 0.0
  %6018 = vmatprep.subr.mxu0 0.0
  %6019 = vmatpush1.msra.mxu0 0.0
  %6020 = vmatprep.mubr.f32.mxu0 0.0
  %6021 = vmatmul.mubr.f32.gmra.mrb[0].mxu0 %v5795
  %v6022 = vpop.f32.mrb[0].mxu0
  %v6023 = vadd.f32 0.0, %v6022
  %v6024 = vpop.f32.mrb[0].mxu0
  %v6025 = vadd.f32 0.0, %v6024
  %6026 = vdwg.mxu0
  %6027 = vmatprep.subr.mxu0 %v5812
  %6028 = vmatpush1.msra.mxu0 %v5809
  %6029 = vmatprep.subr.mxu0 0.0
  %6030 = vmatpush1.msra.mxu0 0.0
  %6031 = vmatprep.subr.mxu0 0.0
  %6032 = vmatpush1.msra.mxu0 0.0
  %6033 = vmatprep.subr.mxu0 0.0
  %6034 = vmatpush1.msra.mxu0 0.0
  %6035 = vmatprep.subr.mxu0 0.0
  %6036 = vmatpush1.msra.mxu0 0.0
  %6037 = vmatprep.subr.mxu0 0.0
  %6038 = vmatpush1.msra.mxu0 0.0
  %6039 = vmatprep.subr.mxu0 0.0
  %6040 = vmatpush1.msra.mxu0 0.0
  %6041 = vmatprep.subr.mxu0 0.0
  %6042 = vmatpush1.msra.mxu0 0.0
  %6043 = vmatprep.subr.mxu0 0.0
  %6044 = vmatpush1.msra.mxu0 0.0
  %6045 = vmatprep.subr.mxu0 0.0
  %6046 = vmatpush1.msra.mxu0 0.0
  %6047 = vmatprep.subr.mxu0 0.0
  %6048 = vmatpush1.msra.mxu0 0.0
  %6049 = vmatprep.subr.mxu0 0.0
  %6050 = vmatpush1.msra.mxu0 0.0
  %6051 = vmatprep.subr.mxu0 0.0
  %6052 = vmatpush1.msra.mxu0 0.0
  %6053 = vmatprep.subr.mxu0 0.0
  %6054 = vmatpush1.msra.mxu0 0.0
  %6055 = vmatprep.subr.mxu0 0.0
  %6056 = vmatpush1.msra.mxu0 0.0
  %6057 = vmatprep.subr.mxu0 0.0
  %6058 = vmatpush1.msra.mxu0 0.0
  %6059 = vmatprep.subr.mxu0 0.0
  %6060 = vmatpush1.msra.mxu0 0.0
  %6061 = vmatprep.subr.mxu0 0.0
  %6062 = vmatpush1.msra.mxu0 0.0
  %6063 = vmatprep.subr.mxu0 0.0
  %6064 = vmatpush1.msra.mxu0 0.0
  %6065 = vmatprep.subr.mxu0 0.0
  %6066 = vmatpush1.msra.mxu0 0.0
  %6067 = vmatprep.subr.mxu0 0.0
  %6068 = vmatpush1.msra.mxu0 0.0
  %6069 = vmatprep.subr.mxu0 0.0
  %6070 = vmatpush1.msra.mxu0 0.0
  %6071 = vmatprep.subr.mxu0 0.0
  %6072 = vmatpush1.msra.mxu0 0.0
  %6073 = vmatprep.subr.mxu0 0.0
  %6074 = vmatpush1.msra.mxu0 0.0
  %6075 = vmatprep.subr.mxu0 0.0
  %6076 = vmatpush1.msra.mxu0 0.0
  %6077 = vmatprep.subr.mxu0 0.0
  %6078 = vmatpush1.msra.mxu0 0.0
  %6079 = vmatprep.subr.mxu0 0.0
  %6080 = vmatpush1.msra.mxu0 0.0
  %6081 = vmatprep.subr.mxu0 0.0
  %6082 = vmatpush1.msra.mxu0 0.0
  %6083 = vmatprep.subr.mxu0 0.0
  %6084 = vmatpush1.msra.mxu0 0.0
  %6085 = vmatprep.subr.mxu0 0.0
  %6086 = vmatpush1.msra.mxu0 0.0
  %6087 = vmatprep.subr.mxu0 0.0
  %6088 = vmatpush1.msra.mxu0 0.0
  %6089 = vmatprep.subr.mxu0 0.0
  %6090 = vmatpush1.msra.mxu0 0.0
  %6091 = vmatprep.mubr.f32.mxu0 0.0
  %6092 = vmatmul.mubr.f32.gmra.mrb[0].mxu0 %v5795
  %v6093 = vpop.f32.mrb[0].mxu0
  %v6094 = vadd.f32 0.0, %v6093
  %v6095 = vpop.f32.mrb[0].mxu0
  %v6096 = vadd.f32 0.0, %v6095
  %6097 = vdwg.mxu0
  %v6098 = vadd.f32 %v5758, %v5881
  %v6099 = vadd.f32 %v5759, %v5883
  %v6100 = vadd.f32 %v5760, %v5952
  %v6101 = vadd.f32 %v5761, %v5954
  %v6102 = vadd.f32 %v5762, %v6023
  %v6103 = vadd.f32 %v5763, %v6025
  %v6104 = vadd.f32 %v5764, %v6094
  %v6105 = vadd.f32 %v5765, %v6096
  %v6106 = vld [vmem:[%s4] sm:$0xff]
  %6108 = vset.pattern.permute.xlu0 0
  %6109 = vperm.xlu0 %6108, %v6106
  %v6110 = vpop.permute.xlu0 %6109
  %v6112 = vadd.f32 %v6098, %v6110
  %v6113 = vadd.f32 %v6099, %v6110
  %v6114 = vadd.f32 %v6100, %v6110
  %v6115 = vadd.f32 %v6101, %v6110
  %v6116 = vadd.f32 %v6102, %v6110
  %v6117 = vadd.f32 %v6103, %v6110
  %v6118 = vadd.f32 %v6104, %v6110
  %v6119 = vadd.f32 %v6105, %v6110
  %v6120 = vmax.f32 %v6112, 0.0
  %v6121 = vmax.f32 %v6113, 0.0
  %v6122 = vmax.f32 %v6114, 0.0
  %v6123 = vmax.f32 %v6115, 0.0
  %v6124 = vmax.f32 %v6116, 0.0
  %v6125 = vmax.f32 %v6117, 0.0
  %v6126 = vmax.f32 %v6118, 0.0
  %v6127 = vmax.f32 %v6119, 0.0
  %6128 = vst [vmem:[%s5] sm:$0xff] %v6120
  %6129 = vst [vmem:[%s5 + $0x8] sm:$0xff] %v6121
  %6130 = vst [vmem:[%s5 + $0x10] sm:$0xff] %v6122
  %6131 = vst [vmem:[%s5 + $0x18] sm:$0xff] %v6123
  %6132 = vst [vmem:[%s5 + $0x20] sm:$0xff] %v6124
  %6133 = vst [vmem:[%s5 + $0x28] sm:$0xff] %v6125
  %6134 = vst [vmem:[%s5 + $0x30] sm:$0xff] %v6126
  %6135 = vst [vmem:[%s5 + $0x38] sm:$0xff] %v6127
  // Predicated region
  $region22: #{model1_forward.1} parent=0 // pred_check
    _
  $region23: #{model1_forward.1} parent=0 // pred_check_branch
    %6137 = sbr.rel (0) target = $region25
  $region24: #{model1_forward.1} parent=0 // pred_region
    _
  $region25: #{model1_forward.1} parent=0 // pred_fallthru
    _
  // Predicated region
  $region26: #{model1_forward.1} parent=0 // pred_check
    _
  $region27: #{model1_forward.1} parent=0 // pred_check_branch
    %6139 = sbr.rel (0) target = $region29
  $region28: #{model1_forward.1} parent=0 // pred_region
    _
  $region29: #{model1_forward.1} parent=0 // pred_fallthru
    _

</llo_original>
